<compile_context>
chip_gen: v6e
topology: v6e:2x2x1
jax: 0.10.0
libtpu: 0.0.40
codegen_flags: <defaults>
</compile_context>

<pallas_src>
import jax
import jax.numpy as jnp
from jax.experimental import pallas as pl
from jax.experimental.pallas import tpu as pltpu


def _upsample_conv_kernel(xs_ref, w_ref, b_ref, o_ref, rhs_e_ref, rhs_o_ref):
    # xs_ref   : (rh, Cp, W2+2)        row strip of the padded, column-duplicated,
    #                                  channel-padded input (rows NOT duplicated).
    # w_ref    : (2, C_out_t, 6*Cp)    row-folded weights (0: even out rows, 1: odd).
    # b_ref    : (C_out_t, 1)          bias, f32.
    # o_ref    : (C_out_t, R*W2)       R output rows of the flattened NCHW output.
    # rhs_*_ref: (6*Cp, (R/2)*W2)      im2row panels for even / odd output rows.
    _, c_pad, w2p = xs_ref.shape
    w2 = w2p - 2
    n_half = rhs_e_ref.shape[-1]
    half = n_half // w2                       # = R // 2, compile-time constant

    # ---- pack the two im2row panels (all indices are compile-time constants).
    # Even output row 2i reads strip rows i (tap w[ky=0]) and i+1 (tap w[1]+w[2]);
    # odd output row 2i+1 reads strip rows i+1 (tap w[0]+w[1]) and i+2 (tap w[2]).
    for parity, rhs_ref in ((0, rhs_e_ref), (1, rhs_o_ref)):
        for i in range(half):
            for fold in range(2):
                src = xs_ref[i + parity + fold]            # (Cp, W2+2), static index
                for kx in range(3):
                    tap = fold * 3 + kx
                    rhs_ref[tap * c_pad:(tap + 1) * c_pad,
                            i * w2:(i + 1) * w2] = src[:, kx:kx + w2]

    # ---- two batched MXU matmuls (one per row parity), f32 accumulation.
    bias = b_ref[...]                                      # (C_out_t, 1), f32
    for parity, rhs_ref in ((0, rhs_e_ref), (1, rhs_o_ref)):
        acc = jnp.dot(w_ref[parity], rhs_ref[...],
                      preferred_element_type=jnp.float32)  # (C_out_t, (R/2)*W2)
        acc = (acc + bias).astype(o_ref.dtype)
        # Re-interleave the parity rows into NCHW row order inside the (VMEM-resident)
        # output block; the HBM writeback of o_ref stays one lane-dense DMA per step.
        for i in range(half):
            o_ref[:, (2 * i + parity) * w2:(2 * i + parity + 1) * w2] = \
                acc[:, i * w2:(i + 1) * w2]


def _vmem_budget_bytes():
    # ~40% of physical VMEM; defaults to the smallest current part (v7x: 64 MiB) when
    # the query is unavailable.  The headroom covers Mosaic-internal scratch and the
    # (8,128) tile padding that the simple byte count below ignores.
    try:
        cap = int(pltpu.get_tpu_info().vmem_capacity_bytes)
    except Exception:  # noqa: BLE001 - conservative fallback off-TPU / old jax
        cap = 64 << 20
    return max(int(cap * 0.4), 8 << 20)


def _pick_rows_per_step(h2, w2, n_parallel, footprint, vmem_budget):
    """Even divisor R of H2: lane-dense R*W2 output block, full-footprint VMEM fit."""
    cands = [r for r in range(2, h2 + 1, 2)
             if h2 % r == 0 and ((r * w2) % 128 == 0 or r == h2)]
    if not cands:
        cands = [h2]
    fit = [r for r in cands if footprint(r) <= vmem_budget]
    if not fit:
        r_min = min(cands)
        if footprint(r_min) > (100 << 20):
            raise ValueError(
                "UpSample Pallas kernel: even the smallest row strip "
                f"(R={r_min}) needs {footprint(r_min) / 2**20:.1f} MiB of VMEM; "
                "tile C_out / K further for this configuration.")
        return r_min
    # Prefer the largest strip whose flattened output block stays <= ~8K lanes:
    # amortizes the ~600-cycle grid-step overhead (v5e/v6e want >=512..2048-lane
    # tiles) while keeping the materialized-strip halo overhead (rh/(R/2)) small.
    good = [r for r in fit if r * w2 <= 8192] or fit
    pick = max(good)
    # v7x megacore: nudge towards an even number of parallel grid steps.
    if (n_parallel * (h2 // pick)) % 2 != 0:
        even = [r for r in good if (n_parallel * (h2 // r)) % 2 == 0]
        if even:
            pick = max(even)
    return pick


def upsample_forward(x, w, b, *, compute_dtype=None):
    """Nearest-2x upsample followed by a 3x3 conv, padding=1 (UpSample.forward).

    x: (N, C_in, H, W) NCHW;  w: (C_out, C_in, 3, 3) OIHW;  b: (C_out,).
    Returns (N, C_out, 2H, 2W) in x.dtype.  Pass compute_dtype=jnp.bfloat16 for the
    v6e/v7x MXU fast path (f32 accumulation is kept either way).
    """
    n, c_in, h, wd = x.shape
    c_out = w.shape[0]
    h2, w2 = 2 * h, 2 * wd
    out_dtype = x.dtype
    if compute_dtype is None:
        compute_dtype = x.dtype
    compute_dtype = jnp.dtype(compute_dtype)

    # Sublane-aligned per-tap channel count (16 for bf16, 8 for f32).
    sub = 16 if compute_dtype.itemsize < 4 else 8
    c_pad = -(-c_in // sub) * sub

    # C_out tiling (keeps the resident weight tile inside v7x's 64 MiB VMEM).
    co_tile = 256 if (c_out > 256 and c_out % 256 == 0) else c_out
    n_co = c_out // co_tile

    in_item = compute_dtype.itemsize
    out_item = jnp.dtype(out_dtype).itemsize
    strip_lanes = -(-(w2 + 2) // 128) * 128          # VMEM lane padding of the strip

    def footprint(r):
        rh_ = r // 2 + 2
        half_n = (r // 2) * w2
        return (2 * rh_ * c_pad * strip_lanes * in_item      # input strip (x2 bufs)
                + 2 * 2 * co_tile * 6 * c_pad * in_item      # folded weights (x2)
                + 2 * co_tile * 4                            # bias (x2, f32)
                + 2 * co_tile * r * w2 * out_item            # output block (x2)
                + 2 * 6 * c_pad * half_n * in_item)          # the two im2row panels

    budget = _vmem_budget_bytes()
    r_rows = _pick_rows_per_step(h2, w2, n * n_co, footprint, budget)
    n_strips = h2 // r_rows
    rh = r_rows // 2 + 2
    half = r_rows // 2

    # ---- glue: ONE fused gather producing the halo row strips of the padded,
    # column-duplicated, channel-padded input.  Rows are never duplicated (the folded
    # weights handle that); pad / column-dup / strip windows are a single fancy-index.
    xp = jnp.pad(x.astype(compute_dtype),
                 ((0, 0), (0, c_pad - c_in), (1, 1), (1, 1)))        # (N, Cp, H+2, W+2)
    col_idx = (jnp.arange(w2 + 2) + 1) // 2                          # (W2+2,)
    row_idx = (jnp.arange(n_strips)[:, None] * half
               + jnp.arange(rh)[None, :])                            # (S, rh)
    x_strips = xp[:, :, row_idx[:, :, None], col_idx[None, None, :]]  # (N,Cp,S,rh,W2+2)
    x_strips = jnp.transpose(x_strips, (0, 2, 3, 1, 4))               # (N,S,rh,Cp,W2+2)

    # ---- row-folded conv weights (K = 6*Cp), K ordered (fold, kx, channel).
    wt = jnp.transpose(w, (0, 2, 3, 1))                              # (C_out, 3, 3, C_in)
    w_even = jnp.stack([wt[:, 0], wt[:, 1] + wt[:, 2]], axis=1)      # (C_out, 2, 3, C_in)
    w_odd = jnp.stack([wt[:, 0] + wt[:, 1], wt[:, 2]], axis=1)       # (C_out, 2, 3, C_in)
    w_fold = jnp.stack([w_even, w_odd], axis=0)                      # (2, C_out, 2, 3, C_in)
    if c_pad != c_in:
        w_fold = jnp.pad(w_fold, ((0, 0),) * 4 + ((0, c_pad - c_in),))
    w_fold = w_fold.reshape(2, c_out, 6 * c_pad).astype(compute_dtype)
    b2 = b.reshape(c_out, 1).astype(jnp.float32)

    vmem_limit = min(max(32 << 20, int(footprint(r_rows) * 1.4) + (2 << 20)),
                     100 << 20)

    out_flat = pl.pallas_call(
        _upsample_conv_kernel,
        out_shape=jax.ShapeDtypeStruct((n, c_out, h2 * w2), out_dtype),
        grid_spec=pltpu.PrefetchScalarGridSpec(
            num_scalar_prefetch=0,
            grid=(n, n_co, n_strips),
            in_specs=[
                pl.BlockSpec((None, None, rh, c_pad, w2 + 2),
                             lambda bi, co, si: (bi, si, 0, 0, 0)),
                pl.BlockSpec((2, co_tile, 6 * c_pad),
                             lambda bi, co, si: (0, co, 0)),
                pl.BlockSpec((co_tile, 1),
                             lambda bi, co, si: (co, 0)),
            ],
            out_specs=pl.BlockSpec((None, co_tile, r_rows * w2),
                                   lambda bi, co, si: (bi, co, si)),
            scratch_shapes=[
                pltpu.VMEM((6 * c_pad, half * w2), compute_dtype),
                pltpu.VMEM((6 * c_pad, half * w2), compute_dtype),
            ],
        ),
        compiler_params=pltpu.CompilerParams(
            dimension_semantics=("parallel", "parallel", "parallel"),
            vmem_limit_bytes=vmem_limit),
    )(x_strips, w_fold, b2)

    # (N, C_out, H2*W2) is already NCHW row-major -> free metadata-only reshape.
    return out_flat.reshape(n, c_out, h2, w2)


if __name__ == "__main__":
    key = jax.random.PRNGKey(0)
    k1, k2, k3 = jax.random.split(key, 3)

    N, C_in, H, W = 2, 4, 16, 16
    C_out = 8

    x = jax.random.normal(k1, (N, C_in, H, W), dtype=jnp.float32)
    # deterministic synthetic parameters (nn.Conv2d(in=4, out=8, k=3, pad=1))
    w = jax.random.normal(k2, (C_out, C_in, 3, 3), dtype=jnp.float32) * 0.1
    b = jax.random.normal(k3, (C_out,), dtype=jnp.float32) * 0.1

    out = jax.block_until_ready(upsample_forward(x, w, b))

    # reference: nearest 2x upsample + conv in plain JAX (high-precision conv)
    x_up = jnp.repeat(jnp.repeat(x, 2, axis=2), 2, axis=3)
    ref = jax.lax.conv_general_dilated(
        x_up, w, window_strides=(1, 1), padding=((1, 1), (1, 1)),
        dimension_numbers=("NCHW", "OIHW", "NCHW"),
        precision=jax.lax.Precision.HIGHEST) + b[None, :, None, None]

    assert out.shape == ref.shape == (N, C_out, 2 * H, 2 * W)
    err = float(jnp.max(jnp.abs(out - ref)))
    assert jnp.allclose(out, ref, atol=5e-3, rtol=5e-3), f"max abs err {err}"

    # bf16-operand fast path (v6e/v7x MXU), f32 accumulation -> looser tolerance.
    out_bf16 = jax.block_until_ready(
        upsample_forward(x, w, b, compute_dtype=jnp.bfloat16))
    err_bf16 = float(jnp.max(jnp.abs(out_bf16 - ref)))
    assert jnp.allclose(out_bf16, ref, atol=5e-2, rtol=5e-2), f"max abs err {err_bf16}"

    print("KERNEL_OK")
</pallas_src>

<mosaic_0001>
module attributes {stable_mosaic.version = 11 : i64} {
  func.func @_upsample_conv_kernel(%arg0: i32, %arg1: i32, %arg2: i32, %arg3: memref<1x1x18x8x34xf32, #tpu.memory_space<vmem>>, %arg4: memref<2x8x48xf32, #tpu.memory_space<vmem>>, %arg5: memref<8x1xf32, #tpu.memory_space<vmem>>, %arg6: memref<1x8x1024xf32, #tpu.memory_space<vmem>>, %arg7: memref<48x512xf32, #tpu.memory_space<vmem>>, %arg8: memref<48x512xf32, #tpu.memory_space<vmem>>) attributes {dimension_semantics = [#tpu.dimension_semantics<parallel>, #tpu.dimension_semantics<parallel>, #tpu.dimension_semantics<parallel>], iteration_bounds = array<i64: 2, 1, 1>, scalar_prefetch = 0 : i64, scratch_operands = 2 : i64, tpu.core_type = #tpu.core_type<tc>, window_params = [{transform_indices = @transform_0, window_bounds = array<i64: 1, 1, 18, 8, 34>}, {transform_indices = @transform_1, window_bounds = array<i64: 2, 8, 48>}, {transform_indices = @transform_2, window_bounds = array<i64: 8, 1>}, {transform_indices = @transform_3, window_bounds = array<i64: 1, 8, 1024>}]} {
    %c0 = arith.constant 0 : index
    %c0_0 = arith.constant 0 : index
    %c0_1 = arith.constant 0 : index
    %c0_2 = arith.constant 0 : index
    %c0_3 = arith.constant 0 : index
    %0 = vector.load %arg3[%c0, %c0_0, %c0_1, %c0_2, %c0_3] : memref<1x1x18x8x34xf32, #tpu.memory_space<vmem>>, vector<1x1x1x8x34xf32>
    %1 = vector.shape_cast %0 : vector<1x1x1x8x34xf32> to vector<8x34xf32>
    %2 = vector.extract_strided_slice %1 {offsets = [0, 0], sizes = [8, 32], strides = [1, 1]} : vector<8x34xf32> to vector<8x32xf32>
    %c0_4 = arith.constant 0 : index
    %c0_5 = arith.constant 0 : index
    %3 = vector.load %arg7[%c0_4, %c0_5] : memref<48x512xf32, #tpu.memory_space<vmem>>, vector<8x32xf32>
    tpu.vector_store %arg7[%c0_4, %c0_5], %2 {strides = array<i32>} : memref<48x512xf32, #tpu.memory_space<vmem>>, vector<8x32xf32>,
    %4 = vector.extract_strided_slice %1 {offsets = [0, 1], sizes = [8, 32], strides = [1, 1]} : vector<8x34xf32> to vector<8x32xf32>
    %c8 = arith.constant 8 : index
    %c0_6 = arith.constant 0 : index
    %5 = vector.load %arg7[%c8, %c0_6] : memref<48x512xf32, #tpu.memory_space<vmem>>, vector<8x32xf32>
    tpu.vector_store %arg7[%c8, %c0_6], %4 {strides = array<i32>} : memref<48x512xf32, #tpu.memory_space<vmem>>, vector<8x32xf32>,
    %6 = vector.extract_strided_slice %1 {offsets = [0, 2], sizes = [8, 32], strides = [1, 1]} : vector<8x34xf32> to vector<8x32xf32>
    %c16 = arith.constant 16 : index
    %c0_7 = arith.constant 0 : index
    %7 = vector.load %arg7[%c16, %c0_7] : memref<48x512xf32, #tpu.memory_space<vmem>>, vector<8x32xf32>
    tpu.vector_store %arg7[%c16, %c0_7], %6 {strides = array<i32>} : memref<48x512xf32, #tpu.memory_space<vmem>>, vector<8x32xf32>,
    %c0_8 = arith.constant 0 : index
    %c0_9 = arith.constant 0 : index
    %c1 = arith.constant 1 : index
    %c0_10 = arith.constant 0 : index
    %c0_11 = arith.constant 0 : index
    %8 = vector.load %arg3[%c0_8, %c0_9, %c1, %c0_10, %c0_11] : memref<1x1x18x8x34xf32, #tpu.memory_space<vmem>>, vector<1x1x1x8x34xf32>
    %9 = vector.shape_cast %8 : vector<1x1x1x8x34xf32> to vector<8x34xf32>
    %10 = vector.extract_strided_slice %9 {offsets = [0, 0], sizes = [8, 32], strides = [1, 1]} : vector<8x34xf32> to vector<8x32xf32>
    %c24 = arith.constant 24 : index
    %c0_12 = arith.constant 0 : index
    %11 = vector.load %arg7[%c24, %c0_12] : memref<48x512xf32, #tpu.memory_space<vmem>>, vector<8x32xf32>
    tpu.vector_store %arg7[%c24, %c0_12], %10 {strides = array<i32>} : memref<48x512xf32, #tpu.memory_space<vmem>>, vector<8x32xf32>,
    %12 = vector.extract_strided_slice %9 {offsets = [0, 1], sizes = [8, 32], strides = [1, 1]} : vector<8x34xf32> to vector<8x32xf32>
    %c32 = arith.constant 32 : index
    %c0_13 = arith.constant 0 : index
    %13 = vector.load %arg7[%c32, %c0_13] : memref<48x512xf32, #tpu.memory_space<vmem>>, vector<8x32xf32>
    tpu.vector_store %arg7[%c32, %c0_13], %12 {strides = array<i32>} : memref<48x512xf32, #tpu.memory_space<vmem>>, vector<8x32xf32>,
    %14 = vector.extract_strided_slice %9 {offsets = [0, 2], sizes = [8, 32], strides = [1, 1]} : vector<8x34xf32> to vector<8x32xf32>
    %c40 = arith.constant 40 : index
    %c0_14 = arith.constant 0 : index
    %15 = vector.load %arg7[%c40, %c0_14] : memref<48x512xf32, #tpu.memory_space<vmem>>, vector<8x32xf32>
    tpu.vector_store %arg7[%c40, %c0_14], %14 {strides = array<i32>} : memref<48x512xf32, #tpu.memory_space<vmem>>, vector<8x32xf32>,
    %c0_15 = arith.constant 0 : index
    %c0_16 = arith.constant 0 : index
    %c1_17 = arith.constant 1 : index
    %c0_18 = arith.constant 0 : index
    %c0_19 = arith.constant 0 : index
    %16 = vector.load %arg3[%c0_15, %c0_16, %c1_17, %c0_18, %c0_19] : memref<1x1x18x8x34xf32, #tpu.memory_space<vmem>>, vector<1x1x1x8x34xf32>
    %17 = vector.shape_cast %16 : vector<1x1x1x8x34xf32> to vector<8x34xf32>
    %18 = vector.extract_strided_slice %17 {offsets = [0, 0], sizes = [8, 32], strides = [1, 1]} : vector<8x34xf32> to vector<8x32xf32>
    %c0_20 = arith.constant 0 : index
    %c32_21 = arith.constant 32 : index
    %19 = vector.load %arg7[%c0_20, %c32_21] : memref<48x512xf32, #tpu.memory_space<vmem>>, vector<8x32xf32>
    tpu.vector_store %arg7[%c0_20, %c32_21], %18 {strides = array<i32>} : memref<48x512xf32, #tpu.memory_space<vmem>>, vector<8x32xf32>,
    %20 = vector.extract_strided_slice %17 {offsets = [0, 1], sizes = [8, 32], strides = [1, 1]} : vector<8x34xf32> to vector<8x32xf32>
    %c8_22 = arith.constant 8 : index
    %c32_23 = arith.constant 32 : index
    %21 = vector.load %arg7[%c8_22, %c32_23] : memref<48x512xf32, #tpu.memory_space<vmem>>, vector<8x32xf32>
    tpu.vector_store %arg7[%c8_22, %c32_23], %20 {strides = array<i32>} : memref<48x512xf32, #tpu.memory_space<vmem>>, vector<8x32xf32>,
    %22 = vector.extract_strided_slice %17 {offsets = [0, 2], sizes = [8, 32], strides = [1, 1]} : vector<8x34xf32> to vector<8x32xf32>
    %c16_24 = arith.constant 16 : index
    %c32_25 = arith.constant 32 : index
    %23 = vector.load %arg7[%c16_24, %c32_25] : memref<48x512xf32, #tpu.memory_space<vmem>>, vector<8x32xf32>
    tpu.vector_store %arg7[%c16_24, %c32_25], %22 {strides = array<i32>} : memref<48x512xf32, #tpu.memory_space<vmem>>, vector<8x32xf32>,
    %c0_26 = arith.constant 0 : index
    %c0_27 = arith.constant 0 : index
    %c2 = arith.constant 2 : index
    %c0_28 = arith.constant 0 : index
    %c0_29 = arith.constant 0 : index
    %24 = vector.load %arg3[%c0_26, %c0_27, %c2, %c0_28, %c0_29] : memref<1x1x18x8x34xf32, #tpu.memory_space<vmem>>, vector<1x1x1x8x34xf32>
    %25 = vector.shape_cast %24 : vector<1x1x1x8x34xf32> to vector<8x34xf32>
    %26 = vector.extract_strided_slice %25 {offsets = [0, 0], sizes = [8, 32], strides = [1, 1]} : vector<8x34xf32> to vector<8x32xf32>
    %c24_30 = arith.constant 24 : index
    %c32_31 = arith.constant 32 : index
    %27 = vector.load %arg7[%c24_30, %c32_31] : memref<48x512xf32, #tpu.memory_space<vmem>>, vector<8x32xf32>
    tpu.vector_store %arg7[%c24_30, %c32_31], %26 {strides = array<i32>} : memref<48x512xf32, #tpu.memory_space<vmem>>, vector<8x32xf32>,
    %28 = vector.extract_strided_slice %25 {offsets = [0, 1], sizes = [8, 32], strides = [1, 1]} : vector<8x34xf32> to vector<8x32xf32>
    %c32_32 = arith.constant 32 : index
    %c32_33 = arith.constant 32 : index
    %29 = vector.load %arg7[%c32_32, %c32_33] : memref<48x512xf32, #tpu.memory_space<vmem>>, vector<8x32xf32>
    tpu.vector_store %arg7[%c32_32, %c32_33], %28 {strides = array<i32>} : memref<48x512xf32, #tpu.memory_space<vmem>>, vector<8x32xf32>,
    %30 = vector.extract_strided_slice %25 {offsets = [0, 2], sizes = [8, 32], strides = [1, 1]} : vector<8x34xf32> to vector<8x32xf32>
    %c40_34 = arith.constant 40 : index
    %c32_35 = arith.constant 32 : index
    %31 = vector.load %arg7[%c40_34, %c32_35] : memref<48x512xf32, #tpu.memory_space<vmem>>, vector<8x32xf32>
    tpu.vector_store %arg7[%c40_34, %c32_35], %30 {strides = array<i32>} : memref<48x512xf32, #tpu.memory_space<vmem>>, vector<8x32xf32>,
    %c0_36 = arith.constant 0 : index
    %c0_37 = arith.constant 0 : index
    %c2_38 = arith.constant 2 : index
    %c0_39 = arith.constant 0 : index
    %c0_40 = arith.constant 0 : index
    %32 = vector.load %arg3[%c0_36, %c0_37, %c2_38, %c0_39, %c0_40] : memref<1x1x18x8x34xf32, #tpu.memory_space<vmem>>, vector<1x1x1x8x34xf32>
    %33 = vector.shape_cast %32 : vector<1x1x1x8x34xf32> to vector<8x34xf32>
    %34 = vector.extract_strided_slice %33 {offsets = [0, 0], sizes = [8, 32], strides = [1, 1]} : vector<8x34xf32> to vector<8x32xf32>
    %c0_41 = arith.constant 0 : index
    %c64 = arith.constant 64 : index
    %35 = vector.load %arg7[%c0_41, %c64] : memref<48x512xf32, #tpu.memory_space<vmem>>, vector<8x32xf32>
    tpu.vector_store %arg7[%c0_41, %c64], %34 {strides = array<i32>} : memref<48x512xf32, #tpu.memory_space<vmem>>, vector<8x32xf32>,
    %36 = vector.extract_strided_slice %33 {offsets = [0, 1], sizes = [8, 32], strides = [1, 1]} : vector<8x34xf32> to vector<8x32xf32>
    %c8_42 = arith.constant 8 : index
    %c64_43 = arith.constant 64 : index
    %37 = vector.load %arg7[%c8_42, %c64_43] : memref<48x512xf32, #tpu.memory_space<vmem>>, vector<8x32xf32>
    tpu.vector_store %arg7[%c8_42, %c64_43], %36 {strides = array<i32>} : memref<48x512xf32, #tpu.memory_space<vmem>>, vector<8x32xf32>,
    %38 = vector.extract_strided_slice %33 {offsets = [0, 2], sizes = [8, 32], strides = [1, 1]} : vector<8x34xf32> to vector<8x32xf32>
    %c16_44 = arith.constant 16 : index
    %c64_45 = arith.constant 64 : index
    %39 = vector.load %arg7[%c16_44, %c64_45] : memref<48x512xf32, #tpu.memory_space<vmem>>, vector<8x32xf32>
    tpu.vector_store %arg7[%c16_44, %c64_45], %38 {strides = array<i32>} : memref<48x512xf32, #tpu.memory_space<vmem>>, vector<8x32xf32>,
    %c0_46 = arith.constant 0 : index
    %c0_47 = arith.constant 0 : index
    %c3 = arith.constant 3 : index
    %c0_48 = arith.constant 0 : index
    %c0_49 = arith.constant 0 : index
    %40 = vector.load %arg3[%c0_46, %c0_47, %c3, %c0_48, %c0_49] : memref<1x1x18x8x34xf32, #tpu.memory_space<vmem>>, vector<1x1x1x8x34xf32>
    %41 = vector.shape_cast %40 : vector<1x1x1x8x34xf32> to vector<8x34xf32>
    %42 = vector.extract_strided_slice %41 {offsets = [0, 0], sizes = [8, 32], strides = [1, 1]} : vector<8x34xf32> to vector<8x32xf32>
    %c24_50 = arith.constant 24 : index
    %c64_51 = arith.constant 64 : index
    %43 = vector.load %arg7[%c24_50, %c64_51] : memref<48x512xf32, #tpu.memory_space<vmem>>, vector<8x32xf32>
    tpu.vector_store %arg7[%c24_50, %c64_51], %42 {strides = array<i32>} : memref<48x512xf32, #tpu.memory_space<vmem>>, vector<8x32xf32>,
    %44 = vector.extract_strided_slice %41 {offsets = [0, 1], sizes = [8, 32], strides = [1, 1]} : vector<8x34xf32> to vector<8x32xf32>
    %c32_52 = arith.constant 32 : index
    %c64_53 = arith.constant 64 : index
    %45 = vector.load %arg7[%c32_52, %c64_53] : memref<48x512xf32, #tpu.memory_space<vmem>>, vector<8x32xf32>
    tpu.vector_store %arg7[%c32_52, %c64_53], %44 {strides = array<i32>} : memref<48x512xf32, #tpu.memory_space<vmem>>, vector<8x32xf32>,
    %46 = vector.extract_strided_slice %41 {offsets = [0, 2], sizes = [8, 32], strides = [1, 1]} : vector<8x34xf32> to vector<8x32xf32>
    %c40_54 = arith.constant 40 : index
    %c64_55 = arith.constant 64 : index
    %47 = vector.load %arg7[%c40_54, %c64_55] : memref<48x512xf32, #tpu.memory_space<vmem>>, vector<8x32xf32>
    tpu.vector_store %arg7[%c40_54, %c64_55], %46 {strides = array<i32>} : memref<48x512xf32, #tpu.memory_space<vmem>>, vector<8x32xf32>,
    %c0_56 = arith.constant 0 : index
    %c0_57 = arith.constant 0 : index
    %c3_58 = arith.constant 3 : index
    %c0_59 = arith.constant 0 : index
    %c0_60 = arith.constant 0 : index
    %48 = vector.load %arg3[%c0_56, %c0_57, %c3_58, %c0_59, %c0_60] : memref<1x1x18x8x34xf32, #tpu.memory_space<vmem>>, vector<1x1x1x8x34xf32>
    %49 = vector.shape_cast %48 : vector<1x1x1x8x34xf32> to vector<8x34xf32>
    %50 = vector.extract_strided_slice %49 {offsets = [0, 0], sizes = [8, 32], strides = [1, 1]} : vector<8x34xf32> to vector<8x32xf32>
    %c0_61 = arith.constant 0 : index
    %c96 = arith.constant 96 : index
    %51 = vector.load %arg7[%c0_61, %c96] : memref<48x512xf32, #tpu.memory_space<vmem>>, vector<8x32xf32>
    tpu.vector_store %arg7[%c0_61, %c96], %50 {strides = array<i32>} : memref<48x512xf32, #tpu.memory_space<vmem>>, vector<8x32xf32>,
    %52 = vector.extract_strided_slice %49 {offsets = [0, 1], sizes = [8, 32], strides = [1, 1]} : vector<8x34xf32> to vector<8x32xf32>
    %c8_62 = arith.constant 8 : index
    %c96_63 = arith.constant 96 : index
    %53 = vector.load %arg7[%c8_62, %c96_63] : memref<48x512xf32, #tpu.memory_space<vmem>>, vector<8x32xf32>
    tpu.vector_store %arg7[%c8_62, %c96_63], %52 {strides = array<i32>} : memref<48x512xf32, #tpu.memory_space<vmem>>, vector<8x32xf32>,
    %54 = vector.extract_strided_slice %49 {offsets = [0, 2], sizes = [8, 32], strides = [1, 1]} : vector<8x34xf32> to vector<8x32xf32>
    %c16_64 = arith.constant 16 : index
    %c96_65 = arith.constant 96 : index
    %55 = vector.load %arg7[%c16_64, %c96_65] : memref<48x512xf32, #tpu.memory_space<vmem>>, vector<8x32xf32>
    tpu.vector_store %arg7[%c16_64, %c96_65], %54 {strides = array<i32>} : memref<48x512xf32, #tpu.memory_space<vmem>>, vector<8x32xf32>,
    %c0_66 = arith.constant 0 : index
    %c0_67 = arith.constant 0 : index
    %c4 = arith.constant 4 : index
    %c0_68 = arith.constant 0 : index
    %c0_69 = arith.constant 0 : index
    %56 = vector.load %arg3[%c0_66, %c0_67, %c4, %c0_68, %c0_69] : memref<1x1x18x8x34xf32, #tpu.memory_space<vmem>>, vector<1x1x1x8x34xf32>
    %57 = vector.shape_cast %56 : vector<1x1x1x8x34xf32> to vector<8x34xf32>
    %58 = vector.extract_strided_slice %57 {offsets = [0, 0], sizes = [8, 32], strides = [1, 1]} : vector<8x34xf32> to vector<8x32xf32>
    %c24_70 = arith.constant 24 : index
    %c96_71 = arith.constant 96 : index
    %59 = vector.load %arg7[%c24_70, %c96_71] : memref<48x512xf32, #tpu.memory_space<vmem>>, vector<8x32xf32>
    tpu.vector_store %arg7[%c24_70, %c96_71], %58 {strides = array<i32>} : memref<48x512xf32, #tpu.memory_space<vmem>>, vector<8x32xf32>,
    %60 = vector.extract_strided_slice %57 {offsets = [0, 1], sizes = [8, 32], strides = [1, 1]} : vector<8x34xf32> to vector<8x32xf32>
    %c32_72 = arith.constant 32 : index
    %c96_73 = arith.constant 96 : index
    %61 = vector.load %arg7[%c32_72, %c96_73] : memref<48x512xf32, #tpu.memory_space<vmem>>, vector<8x32xf32>
    tpu.vector_store %arg7[%c32_72, %c96_73], %60 {strides = array<i32>} : memref<48x512xf32, #tpu.memory_space<vmem>>, vector<8x32xf32>,
    %62 = vector.extract_strided_slice %57 {offsets = [0, 2], sizes = [8, 32], strides = [1, 1]} : vector<8x34xf32> to vector<8x32xf32>
    %c40_74 = arith.constant 40 : index
    %c96_75 = arith.constant 96 : index
    %63 = vector.load %arg7[%c40_74, %c96_75] : memref<48x512xf32, #tpu.memory_space<vmem>>, vector<8x32xf32>
    tpu.vector_store %arg7[%c40_74, %c96_75], %62 {strides = array<i32>} : memref<48x512xf32, #tpu.memory_space<vmem>>, vector<8x32xf32>,
    %c0_76 = arith.constant 0 : index
    %c0_77 = arith.constant 0 : index
    %c4_78 = arith.constant 4 : index
    %c0_79 = arith.constant 0 : index
    %c0_80 = arith.constant 0 : index
    %64 = vector.load %arg3[%c0_76, %c0_77, %c4_78, %c0_79, %c0_80] : memref<1x1x18x8x34xf32, #tpu.memory_space<vmem>>, vector<1x1x1x8x34xf32>
    %65 = vector.shape_cast %64 : vector<1x1x1x8x34xf32> to vector<8x34xf32>
    %66 = vector.extract_strided_slice %65 {offsets = [0, 0], sizes = [8, 32], strides = [1, 1]} : vector<8x34xf32> to vector<8x32xf32>
    %c0_81 = arith.constant 0 : index
    %c128 = arith.constant 128 : index
    %67 = vector.load %arg7[%c0_81, %c128] : memref<48x512xf32, #tpu.memory_space<vmem>>, vector<8x32xf32>
    tpu.vector_store %arg7[%c0_81, %c128], %66 {strides = array<i32>} : memref<48x512xf32, #tpu.memory_space<vmem>>, vector<8x32xf32>,
    %68 = vector.extract_strided_slice %65 {offsets = [0, 1], sizes = [8, 32], strides = [1, 1]} : vector<8x34xf32> to vector<8x32xf32>
    %c8_82 = arith.constant 8 : index
    %c128_83 = arith.constant 128 : index
    %69 = vector.load %arg7[%c8_82, %c128_83] : memref<48x512xf32, #tpu.memory_space<vmem>>, vector<8x32xf32>
    tpu.vector_store %arg7[%c8_82, %c128_83], %68 {strides = array<i32>} : memref<48x512xf32, #tpu.memory_space<vmem>>, vector<8x32xf32>,
    %70 = vector.extract_strided_slice %65 {offsets = [0, 2], sizes = [8, 32], strides = [1, 1]} : vector<8x34xf32> to vector<8x32xf32>
    %c16_84 = arith.constant 16 : index
    %c128_85 = arith.constant 128 : index
    %71 = vector.load %arg7[%c16_84, %c128_85] : memref<48x512xf32, #tpu.memory_space<vmem>>, vector<8x32xf32>
    tpu.vector_store %arg7[%c16_84, %c128_85], %70 {strides = array<i32>} : memref<48x512xf32, #tpu.memory_space<vmem>>, vector<8x32xf32>,
    %c0_86 = arith.constant 0 : index
    %c0_87 = arith.constant 0 : index
    %c5 = arith.constant 5 : index
    %c0_88 = arith.constant 0 : index
    %c0_89 = arith.constant 0 : index
    %72 = vector.load %arg3[%c0_86, %c0_87, %c5, %c0_88, %c0_89] : memref<1x1x18x8x34xf32, #tpu.memory_space<vmem>>, vector<1x1x1x8x34xf32>
    %73 = vector.shape_cast %72 : vector<1x1x1x8x34xf32> to vector<8x34xf32>
    %74 = vector.extract_strided_slice %73 {offsets = [0, 0], sizes = [8, 32], strides = [1, 1]} : vector<8x34xf32> to vector<8x32xf32>
    %c24_90 = arith.constant 24 : index
    %c128_91 = arith.constant 128 : index
    %75 = vector.load %arg7[%c24_90, %c128_91] : memref<48x512xf32, #tpu.memory_space<vmem>>, vector<8x32xf32>
    tpu.vector_store %arg7[%c24_90, %c128_91], %74 {strides = array<i32>} : memref<48x512xf32, #tpu.memory_space<vmem>>, vector<8x32xf32>,
    %76 = vector.extract_strided_slice %73 {offsets = [0, 1], sizes = [8, 32], strides = [1, 1]} : vector<8x34xf32> to vector<8x32xf32>
    %c32_92 = arith.constant 32 : index
    %c128_93 = arith.constant 128 : index
    %77 = vector.load %arg7[%c32_92, %c128_93] : memref<48x512xf32, #tpu.memory_space<vmem>>, vector<8x32xf32>
    tpu.vector_store %arg7[%c32_92, %c128_93], %76 {strides = array<i32>} : memref<48x512xf32, #tpu.memory_space<vmem>>, vector<8x32xf32>,
    %78 = vector.extract_strided_slice %73 {offsets = [0, 2], sizes = [8, 32], strides = [1, 1]} : vector<8x34xf32> to vector<8x32xf32>
    %c40_94 = arith.constant 40 : index
    %c128_95 = arith.constant 128 : index
    %79 = vector.load %arg7[%c40_94, %c128_95] : memref<48x512xf32, #tpu.memory_space<vmem>>, vector<8x32xf32>
    tpu.vector_store %arg7[%c40_94, %c128_95], %78 {strides = array<i32>} : memref<48x512xf32, #tpu.memory_space<vmem>>, vector<8x32xf32>,
    %c0_96 = arith.constant 0 : index
    %c0_97 = arith.constant 0 : index
    %c5_98 = arith.constant 5 : index
    %c0_99 = arith.constant 0 : index
    %c0_100 = arith.constant 0 : index
    %80 = vector.load %arg3[%c0_96, %c0_97, %c5_98, %c0_99, %c0_100] : memref<1x1x18x8x34xf32, #tpu.memory_space<vmem>>, vector<1x1x1x8x34xf32>
    %81 = vector.shape_cast %80 : vector<1x1x1x8x34xf32> to vector<8x34xf32>
    %82 = vector.extract_strided_slice %81 {offsets = [0, 0], sizes = [8, 32], strides = [1, 1]} : vector<8x34xf32> to vector<8x32xf32>
    %c0_101 = arith.constant 0 : index
    %c160 = arith.constant 160 : index
    %83 = vector.load %arg7[%c0_101, %c160] : memref<48x512xf32, #tpu.memory_space<vmem>>, vector<8x32xf32>
    tpu.vector_store %arg7[%c0_101, %c160], %82 {strides = array<i32>} : memref<48x512xf32, #tpu.memory_space<vmem>>, vector<8x32xf32>,
    %84 = vector.extract_strided_slice %81 {offsets = [0, 1], sizes = [8, 32], strides = [1, 1]} : vector<8x34xf32> to vector<8x32xf32>
    %c8_102 = arith.constant 8 : index
    %c160_103 = arith.constant 160 : index
    %85 = vector.load %arg7[%c8_102, %c160_103] : memref<48x512xf32, #tpu.memory_space<vmem>>, vector<8x32xf32>
    tpu.vector_store %arg7[%c8_102, %c160_103], %84 {strides = array<i32>} : memref<48x512xf32, #tpu.memory_space<vmem>>, vector<8x32xf32>,
    %86 = vector.extract_strided_slice %81 {offsets = [0, 2], sizes = [8, 32], strides = [1, 1]} : vector<8x34xf32> to vector<8x32xf32>
    %c16_104 = arith.constant 16 : index
    %c160_105 = arith.constant 160 : index
    %87 = vector.load %arg7[%c16_104, %c160_105] : memref<48x512xf32, #tpu.memory_space<vmem>>, vector<8x32xf32>
    tpu.vector_store %arg7[%c16_104, %c160_105], %86 {strides = array<i32>} : memref<48x512xf32, #tpu.memory_space<vmem>>, vector<8x32xf32>,
    %c0_106 = arith.constant 0 : index
    %c0_107 = arith.constant 0 : index
    %c6 = arith.constant 6 : index
    %c0_108 = arith.constant 0 : index
    %c0_109 = arith.constant 0 : index
    %88 = vector.load %arg3[%c0_106, %c0_107, %c6, %c0_108, %c0_109] : memref<1x1x18x8x34xf32, #tpu.memory_space<vmem>>, vector<1x1x1x8x34xf32>
    %89 = vector.shape_cast %88 : vector<1x1x1x8x34xf32> to vector<8x34xf32>
    %90 = vector.extract_strided_slice %89 {offsets = [0, 0], sizes = [8, 32], strides = [1, 1]} : vector<8x34xf32> to vector<8x32xf32>
    %c24_110 = arith.constant 24 : index
    %c160_111 = arith.constant 160 : index
    %91 = vector.load %arg7[%c24_110, %c160_111] : memref<48x512xf32, #tpu.memory_space<vmem>>, vector<8x32xf32>
    tpu.vector_store %arg7[%c24_110, %c160_111], %90 {strides = array<i32>} : memref<48x512xf32, #tpu.memory_space<vmem>>, vector<8x32xf32>,
    %92 = vector.extract_strided_slice %89 {offsets = [0, 1], sizes = [8, 32], strides = [1, 1]} : vector<8x34xf32> to vector<8x32xf32>
    %c32_112 = arith.constant 32 : index
    %c160_113 = arith.constant 160 : index
    %93 = vector.load %arg7[%c32_112, %c160_113] : memref<48x512xf32, #tpu.memory_space<vmem>>, vector<8x32xf32>
    tpu.vector_store %arg7[%c32_112, %c160_113], %92 {strides = array<i32>} : memref<48x512xf32, #tpu.memory_space<vmem>>, vector<8x32xf32>,
    %94 = vector.extract_strided_slice %89 {offsets = [0, 2], sizes = [8, 32], strides = [1, 1]} : vector<8x34xf32> to vector<8x32xf32>
    %c40_114 = arith.constant 40 : index
    %c160_115 = arith.constant 160 : index
    %95 = vector.load %arg7[%c40_114, %c160_115] : memref<48x512xf32, #tpu.memory_space<vmem>>, vector<8x32xf32>
    tpu.vector_store %arg7[%c40_114, %c160_115], %94 {strides = array<i32>} : memref<48x512xf32, #tpu.memory_space<vmem>>, vector<8x32xf32>,
    %c0_116 = arith.constant 0 : index
    %c0_117 = arith.constant 0 : index
    %c6_118 = arith.constant 6 : index
    %c0_119 = arith.constant 0 : index
    %c0_120 = arith.constant 0 : index
    %96 = vector.load %arg3[%c0_116, %c0_117, %c6_118, %c0_119, %c0_120] : memref<1x1x18x8x34xf32, #tpu.memory_space<vmem>>, vector<1x1x1x8x34xf32>
    %97 = vector.shape_cast %96 : vector<1x1x1x8x34xf32> to vector<8x34xf32>
    %98 = vector.extract_strided_slice %97 {offsets = [0, 0], sizes = [8, 32], strides = [1, 1]} : vector<8x34xf32> to vector<8x32xf32>
    %c0_121 = arith.constant 0 : index
    %c192 = arith.constant 192 : index
    %99 = vector.load %arg7[%c0_121, %c192] : memref<48x512xf32, #tpu.memory_space<vmem>>, vector<8x32xf32>
    tpu.vector_store %arg7[%c0_121, %c192], %98 {strides = array<i32>} : memref<48x512xf32, #tpu.memory_space<vmem>>, vector<8x32xf32>,
    %100 = vector.extract_strided_slice %97 {offsets = [0, 1], sizes = [8, 32], strides = [1, 1]} : vector<8x34xf32> to vector<8x32xf32>
    %c8_122 = arith.constant 8 : index
    %c192_123 = arith.constant 192 : index
    %101 = vector.load %arg7[%c8_122, %c192_123] : memref<48x512xf32, #tpu.memory_space<vmem>>, vector<8x32xf32>
    tpu.vector_store %arg7[%c8_122, %c192_123], %100 {strides = array<i32>} : memref<48x512xf32, #tpu.memory_space<vmem>>, vector<8x32xf32>,
    %102 = vector.extract_strided_slice %97 {offsets = [0, 2], sizes = [8, 32], strides = [1, 1]} : vector<8x34xf32> to vector<8x32xf32>
    %c16_124 = arith.constant 16 : index
    %c192_125 = arith.constant 192 : index
    %103 = vector.load %arg7[%c16_124, %c192_125] : memref<48x512xf32, #tpu.memory_space<vmem>>, vector<8x32xf32>
    tpu.vector_store %arg7[%c16_124, %c192_125], %102 {strides = array<i32>} : memref<48x512xf32, #tpu.memory_space<vmem>>, vector<8x32xf32>,
    %c0_126 = arith.constant 0 : index
    %c0_127 = arith.constant 0 : index
    %c7 = arith.constant 7 : index
    %c0_128 = arith.constant 0 : index
    %c0_129 = arith.constant 0 : index
    %104 = vector.load %arg3[%c0_126, %c0_127, %c7, %c0_128, %c0_129] : memref<1x1x18x8x34xf32, #tpu.memory_space<vmem>>, vector<1x1x1x8x34xf32>
    %105 = vector.shape_cast %104 : vector<1x1x1x8x34xf32> to vector<8x34xf32>
    %106 = vector.extract_strided_slice %105 {offsets = [0, 0], sizes = [8, 32], strides = [1, 1]} : vector<8x34xf32> to vector<8x32xf32>
    %c24_130 = arith.constant 24 : index
    %c192_131 = arith.constant 192 : index
    %107 = vector.load %arg7[%c24_130, %c192_131] : memref<48x512xf32, #tpu.memory_space<vmem>>, vector<8x32xf32>
    tpu.vector_store %arg7[%c24_130, %c192_131], %106 {strides = array<i32>} : memref<48x512xf32, #tpu.memory_space<vmem>>, vector<8x32xf32>,
    %108 = vector.extract_strided_slice %105 {offsets = [0, 1], sizes = [8, 32], strides = [1, 1]} : vector<8x34xf32> to vector<8x32xf32>
    %c32_132 = arith.constant 32 : index
    %c192_133 = arith.constant 192 : index
    %109 = vector.load %arg7[%c32_132, %c192_133] : memref<48x512xf32, #tpu.memory_space<vmem>>, vector<8x32xf32>
    tpu.vector_store %arg7[%c32_132, %c192_133], %108 {strides = array<i32>} : memref<48x512xf32, #tpu.memory_space<vmem>>, vector<8x32xf32>,
    %110 = vector.extract_strided_slice %105 {offsets = [0, 2], sizes = [8, 32], strides = [1, 1]} : vector<8x34xf32> to vector<8x32xf32>
    %c40_134 = arith.constant 40 : index
    %c192_135 = arith.constant 192 : index
    %111 = vector.load %arg7[%c40_134, %c192_135] : memref<48x512xf32, #tpu.memory_space<vmem>>, vector<8x32xf32>
    tpu.vector_store %arg7[%c40_134, %c192_135], %110 {strides = array<i32>} : memref<48x512xf32, #tpu.memory_space<vmem>>, vector<8x32xf32>,
    %c0_136 = arith.constant 0 : index
    %c0_137 = arith.constant 0 : index
    %c7_138 = arith.constant 7 : index
    %c0_139 = arith.constant 0 : index
    %c0_140 = arith.constant 0 : index
    %112 = vector.load %arg3[%c0_136, %c0_137, %c7_138, %c0_139, %c0_140] : memref<1x1x18x8x34xf32, #tpu.memory_space<vmem>>, vector<1x1x1x8x34xf32>
    %113 = vector.shape_cast %112 : vector<1x1x1x8x34xf32> to vector<8x34xf32>
    %114 = vector.extract_strided_slice %113 {offsets = [0, 0], sizes = [8, 32], strides = [1, 1]} : vector<8x34xf32> to vector<8x32xf32>
    %c0_141 = arith.constant 0 : index
    %c224 = arith.constant 224 : index
    %115 = vector.load %arg7[%c0_141, %c224] : memref<48x512xf32, #tpu.memory_space<vmem>>, vector<8x32xf32>
    tpu.vector_store %arg7[%c0_141, %c224], %114 {strides = array<i32>} : memref<48x512xf32, #tpu.memory_space<vmem>>, vector<8x32xf32>,
    %116 = vector.extract_strided_slice %113 {offsets = [0, 1], sizes = [8, 32], strides = [1, 1]} : vector<8x34xf32> to vector<8x32xf32>
    %c8_142 = arith.constant 8 : index
    %c224_143 = arith.constant 224 : index
    %117 = vector.load %arg7[%c8_142, %c224_143] : memref<48x512xf32, #tpu.memory_space<vmem>>, vector<8x32xf32>
    tpu.vector_store %arg7[%c8_142, %c224_143], %116 {strides = array<i32>} : memref<48x512xf32, #tpu.memory_space<vmem>>, vector<8x32xf32>,
    %118 = vector.extract_strided_slice %113 {offsets = [0, 2], sizes = [8, 32], strides = [1, 1]} : vector<8x34xf32> to vector<8x32xf32>
    %c16_144 = arith.constant 16 : index
    %c224_145 = arith.constant 224 : index
    %119 = vector.load %arg7[%c16_144, %c224_145] : memref<48x512xf32, #tpu.memory_space<vmem>>, vector<8x32xf32>
    tpu.vector_store %arg7[%c16_144, %c224_145], %118 {strides = array<i32>} : memref<48x512xf32, #tpu.memory_space<vmem>>, vector<8x32xf32>,
    %c0_146 = arith.constant 0 : index
    %c0_147 = arith.constant 0 : index
    %c8_148 = arith.constant 8 : index
    %c0_149 = arith.constant 0 : index
    %c0_150 = arith.constant 0 : index
    %120 = vector.load %arg3[%c0_146, %c0_147, %c8_148, %c0_149, %c0_150] : memref<1x1x18x8x34xf32, #tpu.memory_space<vmem>>, vector<1x1x1x8x34xf32>
    %121 = vector.shape_cast %120 : vector<1x1x1x8x34xf32> to vector<8x34xf32>
    %122 = vector.extract_strided_slice %121 {offsets = [0, 0], sizes = [8, 32], strides = [1, 1]} : vector<8x34xf32> to vector<8x32xf32>
    %c24_151 = arith.constant 24 : index
    %c224_152 = arith.constant 224 : index
    %123 = vector.load %arg7[%c24_151, %c224_152] : memref<48x512xf32, #tpu.memory_space<vmem>>, vector<8x32xf32>
    tpu.vector_store %arg7[%c24_151, %c224_152], %122 {strides = array<i32>} : memref<48x512xf32, #tpu.memory_space<vmem>>, vector<8x32xf32>,
    %124 = vector.extract_strided_slice %121 {offsets = [0, 1], sizes = [8, 32], strides = [1, 1]} : vector<8x34xf32> to vector<8x32xf32>
    %c32_153 = arith.constant 32 : index
    %c224_154 = arith.constant 224 : index
    %125 = vector.load %arg7[%c32_153, %c224_154] : memref<48x512xf32, #tpu.memory_space<vmem>>, vector<8x32xf32>
    tpu.vector_store %arg7[%c32_153, %c224_154], %124 {strides = array<i32>} : memref<48x512xf32, #tpu.memory_space<vmem>>, vector<8x32xf32>,
    %126 = vector.extract_strided_slice %121 {offsets = [0, 2], sizes = [8, 32], strides = [1, 1]} : vector<8x34xf32> to vector<8x32xf32>
    %c40_155 = arith.constant 40 : index
    %c224_156 = arith.constant 224 : index
    %127 = vector.load %arg7[%c40_155, %c224_156] : memref<48x512xf32, #tpu.memory_space<vmem>>, vector<8x32xf32>
    tpu.vector_store %arg7[%c40_155, %c224_156], %126 {strides = array<i32>} : memref<48x512xf32, #tpu.memory_space<vmem>>, vector<8x32xf32>,
    %c0_157 = arith.constant 0 : index
    %c0_158 = arith.constant 0 : index
    %c8_159 = arith.constant 8 : index
    %c0_160 = arith.constant 0 : index
    %c0_161 = arith.constant 0 : index
    %128 = vector.load %arg3[%c0_157, %c0_158, %c8_159, %c0_160, %c0_161] : memref<1x1x18x8x34xf32, #tpu.memory_space<vmem>>, vector<1x1x1x8x34xf32>
    %129 = vector.shape_cast %128 : vector<1x1x1x8x34xf32> to vector<8x34xf32>
    %130 = vector.extract_strided_slice %129 {offsets = [0, 0], sizes = [8, 32], strides = [1, 1]} : vector<8x34xf32> to vector<8x32xf32>
    %c0_162 = arith.constant 0 : index
    %c256 = arith.constant 256 : index
    %131 = vector.load %arg7[%c0_162, %c256] : memref<48x512xf32, #tpu.memory_space<vmem>>, vector<8x32xf32>
    tpu.vector_store %arg7[%c0_162, %c256], %130 {strides = array<i32>} : memref<48x512xf32, #tpu.memory_space<vmem>>, vector<8x32xf32>,
    %132 = vector.extract_strided_slice %129 {offsets = [0, 1], sizes = [8, 32], strides = [1, 1]} : vector<8x34xf32> to vector<8x32xf32>
    %c8_163 = arith.constant 8 : index
    %c256_164 = arith.constant 256 : index
    %133 = vector.load %arg7[%c8_163, %c256_164] : memref<48x512xf32, #tpu.memory_space<vmem>>, vector<8x32xf32>
    tpu.vector_store %arg7[%c8_163, %c256_164], %132 {strides = array<i32>} : memref<48x512xf32, #tpu.memory_space<vmem>>, vector<8x32xf32>,
    %134 = vector.extract_strided_slice %129 {offsets = [0, 2], sizes = [8, 32], strides = [1, 1]} : vector<8x34xf32> to vector<8x32xf32>
    %c16_165 = arith.constant 16 : index
    %c256_166 = arith.constant 256 : index
    %135 = vector.load %arg7[%c16_165, %c256_166] : memref<48x512xf32, #tpu.memory_space<vmem>>, vector<8x32xf32>
    tpu.vector_store %arg7[%c16_165, %c256_166], %134 {strides = array<i32>} : memref<48x512xf32, #tpu.memory_space<vmem>>, vector<8x32xf32>,
    %c0_167 = arith.constant 0 : index
    %c0_168 = arith.constant 0 : index
    %c9 = arith.constant 9 : index
    %c0_169 = arith.constant 0 : index
    %c0_170 = arith.constant 0 : index
    %136 = vector.load %arg3[%c0_167, %c0_168, %c9, %c0_169, %c0_170] : memref<1x1x18x8x34xf32, #tpu.memory_space<vmem>>, vector<1x1x1x8x34xf32>
    %137 = vector.shape_cast %136 : vector<1x1x1x8x34xf32> to vector<8x34xf32>
    %138 = vector.extract_strided_slice %137 {offsets = [0, 0], sizes = [8, 32], strides = [1, 1]} : vector<8x34xf32> to vector<8x32xf32>
    %c24_171 = arith.constant 24 : index
    %c256_172 = arith.constant 256 : index
    %139 = vector.load %arg7[%c24_171, %c256_172] : memref<48x512xf32, #tpu.memory_space<vmem>>, vector<8x32xf32>
    tpu.vector_store %arg7[%c24_171, %c256_172], %138 {strides = array<i32>} : memref<48x512xf32, #tpu.memory_space<vmem>>, vector<8x32xf32>,
    %140 = vector.extract_strided_slice %137 {offsets = [0, 1], sizes = [8, 32], strides = [1, 1]} : vector<8x34xf32> to vector<8x32xf32>
    %c32_173 = arith.constant 32 : index
    %c256_174 = arith.constant 256 : index
    %141 = vector.load %arg7[%c32_173, %c256_174] : memref<48x512xf32, #tpu.memory_space<vmem>>, vector<8x32xf32>
    tpu.vector_store %arg7[%c32_173, %c256_174], %140 {strides = array<i32>} : memref<48x512xf32, #tpu.memory_space<vmem>>, vector<8x32xf32>,
    %142 = vector.extract_strided_slice %137 {offsets = [0, 2], sizes = [8, 32], strides = [1, 1]} : vector<8x34xf32> to vector<8x32xf32>
    %c40_175 = arith.constant 40 : index
    %c256_176 = arith.constant 256 : index
    %143 = vector.load %arg7[%c40_175, %c256_176] : memref<48x512xf32, #tpu.memory_space<vmem>>, vector<8x32xf32>
    tpu.vector_store %arg7[%c40_175, %c256_176], %142 {strides = array<i32>} : memref<48x512xf32, #tpu.memory_space<vmem>>, vector<8x32xf32>,
    %c0_177 = arith.constant 0 : index
    %c0_178 = arith.constant 0 : index
    %c9_179 = arith.constant 9 : index
    %c0_180 = arith.constant 0 : index
    %c0_181 = arith.constant 0 : index
    %144 = vector.load %arg3[%c0_177, %c0_178, %c9_179, %c0_180, %c0_181] : memref<1x1x18x8x34xf32, #tpu.memory_space<vmem>>, vector<1x1x1x8x34xf32>
    %145 = vector.shape_cast %144 : vector<1x1x1x8x34xf32> to vector<8x34xf32>
    %146 = vector.extract_strided_slice %145 {offsets = [0, 0], sizes = [8, 32], strides = [1, 1]} : vector<8x34xf32> to vector<8x32xf32>
    %c0_182 = arith.constant 0 : index
    %c288 = arith.constant 288 : index
    %147 = vector.load %arg7[%c0_182, %c288] : memref<48x512xf32, #tpu.memory_space<vmem>>, vector<8x32xf32>
    tpu.vector_store %arg7[%c0_182, %c288], %146 {strides = array<i32>} : memref<48x512xf32, #tpu.memory_space<vmem>>, vector<8x32xf32>,
    %148 = vector.extract_strided_slice %145 {offsets = [0, 1], sizes = [8, 32], strides = [1, 1]} : vector<8x34xf32> to vector<8x32xf32>
    %c8_183 = arith.constant 8 : index
    %c288_184 = arith.constant 288 : index
    %149 = vector.load %arg7[%c8_183, %c288_184] : memref<48x512xf32, #tpu.memory_space<vmem>>, vector<8x32xf32>
    tpu.vector_store %arg7[%c8_183, %c288_184], %148 {strides = array<i32>} : memref<48x512xf32, #tpu.memory_space<vmem>>, vector<8x32xf32>,
    %150 = vector.extract_strided_slice %145 {offsets = [0, 2], sizes = [8, 32], strides = [1, 1]} : vector<8x34xf32> to vector<8x32xf32>
    %c16_185 = arith.constant 16 : index
    %c288_186 = arith.constant 288 : index
    %151 = vector.load %arg7[%c16_185, %c288_186] : memref<48x512xf32, #tpu.memory_space<vmem>>, vector<8x32xf32>
    tpu.vector_store %arg7[%c16_185, %c288_186], %150 {strides = array<i32>} : memref<48x512xf32, #tpu.memory_space<vmem>>, vector<8x32xf32>,
    %c0_187 = arith.constant 0 : index
    %c0_188 = arith.constant 0 : index
    %c10 = arith.constant 10 : index
    %c0_189 = arith.constant 0 : index
    %c0_190 = arith.constant 0 : index
    %152 = vector.load %arg3[%c0_187, %c0_188, %c10, %c0_189, %c0_190] : memref<1x1x18x8x34xf32, #tpu.memory_space<vmem>>, vector<1x1x1x8x34xf32>
    %153 = vector.shape_cast %152 : vector<1x1x1x8x34xf32> to vector<8x34xf32>
    %154 = vector.extract_strided_slice %153 {offsets = [0, 0], sizes = [8, 32], strides = [1, 1]} : vector<8x34xf32> to vector<8x32xf32>
    %c24_191 = arith.constant 24 : index
    %c288_192 = arith.constant 288 : index
    %155 = vector.load %arg7[%c24_191, %c288_192] : memref<48x512xf32, #tpu.memory_space<vmem>>, vector<8x32xf32>
    tpu.vector_store %arg7[%c24_191, %c288_192], %154 {strides = array<i32>} : memref<48x512xf32, #tpu.memory_space<vmem>>, vector<8x32xf32>,
    %156 = vector.extract_strided_slice %153 {offsets = [0, 1], sizes = [8, 32], strides = [1, 1]} : vector<8x34xf32> to vector<8x32xf32>
    %c32_193 = arith.constant 32 : index
    %c288_194 = arith.constant 288 : index
    %157 = vector.load %arg7[%c32_193, %c288_194] : memref<48x512xf32, #tpu.memory_space<vmem>>, vector<8x32xf32>
    tpu.vector_store %arg7[%c32_193, %c288_194], %156 {strides = array<i32>} : memref<48x512xf32, #tpu.memory_space<vmem>>, vector<8x32xf32>,
    %158 = vector.extract_strided_slice %153 {offsets = [0, 2], sizes = [8, 32], strides = [1, 1]} : vector<8x34xf32> to vector<8x32xf32>
    %c40_195 = arith.constant 40 : index
    %c288_196 = arith.constant 288 : index
    %159 = vector.load %arg7[%c40_195, %c288_196] : memref<48x512xf32, #tpu.memory_space<vmem>>, vector<8x32xf32>
    tpu.vector_store %arg7[%c40_195, %c288_196], %158 {strides = array<i32>} : memref<48x512xf32, #tpu.memory_space<vmem>>, vector<8x32xf32>,
    %c0_197 = arith.constant 0 : index
    %c0_198 = arith.constant 0 : index
    %c10_199 = arith.constant 10 : index
    %c0_200 = arith.constant 0 : index
    %c0_201 = arith.constant 0 : index
    %160 = vector.load %arg3[%c0_197, %c0_198, %c10_199, %c0_200, %c0_201] : memref<1x1x18x8x34xf32, #tpu.memory_space<vmem>>, vector<1x1x1x8x34xf32>
    %161 = vector.shape_cast %160 : vector<1x1x1x8x34xf32> to vector<8x34xf32>
    %162 = vector.extract_strided_slice %161 {offsets = [0, 0], sizes = [8, 32], strides = [1, 1]} : vector<8x34xf32> to vector<8x32xf32>
    %c0_202 = arith.constant 0 : index
    %c320 = arith.constant 320 : index
    %163 = vector.load %arg7[%c0_202, %c320] : memref<48x512xf32, #tpu.memory_space<vmem>>, vector<8x32xf32>
    tpu.vector_store %arg7[%c0_202, %c320], %162 {strides = array<i32>} : memref<48x512xf32, #tpu.memory_space<vmem>>, vector<8x32xf32>,
    %164 = vector.extract_strided_slice %161 {offsets = [0, 1], sizes = [8, 32], strides = [1, 1]} : vector<8x34xf32> to vector<8x32xf32>
    %c8_203 = arith.constant 8 : index
    %c320_204 = arith.constant 320 : index
    %165 = vector.load %arg7[%c8_203, %c320_204] : memref<48x512xf32, #tpu.memory_space<vmem>>, vector<8x32xf32>
    tpu.vector_store %arg7[%c8_203, %c320_204], %164 {strides = array<i32>} : memref<48x512xf32, #tpu.memory_space<vmem>>, vector<8x32xf32>,
    %166 = vector.extract_strided_slice %161 {offsets = [0, 2], sizes = [8, 32], strides = [1, 1]} : vector<8x34xf32> to vector<8x32xf32>
    %c16_205 = arith.constant 16 : index
    %c320_206 = arith.constant 320 : index
    %167 = vector.load %arg7[%c16_205, %c320_206] : memref<48x512xf32, #tpu.memory_space<vmem>>, vector<8x32xf32>
    tpu.vector_store %arg7[%c16_205, %c320_206], %166 {strides = array<i32>} : memref<48x512xf32, #tpu.memory_space<vmem>>, vector<8x32xf32>,
    %c0_207 = arith.constant 0 : index
    %c0_208 = arith.constant 0 : index
    %c11 = arith.constant 11 : index
    %c0_209 = arith.constant 0 : index
    %c0_210 = arith.constant 0 : index
    %168 = vector.load %arg3[%c0_207, %c0_208, %c11, %c0_209, %c0_210] : memref<1x1x18x8x34xf32, #tpu.memory_space<vmem>>, vector<1x1x1x8x34xf32>
    %169 = vector.shape_cast %168 : vector<1x1x1x8x34xf32> to vector<8x34xf32>
    %170 = vector.extract_strided_slice %169 {offsets = [0, 0], sizes = [8, 32], strides = [1, 1]} : vector<8x34xf32> to vector<8x32xf32>
    %c24_211 = arith.constant 24 : index
    %c320_212 = arith.constant 320 : index
    %171 = vector.load %arg7[%c24_211, %c320_212] : memref<48x512xf32, #tpu.memory_space<vmem>>, vector<8x32xf32>
    tpu.vector_store %arg7[%c24_211, %c320_212], %170 {strides = array<i32>} : memref<48x512xf32, #tpu.memory_space<vmem>>, vector<8x32xf32>,
    %172 = vector.extract_strided_slice %169 {offsets = [0, 1], sizes = [8, 32], strides = [1, 1]} : vector<8x34xf32> to vector<8x32xf32>
    %c32_213 = arith.constant 32 : index
    %c320_214 = arith.constant 320 : index
    %173 = vector.load %arg7[%c32_213, %c320_214] : memref<48x512xf32, #tpu.memory_space<vmem>>, vector<8x32xf32>
    tpu.vector_store %arg7[%c32_213, %c320_214], %172 {strides = array<i32>} : memref<48x512xf32, #tpu.memory_space<vmem>>, vector<8x32xf32>,
    %174 = vector.extract_strided_slice %169 {offsets = [0, 2], sizes = [8, 32], strides = [1, 1]} : vector<8x34xf32> to vector<8x32xf32>
    %c40_215 = arith.constant 40 : index
    %c320_216 = arith.constant 320 : index
    %175 = vector.load %arg7[%c40_215, %c320_216] : memref<48x512xf32, #tpu.memory_space<vmem>>, vector<8x32xf32>
    tpu.vector_store %arg7[%c40_215, %c320_216], %174 {strides = array<i32>} : memref<48x512xf32, #tpu.memory_space<vmem>>, vector<8x32xf32>,
    %c0_217 = arith.constant 0 : index
    %c0_218 = arith.constant 0 : index
    %c11_219 = arith.constant 11 : index
    %c0_220 = arith.constant 0 : index
    %c0_221 = arith.constant 0 : index
    %176 = vector.load %arg3[%c0_217, %c0_218, %c11_219, %c0_220, %c0_221] : memref<1x1x18x8x34xf32, #tpu.memory_space<vmem>>, vector<1x1x1x8x34xf32>
    %177 = vector.shape_cast %176 : vector<1x1x1x8x34xf32> to vector<8x34xf32>
    %178 = vector.extract_strided_slice %177 {offsets = [0, 0], sizes = [8, 32], strides = [1, 1]} : vector<8x34xf32> to vector<8x32xf32>
    %c0_222 = arith.constant 0 : index
    %c352 = arith.constant 352 : index
    %179 = vector.load %arg7[%c0_222, %c352] : memref<48x512xf32, #tpu.memory_space<vmem>>, vector<8x32xf32>
    tpu.vector_store %arg7[%c0_222, %c352], %178 {strides = array<i32>} : memref<48x512xf32, #tpu.memory_space<vmem>>, vector<8x32xf32>,
    %180 = vector.extract_strided_slice %177 {offsets = [0, 1], sizes = [8, 32], strides = [1, 1]} : vector<8x34xf32> to vector<8x32xf32>
    %c8_223 = arith.constant 8 : index
    %c352_224 = arith.constant 352 : index
    %181 = vector.load %arg7[%c8_223, %c352_224] : memref<48x512xf32, #tpu.memory_space<vmem>>, vector<8x32xf32>
    tpu.vector_store %arg7[%c8_223, %c352_224], %180 {strides = array<i32>} : memref<48x512xf32, #tpu.memory_space<vmem>>, vector<8x32xf32>,
    %182 = vector.extract_strided_slice %177 {offsets = [0, 2], sizes = [8, 32], strides = [1, 1]} : vector<8x34xf32> to vector<8x32xf32>
    %c16_225 = arith.constant 16 : index
    %c352_226 = arith.constant 352 : index
    %183 = vector.load %arg7[%c16_225, %c352_226] : memref<48x512xf32, #tpu.memory_space<vmem>>, vector<8x32xf32>
    tpu.vector_store %arg7[%c16_225, %c352_226], %182 {strides = array<i32>} : memref<48x512xf32, #tpu.memory_space<vmem>>, vector<8x32xf32>,
    %c0_227 = arith.constant 0 : index
    %c0_228 = arith.constant 0 : index
    %c12 = arith.constant 12 : index
    %c0_229 = arith.constant 0 : index
    %c0_230 = arith.constant 0 : index
    %184 = vector.load %arg3[%c0_227, %c0_228, %c12, %c0_229, %c0_230] : memref<1x1x18x8x34xf32, #tpu.memory_space<vmem>>, vector<1x1x1x8x34xf32>
    %185 = vector.shape_cast %184 : vector<1x1x1x8x34xf32> to vector<8x34xf32>
    %186 = vector.extract_strided_slice %185 {offsets = [0, 0], sizes = [8, 32], strides = [1, 1]} : vector<8x34xf32> to vector<8x32xf32>
    %c24_231 = arith.constant 24 : index
    %c352_232 = arith.constant 352 : index
    %187 = vector.load %arg7[%c24_231, %c352_232] : memref<48x512xf32, #tpu.memory_space<vmem>>, vector<8x32xf32>
    tpu.vector_store %arg7[%c24_231, %c352_232], %186 {strides = array<i32>} : memref<48x512xf32, #tpu.memory_space<vmem>>, vector<8x32xf32>,
    %188 = vector.extract_strided_slice %185 {offsets = [0, 1], sizes = [8, 32], strides = [1, 1]} : vector<8x34xf32> to vector<8x32xf32>
    %c32_233 = arith.constant 32 : index
    %c352_234 = arith.constant 352 : index
    %189 = vector.load %arg7[%c32_233, %c352_234] : memref<48x512xf32, #tpu.memory_space<vmem>>, vector<8x32xf32>
    tpu.vector_store %arg7[%c32_233, %c352_234], %188 {strides = array<i32>} : memref<48x512xf32, #tpu.memory_space<vmem>>, vector<8x32xf32>,
    %190 = vector.extract_strided_slice %185 {offsets = [0, 2], sizes = [8, 32], strides = [1, 1]} : vector<8x34xf32> to vector<8x32xf32>
    %c40_235 = arith.constant 40 : index
    %c352_236 = arith.constant 352 : index
    %191 = vector.load %arg7[%c40_235, %c352_236] : memref<48x512xf32, #tpu.memory_space<vmem>>, vector<8x32xf32>
    tpu.vector_store %arg7[%c40_235, %c352_236], %190 {strides = array<i32>} : memref<48x512xf32, #tpu.memory_space<vmem>>, vector<8x32xf32>,
    %c0_237 = arith.constant 0 : index
    %c0_238 = arith.constant 0 : index
    %c12_239 = arith.constant 12 : index
    %c0_240 = arith.constant 0 : index
    %c0_241 = arith.constant 0 : index
    %192 = vector.load %arg3[%c0_237, %c0_238, %c12_239, %c0_240, %c0_241] : memref<1x1x18x8x34xf32, #tpu.memory_space<vmem>>, vector<1x1x1x8x34xf32>
    %193 = vector.shape_cast %192 : vector<1x1x1x8x34xf32> to vector<8x34xf32>
    %194 = vector.extract_strided_slice %193 {offsets = [0, 0], sizes = [8, 32], strides = [1, 1]} : vector<8x34xf32> to vector<8x32xf32>
    %c0_242 = arith.constant 0 : index
    %c384 = arith.constant 384 : index
    %195 = vector.load %arg7[%c0_242, %c384] : memref<48x512xf32, #tpu.memory_space<vmem>>, vector<8x32xf32>
    tpu.vector_store %arg7[%c0_242, %c384], %194 {strides = array<i32>} : memref<48x512xf32, #tpu.memory_space<vmem>>, vector<8x32xf32>,
    %196 = vector.extract_strided_slice %193 {offsets = [0, 1], sizes = [8, 32], strides = [1, 1]} : vector<8x34xf32> to vector<8x32xf32>
    %c8_243 = arith.constant 8 : index
    %c384_244 = arith.constant 384 : index
    %197 = vector.load %arg7[%c8_243, %c384_244] : memref<48x512xf32, #tpu.memory_space<vmem>>, vector<8x32xf32>
    tpu.vector_store %arg7[%c8_243, %c384_244], %196 {strides = array<i32>} : memref<48x512xf32, #tpu.memory_space<vmem>>, vector<8x32xf32>,
    %198 = vector.extract_strided_slice %193 {offsets = [0, 2], sizes = [8, 32], strides = [1, 1]} : vector<8x34xf32> to vector<8x32xf32>
    %c16_245 = arith.constant 16 : index
    %c384_246 = arith.constant 384 : index
    %199 = vector.load %arg7[%c16_245, %c384_246] : memref<48x512xf32, #tpu.memory_space<vmem>>, vector<8x32xf32>
    tpu.vector_store %arg7[%c16_245, %c384_246], %198 {strides = array<i32>} : memref<48x512xf32, #tpu.memory_space<vmem>>, vector<8x32xf32>,
    %c0_247 = arith.constant 0 : index
    %c0_248 = arith.constant 0 : index
    %c13 = arith.constant 13 : index
    %c0_249 = arith.constant 0 : index
    %c0_250 = arith.constant 0 : index
    %200 = vector.load %arg3[%c0_247, %c0_248, %c13, %c0_249, %c0_250] : memref<1x1x18x8x34xf32, #tpu.memory_space<vmem>>, vector<1x1x1x8x34xf32>
    %201 = vector.shape_cast %200 : vector<1x1x1x8x34xf32> to vector<8x34xf32>
    %202 = vector.extract_strided_slice %201 {offsets = [0, 0], sizes = [8, 32], strides = [1, 1]} : vector<8x34xf32> to vector<8x32xf32>
    %c24_251 = arith.constant 24 : index
    %c384_252 = arith.constant 384 : index
    %203 = vector.load %arg7[%c24_251, %c384_252] : memref<48x512xf32, #tpu.memory_space<vmem>>, vector<8x32xf32>
    tpu.vector_store %arg7[%c24_251, %c384_252], %202 {strides = array<i32>} : memref<48x512xf32, #tpu.memory_space<vmem>>, vector<8x32xf32>,
    %204 = vector.extract_strided_slice %201 {offsets = [0, 1], sizes = [8, 32], strides = [1, 1]} : vector<8x34xf32> to vector<8x32xf32>
    %c32_253 = arith.constant 32 : index
    %c384_254 = arith.constant 384 : index
    %205 = vector.load %arg7[%c32_253, %c384_254] : memref<48x512xf32, #tpu.memory_space<vmem>>, vector<8x32xf32>
    tpu.vector_store %arg7[%c32_253, %c384_254], %204 {strides = array<i32>} : memref<48x512xf32, #tpu.memory_space<vmem>>, vector<8x32xf32>,
    %206 = vector.extract_strided_slice %201 {offsets = [0, 2], sizes = [8, 32], strides = [1, 1]} : vector<8x34xf32> to vector<8x32xf32>
    %c40_255 = arith.constant 40 : index
    %c384_256 = arith.constant 384 : index
    %207 = vector.load %arg7[%c40_255, %c384_256] : memref<48x512xf32, #tpu.memory_space<vmem>>, vector<8x32xf32>
    tpu.vector_store %arg7[%c40_255, %c384_256], %206 {strides = array<i32>} : memref<48x512xf32, #tpu.memory_space<vmem>>, vector<8x32xf32>,
    %c0_257 = arith.constant 0 : index
    %c0_258 = arith.constant 0 : index
    %c13_259 = arith.constant 13 : index
    %c0_260 = arith.constant 0 : index
    %c0_261 = arith.constant 0 : index
    %208 = vector.load %arg3[%c0_257, %c0_258, %c13_259, %c0_260, %c0_261] : memref<1x1x18x8x34xf32, #tpu.memory_space<vmem>>, vector<1x1x1x8x34xf32>
    %209 = vector.shape_cast %208 : vector<1x1x1x8x34xf32> to vector<8x34xf32>
    %210 = vector.extract_strided_slice %209 {offsets = [0, 0], sizes = [8, 32], strides = [1, 1]} : vector<8x34xf32> to vector<8x32xf32>
    %c0_262 = arith.constant 0 : index
    %c416 = arith.constant 416 : index
    %211 = vector.load %arg7[%c0_262, %c416] : memref<48x512xf32, #tpu.memory_space<vmem>>, vector<8x32xf32>
    tpu.vector_store %arg7[%c0_262, %c416], %210 {strides = array<i32>} : memref<48x512xf32, #tpu.memory_space<vmem>>, vector<8x32xf32>,
    %212 = vector.extract_strided_slice %209 {offsets = [0, 1], sizes = [8, 32], strides = [1, 1]} : vector<8x34xf32> to vector<8x32xf32>
    %c8_263 = arith.constant 8 : index
    %c416_264 = arith.constant 416 : index
    %213 = vector.load %arg7[%c8_263, %c416_264] : memref<48x512xf32, #tpu.memory_space<vmem>>, vector<8x32xf32>
    tpu.vector_store %arg7[%c8_263, %c416_264], %212 {strides = array<i32>} : memref<48x512xf32, #tpu.memory_space<vmem>>, vector<8x32xf32>,
    %214 = vector.extract_strided_slice %209 {offsets = [0, 2], sizes = [8, 32], strides = [1, 1]} : vector<8x34xf32> to vector<8x32xf32>
    %c16_265 = arith.constant 16 : index
    %c416_266 = arith.constant 416 : index
    %215 = vector.load %arg7[%c16_265, %c416_266] : memref<48x512xf32, #tpu.memory_space<vmem>>, vector<8x32xf32>
    tpu.vector_store %arg7[%c16_265, %c416_266], %214 {strides = array<i32>} : memref<48x512xf32, #tpu.memory_space<vmem>>, vector<8x32xf32>,
    %c0_267 = arith.constant 0 : index
    %c0_268 = arith.constant 0 : index
    %c14 = arith.constant 14 : index
    %c0_269 = arith.constant 0 : index
    %c0_270 = arith.constant 0 : index
    %216 = vector.load %arg3[%c0_267, %c0_268, %c14, %c0_269, %c0_270] : memref<1x1x18x8x34xf32, #tpu.memory_space<vmem>>, vector<1x1x1x8x34xf32>
    %217 = vector.shape_cast %216 : vector<1x1x1x8x34xf32> to vector<8x34xf32>
    %218 = vector.extract_strided_slice %217 {offsets = [0, 0], sizes = [8, 32], strides = [1, 1]} : vector<8x34xf32> to vector<8x32xf32>
    %c24_271 = arith.constant 24 : index
    %c416_272 = arith.constant 416 : index
    %219 = vector.load %arg7[%c24_271, %c416_272] : memref<48x512xf32, #tpu.memory_space<vmem>>, vector<8x32xf32>
    tpu.vector_store %arg7[%c24_271, %c416_272], %218 {strides = array<i32>} : memref<48x512xf32, #tpu.memory_space<vmem>>, vector<8x32xf32>,
    %220 = vector.extract_strided_slice %217 {offsets = [0, 1], sizes = [8, 32], strides = [1, 1]} : vector<8x34xf32> to vector<8x32xf32>
    %c32_273 = arith.constant 32 : index
    %c416_274 = arith.constant 416 : index
    %221 = vector.load %arg7[%c32_273, %c416_274] : memref<48x512xf32, #tpu.memory_space<vmem>>, vector<8x32xf32>
    tpu.vector_store %arg7[%c32_273, %c416_274], %220 {strides = array<i32>} : memref<48x512xf32, #tpu.memory_space<vmem>>, vector<8x32xf32>,
    %222 = vector.extract_strided_slice %217 {offsets = [0, 2], sizes = [8, 32], strides = [1, 1]} : vector<8x34xf32> to vector<8x32xf32>
    %c40_275 = arith.constant 40 : index
    %c416_276 = arith.constant 416 : index
    %223 = vector.load %arg7[%c40_275, %c416_276] : memref<48x512xf32, #tpu.memory_space<vmem>>, vector<8x32xf32>
    tpu.vector_store %arg7[%c40_275, %c416_276], %222 {strides = array<i32>} : memref<48x512xf32, #tpu.memory_space<vmem>>, vector<8x32xf32>,
    %c0_277 = arith.constant 0 : index
    %c0_278 = arith.constant 0 : index
    %c14_279 = arith.constant 14 : index
    %c0_280 = arith.constant 0 : index
    %c0_281 = arith.constant 0 : index
    %224 = vector.load %arg3[%c0_277, %c0_278, %c14_279, %c0_280, %c0_281] : memref<1x1x18x8x34xf32, #tpu.memory_space<vmem>>, vector<1x1x1x8x34xf32>
    %225 = vector.shape_cast %224 : vector<1x1x1x8x34xf32> to vector<8x34xf32>
    %226 = vector.extract_strided_slice %225 {offsets = [0, 0], sizes = [8, 32], strides = [1, 1]} : vector<8x34xf32> to vector<8x32xf32>
    %c0_282 = arith.constant 0 : index
    %c448 = arith.constant 448 : index
    %227 = vector.load %arg7[%c0_282, %c448] : memref<48x512xf32, #tpu.memory_space<vmem>>, vector<8x32xf32>
    tpu.vector_store %arg7[%c0_282, %c448], %226 {strides = array<i32>} : memref<48x512xf32, #tpu.memory_space<vmem>>, vector<8x32xf32>,
    %228 = vector.extract_strided_slice %225 {offsets = [0, 1], sizes = [8, 32], strides = [1, 1]} : vector<8x34xf32> to vector<8x32xf32>
    %c8_283 = arith.constant 8 : index
    %c448_284 = arith.constant 448 : index
    %229 = vector.load %arg7[%c8_283, %c448_284] : memref<48x512xf32, #tpu.memory_space<vmem>>, vector<8x32xf32>
    tpu.vector_store %arg7[%c8_283, %c448_284], %228 {strides = array<i32>} : memref<48x512xf32, #tpu.memory_space<vmem>>, vector<8x32xf32>,
    %230 = vector.extract_strided_slice %225 {offsets = [0, 2], sizes = [8, 32], strides = [1, 1]} : vector<8x34xf32> to vector<8x32xf32>
    %c16_285 = arith.constant 16 : index
    %c448_286 = arith.constant 448 : index
    %231 = vector.load %arg7[%c16_285, %c448_286] : memref<48x512xf32, #tpu.memory_space<vmem>>, vector<8x32xf32>
    tpu.vector_store %arg7[%c16_285, %c448_286], %230 {strides = array<i32>} : memref<48x512xf32, #tpu.memory_space<vmem>>, vector<8x32xf32>,
    %c0_287 = arith.constant 0 : index
    %c0_288 = arith.constant 0 : index
    %c15 = arith.constant 15 : index
    %c0_289 = arith.constant 0 : index
    %c0_290 = arith.constant 0 : index
    %232 = vector.load %arg3[%c0_287, %c0_288, %c15, %c0_289, %c0_290] : memref<1x1x18x8x34xf32, #tpu.memory_space<vmem>>, vector<1x1x1x8x34xf32>
    %233 = vector.shape_cast %232 : vector<1x1x1x8x34xf32> to vector<8x34xf32>
    %234 = vector.extract_strided_slice %233 {offsets = [0, 0], sizes = [8, 32], strides = [1, 1]} : vector<8x34xf32> to vector<8x32xf32>
    %c24_291 = arith.constant 24 : index
    %c448_292 = arith.constant 448 : index
    %235 = vector.load %arg7[%c24_291, %c448_292] : memref<48x512xf32, #tpu.memory_space<vmem>>, vector<8x32xf32>
    tpu.vector_store %arg7[%c24_291, %c448_292], %234 {strides = array<i32>} : memref<48x512xf32, #tpu.memory_space<vmem>>, vector<8x32xf32>,
    %236 = vector.extract_strided_slice %233 {offsets = [0, 1], sizes = [8, 32], strides = [1, 1]} : vector<8x34xf32> to vector<8x32xf32>
    %c32_293 = arith.constant 32 : index
    %c448_294 = arith.constant 448 : index
    %237 = vector.load %arg7[%c32_293, %c448_294] : memref<48x512xf32, #tpu.memory_space<vmem>>, vector<8x32xf32>
    tpu.vector_store %arg7[%c32_293, %c448_294], %236 {strides = array<i32>} : memref<48x512xf32, #tpu.memory_space<vmem>>, vector<8x32xf32>,
    %238 = vector.extract_strided_slice %233 {offsets = [0, 2], sizes = [8, 32], strides = [1, 1]} : vector<8x34xf32> to vector<8x32xf32>
    %c40_295 = arith.constant 40 : index
    %c448_296 = arith.constant 448 : index
    %239 = vector.load %arg7[%c40_295, %c448_296] : memref<48x512xf32, #tpu.memory_space<vmem>>, vector<8x32xf32>
    tpu.vector_store %arg7[%c40_295, %c448_296], %238 {strides = array<i32>} : memref<48x512xf32, #tpu.memory_space<vmem>>, vector<8x32xf32>,
    %c0_297 = arith.constant 0 : index
    %c0_298 = arith.constant 0 : index
    %c15_299 = arith.constant 15 : index
    %c0_300 = arith.constant 0 : index
    %c0_301 = arith.constant 0 : index
    %240 = vector.load %arg3[%c0_297, %c0_298, %c15_299, %c0_300, %c0_301] : memref<1x1x18x8x34xf32, #tpu.memory_space<vmem>>, vector<1x1x1x8x34xf32>
    %241 = vector.shape_cast %240 : vector<1x1x1x8x34xf32> to vector<8x34xf32>
    %242 = vector.extract_strided_slice %241 {offsets = [0, 0], sizes = [8, 32], strides = [1, 1]} : vector<8x34xf32> to vector<8x32xf32>
    %c0_302 = arith.constant 0 : index
    %c480 = arith.constant 480 : index
    %243 = vector.load %arg7[%c0_302, %c480] : memref<48x512xf32, #tpu.memory_space<vmem>>, vector<8x32xf32>
    tpu.vector_store %arg7[%c0_302, %c480], %242 {strides = array<i32>} : memref<48x512xf32, #tpu.memory_space<vmem>>, vector<8x32xf32>,
    %244 = vector.extract_strided_slice %241 {offsets = [0, 1], sizes = [8, 32], strides = [1, 1]} : vector<8x34xf32> to vector<8x32xf32>
    %c8_303 = arith.constant 8 : index
    %c480_304 = arith.constant 480 : index
    %245 = vector.load %arg7[%c8_303, %c480_304] : memref<48x512xf32, #tpu.memory_space<vmem>>, vector<8x32xf32>
    tpu.vector_store %arg7[%c8_303, %c480_304], %244 {strides = array<i32>} : memref<48x512xf32, #tpu.memory_space<vmem>>, vector<8x32xf32>,
    %246 = vector.extract_strided_slice %241 {offsets = [0, 2], sizes = [8, 32], strides = [1, 1]} : vector<8x34xf32> to vector<8x32xf32>
    %c16_305 = arith.constant 16 : index
    %c480_306 = arith.constant 480 : index
    %247 = vector.load %arg7[%c16_305, %c480_306] : memref<48x512xf32, #tpu.memory_space<vmem>>, vector<8x32xf32>
    tpu.vector_store %arg7[%c16_305, %c480_306], %246 {strides = array<i32>} : memref<48x512xf32, #tpu.memory_space<vmem>>, vector<8x32xf32>,
    %c0_307 = arith.constant 0 : index
    %c0_308 = arith.constant 0 : index
    %c16_309 = arith.constant 16 : index
    %c0_310 = arith.constant 0 : index
    %c0_311 = arith.constant 0 : index
    %248 = vector.load %arg3[%c0_307, %c0_308, %c16_309, %c0_310, %c0_311] : memref<1x1x18x8x34xf32, #tpu.memory_space<vmem>>, vector<1x1x1x8x34xf32>
    %249 = vector.shape_cast %248 : vector<1x1x1x8x34xf32> to vector<8x34xf32>
    %250 = vector.extract_strided_slice %249 {offsets = [0, 0], sizes = [8, 32], strides = [1, 1]} : vector<8x34xf32> to vector<8x32xf32>
    %c24_312 = arith.constant 24 : index
    %c480_313 = arith.constant 480 : index
    %251 = vector.load %arg7[%c24_312, %c480_313] : memref<48x512xf32, #tpu.memory_space<vmem>>, vector<8x32xf32>
    tpu.vector_store %arg7[%c24_312, %c480_313], %250 {strides = array<i32>} : memref<48x512xf32, #tpu.memory_space<vmem>>, vector<8x32xf32>,
    %252 = vector.extract_strided_slice %249 {offsets = [0, 1], sizes = [8, 32], strides = [1, 1]} : vector<8x34xf32> to vector<8x32xf32>
    %c32_314 = arith.constant 32 : index
    %c480_315 = arith.constant 480 : index
    %253 = vector.load %arg7[%c32_314, %c480_315] : memref<48x512xf32, #tpu.memory_space<vmem>>, vector<8x32xf32>
    tpu.vector_store %arg7[%c32_314, %c480_315], %252 {strides = array<i32>} : memref<48x512xf32, #tpu.memory_space<vmem>>, vector<8x32xf32>,
    %254 = vector.extract_strided_slice %249 {offsets = [0, 2], sizes = [8, 32], strides = [1, 1]} : vector<8x34xf32> to vector<8x32xf32>
    %c40_316 = arith.constant 40 : index
    %c480_317 = arith.constant 480 : index
    %255 = vector.load %arg7[%c40_316, %c480_317] : memref<48x512xf32, #tpu.memory_space<vmem>>, vector<8x32xf32>
    tpu.vector_store %arg7[%c40_316, %c480_317], %254 {strides = array<i32>} : memref<48x512xf32, #tpu.memory_space<vmem>>, vector<8x32xf32>,
    %c0_318 = arith.constant 0 : index
    %c0_319 = arith.constant 0 : index
    %c1_320 = arith.constant 1 : index
    %c0_321 = arith.constant 0 : index
    %c0_322 = arith.constant 0 : index
    %256 = vector.load %arg3[%c0_318, %c0_319, %c1_320, %c0_321, %c0_322] : memref<1x1x18x8x34xf32, #tpu.memory_space<vmem>>, vector<1x1x1x8x34xf32>
    %257 = vector.shape_cast %256 : vector<1x1x1x8x34xf32> to vector<8x34xf32>
    %258 = vector.extract_strided_slice %257 {offsets = [0, 0], sizes = [8, 32], strides = [1, 1]} : vector<8x34xf32> to vector<8x32xf32>
    %c0_323 = arith.constant 0 : index
    %c0_324 = arith.constant 0 : index
    %259 = vector.load %arg8[%c0_323, %c0_324] : memref<48x512xf32, #tpu.memory_space<vmem>>, vector<8x32xf32>
    tpu.vector_store %arg8[%c0_323, %c0_324], %258 {strides = array<i32>} : memref<48x512xf32, #tpu.memory_space<vmem>>, vector<8x32xf32>,
    %260 = vector.extract_strided_slice %257 {offsets = [0, 1], sizes = [8, 32], strides = [1, 1]} : vector<8x34xf32> to vector<8x32xf32>
    %c8_325 = arith.constant 8 : index
    %c0_326 = arith.constant 0 : index
    %261 = vector.load %arg8[%c8_325, %c0_326] : memref<48x512xf32, #tpu.memory_space<vmem>>, vector<8x32xf32>
    tpu.vector_store %arg8[%c8_325, %c0_326], %260 {strides = array<i32>} : memref<48x512xf32, #tpu.memory_space<vmem>>, vector<8x32xf32>,
    %262 = vector.extract_strided_slice %257 {offsets = [0, 2], sizes = [8, 32], strides = [1, 1]} : vector<8x34xf32> to vector<8x32xf32>
    %c16_327 = arith.constant 16 : index
    %c0_328 = arith.constant 0 : index
    %263 = vector.load %arg8[%c16_327, %c0_328] : memref<48x512xf32, #tpu.memory_space<vmem>>, vector<8x32xf32>
    tpu.vector_store %arg8[%c16_327, %c0_328], %262 {strides = array<i32>} : memref<48x512xf32, #tpu.memory_space<vmem>>, vector<8x32xf32>,
    %c0_329 = arith.constant 0 : index
    %c0_330 = arith.constant 0 : index
    %c2_331 = arith.constant 2 : index
    %c0_332 = arith.constant 0 : index
    %c0_333 = arith.constant 0 : index
    %264 = vector.load %arg3[%c0_329, %c0_330, %c2_331, %c0_332, %c0_333] : memref<1x1x18x8x34xf32, #tpu.memory_space<vmem>>, vector<1x1x1x8x34xf32>
    %265 = vector.shape_cast %264 : vector<1x1x1x8x34xf32> to vector<8x34xf32>
    %266 = vector.extract_strided_slice %265 {offsets = [0, 0], sizes = [8, 32], strides = [1, 1]} : vector<8x34xf32> to vector<8x32xf32>
    %c24_334 = arith.constant 24 : index
    %c0_335 = arith.constant 0 : index
    %267 = vector.load %arg8[%c24_334, %c0_335] : memref<48x512xf32, #tpu.memory_space<vmem>>, vector<8x32xf32>
    tpu.vector_store %arg8[%c24_334, %c0_335], %266 {strides = array<i32>} : memref<48x512xf32, #tpu.memory_space<vmem>>, vector<8x32xf32>,
    %268 = vector.extract_strided_slice %265 {offsets = [0, 1], sizes = [8, 32], strides = [1, 1]} : vector<8x34xf32> to vector<8x32xf32>
    %c32_336 = arith.constant 32 : index
    %c0_337 = arith.constant 0 : index
    %269 = vector.load %arg8[%c32_336, %c0_337] : memref<48x512xf32, #tpu.memory_space<vmem>>, vector<8x32xf32>
    tpu.vector_store %arg8[%c32_336, %c0_337], %268 {strides = array<i32>} : memref<48x512xf32, #tpu.memory_space<vmem>>, vector<8x32xf32>,
    %270 = vector.extract_strided_slice %265 {offsets = [0, 2], sizes = [8, 32], strides = [1, 1]} : vector<8x34xf32> to vector<8x32xf32>
    %c40_338 = arith.constant 40 : index
    %c0_339 = arith.constant 0 : index
    %271 = vector.load %arg8[%c40_338, %c0_339] : memref<48x512xf32, #tpu.memory_space<vmem>>, vector<8x32xf32>
    tpu.vector_store %arg8[%c40_338, %c0_339], %270 {strides = array<i32>} : memref<48x512xf32, #tpu.memory_space<vmem>>, vector<8x32xf32>,
    %c0_340 = arith.constant 0 : index
    %c0_341 = arith.constant 0 : index
    %c2_342 = arith.constant 2 : index
    %c0_343 = arith.constant 0 : index
    %c0_344 = arith.constant 0 : index
    %272 = vector.load %arg3[%c0_340, %c0_341, %c2_342, %c0_343, %c0_344] : memref<1x1x18x8x34xf32, #tpu.memory_space<vmem>>, vector<1x1x1x8x34xf32>
    %273 = vector.shape_cast %272 : vector<1x1x1x8x34xf32> to vector<8x34xf32>
    %274 = vector.extract_strided_slice %273 {offsets = [0, 0], sizes = [8, 32], strides = [1, 1]} : vector<8x34xf32> to vector<8x32xf32>
    %c0_345 = arith.constant 0 : index
    %c32_346 = arith.constant 32 : index
    %275 = vector.load %arg8[%c0_345, %c32_346] : memref<48x512xf32, #tpu.memory_space<vmem>>, vector<8x32xf32>
    tpu.vector_store %arg8[%c0_345, %c32_346], %274 {strides = array<i32>} : memref<48x512xf32, #tpu.memory_space<vmem>>, vector<8x32xf32>,
    %276 = vector.extract_strided_slice %273 {offsets = [0, 1], sizes = [8, 32], strides = [1, 1]} : vector<8x34xf32> to vector<8x32xf32>
    %c8_347 = arith.constant 8 : index
    %c32_348 = arith.constant 32 : index
    %277 = vector.load %arg8[%c8_347, %c32_348] : memref<48x512xf32, #tpu.memory_space<vmem>>, vector<8x32xf32>
    tpu.vector_store %arg8[%c8_347, %c32_348], %276 {strides = array<i32>} : memref<48x512xf32, #tpu.memory_space<vmem>>, vector<8x32xf32>,
    %278 = vector.extract_strided_slice %273 {offsets = [0, 2], sizes = [8, 32], strides = [1, 1]} : vector<8x34xf32> to vector<8x32xf32>
    %c16_349 = arith.constant 16 : index
    %c32_350 = arith.constant 32 : index
    %279 = vector.load %arg8[%c16_349, %c32_350] : memref<48x512xf32, #tpu.memory_space<vmem>>, vector<8x32xf32>
    tpu.vector_store %arg8[%c16_349, %c32_350], %278 {strides = array<i32>} : memref<48x512xf32, #tpu.memory_space<vmem>>, vector<8x32xf32>,
    %c0_351 = arith.constant 0 : index
    %c0_352 = arith.constant 0 : index
    %c3_353 = arith.constant 3 : index
    %c0_354 = arith.constant 0 : index
    %c0_355 = arith.constant 0 : index
    %280 = vector.load %arg3[%c0_351, %c0_352, %c3_353, %c0_354, %c0_355] : memref<1x1x18x8x34xf32, #tpu.memory_space<vmem>>, vector<1x1x1x8x34xf32>
    %281 = vector.shape_cast %280 : vector<1x1x1x8x34xf32> to vector<8x34xf32>
    %282 = vector.extract_strided_slice %281 {offsets = [0, 0], sizes = [8, 32], strides = [1, 1]} : vector<8x34xf32> to vector<8x32xf32>
    %c24_356 = arith.constant 24 : index
    %c32_357 = arith.constant 32 : index
    %283 = vector.load %arg8[%c24_356, %c32_357] : memref<48x512xf32, #tpu.memory_space<vmem>>, vector<8x32xf32>
    tpu.vector_store %arg8[%c24_356, %c32_357], %282 {strides = array<i32>} : memref<48x512xf32, #tpu.memory_space<vmem>>, vector<8x32xf32>,
    %284 = vector.extract_strided_slice %281 {offsets = [0, 1], sizes = [8, 32], strides = [1, 1]} : vector<8x34xf32> to vector<8x32xf32>
    %c32_358 = arith.constant 32 : index
    %c32_359 = arith.constant 32 : index
    %285 = vector.load %arg8[%c32_358, %c32_359] : memref<48x512xf32, #tpu.memory_space<vmem>>, vector<8x32xf32>
    tpu.vector_store %arg8[%c32_358, %c32_359], %284 {strides = array<i32>} : memref<48x512xf32, #tpu.memory_space<vmem>>, vector<8x32xf32>,
    %286 = vector.extract_strided_slice %281 {offsets = [0, 2], sizes = [8, 32], strides = [1, 1]} : vector<8x34xf32> to vector<8x32xf32>
    %c40_360 = arith.constant 40 : index
    %c32_361 = arith.constant 32 : index
    %287 = vector.load %arg8[%c40_360, %c32_361] : memref<48x512xf32, #tpu.memory_space<vmem>>, vector<8x32xf32>
    tpu.vector_store %arg8[%c40_360, %c32_361], %286 {strides = array<i32>} : memref<48x512xf32, #tpu.memory_space<vmem>>, vector<8x32xf32>,
    %c0_362 = arith.constant 0 : index
    %c0_363 = arith.constant 0 : index
    %c3_364 = arith.constant 3 : index
    %c0_365 = arith.constant 0 : index
    %c0_366 = arith.constant 0 : index
    %288 = vector.load %arg3[%c0_362, %c0_363, %c3_364, %c0_365, %c0_366] : memref<1x1x18x8x34xf32, #tpu.memory_space<vmem>>, vector<1x1x1x8x34xf32>
    %289 = vector.shape_cast %288 : vector<1x1x1x8x34xf32> to vector<8x34xf32>
    %290 = vector.extract_strided_slice %289 {offsets = [0, 0], sizes = [8, 32], strides = [1, 1]} : vector<8x34xf32> to vector<8x32xf32>
    %c0_367 = arith.constant 0 : index
    %c64_368 = arith.constant 64 : index
    %291 = vector.load %arg8[%c0_367, %c64_368] : memref<48x512xf32, #tpu.memory_space<vmem>>, vector<8x32xf32>
    tpu.vector_store %arg8[%c0_367, %c64_368], %290 {strides = array<i32>} : memref<48x512xf32, #tpu.memory_space<vmem>>, vector<8x32xf32>,
    %292 = vector.extract_strided_slice %289 {offsets = [0, 1], sizes = [8, 32], strides = [1, 1]} : vector<8x34xf32> to vector<8x32xf32>
    %c8_369 = arith.constant 8 : index
    %c64_370 = arith.constant 64 : index
    %293 = vector.load %arg8[%c8_369, %c64_370] : memref<48x512xf32, #tpu.memory_space<vmem>>, vector<8x32xf32>
    tpu.vector_store %arg8[%c8_369, %c64_370], %292 {strides = array<i32>} : memref<48x512xf32, #tpu.memory_space<vmem>>, vector<8x32xf32>,
    %294 = vector.extract_strided_slice %289 {offsets = [0, 2], sizes = [8, 32], strides = [1, 1]} : vector<8x34xf32> to vector<8x32xf32>
    %c16_371 = arith.constant 16 : index
    %c64_372 = arith.constant 64 : index
    %295 = vector.load %arg8[%c16_371, %c64_372] : memref<48x512xf32, #tpu.memory_space<vmem>>, vector<8x32xf32>
    tpu.vector_store %arg8[%c16_371, %c64_372], %294 {strides = array<i32>} : memref<48x512xf32, #tpu.memory_space<vmem>>, vector<8x32xf32>,
    %c0_373 = arith.constant 0 : index
    %c0_374 = arith.constant 0 : index
    %c4_375 = arith.constant 4 : index
    %c0_376 = arith.constant 0 : index
    %c0_377 = arith.constant 0 : index
    %296 = vector.load %arg3[%c0_373, %c0_374, %c4_375, %c0_376, %c0_377] : memref<1x1x18x8x34xf32, #tpu.memory_space<vmem>>, vector<1x1x1x8x34xf32>
    %297 = vector.shape_cast %296 : vector<1x1x1x8x34xf32> to vector<8x34xf32>
    %298 = vector.extract_strided_slice %297 {offsets = [0, 0], sizes = [8, 32], strides = [1, 1]} : vector<8x34xf32> to vector<8x32xf32>
    %c24_378 = arith.constant 24 : index
    %c64_379 = arith.constant 64 : index
    %299 = vector.load %arg8[%c24_378, %c64_379] : memref<48x512xf32, #tpu.memory_space<vmem>>, vector<8x32xf32>
    tpu.vector_store %arg8[%c24_378, %c64_379], %298 {strides = array<i32>} : memref<48x512xf32, #tpu.memory_space<vmem>>, vector<8x32xf32>,
    %300 = vector.extract_strided_slice %297 {offsets = [0, 1], sizes = [8, 32], strides = [1, 1]} : vector<8x34xf32> to vector<8x32xf32>
    %c32_380 = arith.constant 32 : index
    %c64_381 = arith.constant 64 : index
    %301 = vector.load %arg8[%c32_380, %c64_381] : memref<48x512xf32, #tpu.memory_space<vmem>>, vector<8x32xf32>
    tpu.vector_store %arg8[%c32_380, %c64_381], %300 {strides = array<i32>} : memref<48x512xf32, #tpu.memory_space<vmem>>, vector<8x32xf32>,
    %302 = vector.extract_strided_slice %297 {offsets = [0, 2], sizes = [8, 32], strides = [1, 1]} : vector<8x34xf32> to vector<8x32xf32>
    %c40_382 = arith.constant 40 : index
    %c64_383 = arith.constant 64 : index
    %303 = vector.load %arg8[%c40_382, %c64_383] : memref<48x512xf32, #tpu.memory_space<vmem>>, vector<8x32xf32>
    tpu.vector_store %arg8[%c40_382, %c64_383], %302 {strides = array<i32>} : memref<48x512xf32, #tpu.memory_space<vmem>>, vector<8x32xf32>,
    %c0_384 = arith.constant 0 : index
    %c0_385 = arith.constant 0 : index
    %c4_386 = arith.constant 4 : index
    %c0_387 = arith.constant 0 : index
    %c0_388 = arith.constant 0 : index
    %304 = vector.load %arg3[%c0_384, %c0_385, %c4_386, %c0_387, %c0_388] : memref<1x1x18x8x34xf32, #tpu.memory_space<vmem>>, vector<1x1x1x8x34xf32>
    %305 = vector.shape_cast %304 : vector<1x1x1x8x34xf32> to vector<8x34xf32>
    %306 = vector.extract_strided_slice %305 {offsets = [0, 0], sizes = [8, 32], strides = [1, 1]} : vector<8x34xf32> to vector<8x32xf32>
    %c0_389 = arith.constant 0 : index
    %c96_390 = arith.constant 96 : index
    %307 = vector.load %arg8[%c0_389, %c96_390] : memref<48x512xf32, #tpu.memory_space<vmem>>, vector<8x32xf32>
    tpu.vector_store %arg8[%c0_389, %c96_390], %306 {strides = array<i32>} : memref<48x512xf32, #tpu.memory_space<vmem>>, vector<8x32xf32>,
    %308 = vector.extract_strided_slice %305 {offsets = [0, 1], sizes = [8, 32], strides = [1, 1]} : vector<8x34xf32> to vector<8x32xf32>
    %c8_391 = arith.constant 8 : index
    %c96_392 = arith.constant 96 : index
    %309 = vector.load %arg8[%c8_391, %c96_392] : memref<48x512xf32, #tpu.memory_space<vmem>>, vector<8x32xf32>
    tpu.vector_store %arg8[%c8_391, %c96_392], %308 {strides = array<i32>} : memref<48x512xf32, #tpu.memory_space<vmem>>, vector<8x32xf32>,
    %310 = vector.extract_strided_slice %305 {offsets = [0, 2], sizes = [8, 32], strides = [1, 1]} : vector<8x34xf32> to vector<8x32xf32>
    %c16_393 = arith.constant 16 : index
    %c96_394 = arith.constant 96 : index
    %311 = vector.load %arg8[%c16_393, %c96_394] : memref<48x512xf32, #tpu.memory_space<vmem>>, vector<8x32xf32>
    tpu.vector_store %arg8[%c16_393, %c96_394], %310 {strides = array<i32>} : memref<48x512xf32, #tpu.memory_space<vmem>>, vector<8x32xf32>,
    %c0_395 = arith.constant 0 : index
    %c0_396 = arith.constant 0 : index
    %c5_397 = arith.constant 5 : index
    %c0_398 = arith.constant 0 : index
    %c0_399 = arith.constant 0 : index
    %312 = vector.load %arg3[%c0_395, %c0_396, %c5_397, %c0_398, %c0_399] : memref<1x1x18x8x34xf32, #tpu.memory_space<vmem>>, vector<1x1x1x8x34xf32>
    %313 = vector.shape_cast %312 : vector<1x1x1x8x34xf32> to vector<8x34xf32>
    %314 = vector.extract_strided_slice %313 {offsets = [0, 0], sizes = [8, 32], strides = [1, 1]} : vector<8x34xf32> to vector<8x32xf32>
    %c24_400 = arith.constant 24 : index
    %c96_401 = arith.constant 96 : index
    %315 = vector.load %arg8[%c24_400, %c96_401] : memref<48x512xf32, #tpu.memory_space<vmem>>, vector<8x32xf32>
    tpu.vector_store %arg8[%c24_400, %c96_401], %314 {strides = array<i32>} : memref<48x512xf32, #tpu.memory_space<vmem>>, vector<8x32xf32>,
    %316 = vector.extract_strided_slice %313 {offsets = [0, 1], sizes = [8, 32], strides = [1, 1]} : vector<8x34xf32> to vector<8x32xf32>
    %c32_402 = arith.constant 32 : index
    %c96_403 = arith.constant 96 : index
    %317 = vector.load %arg8[%c32_402, %c96_403] : memref<48x512xf32, #tpu.memory_space<vmem>>, vector<8x32xf32>
    tpu.vector_store %arg8[%c32_402, %c96_403], %316 {strides = array<i32>} : memref<48x512xf32, #tpu.memory_space<vmem>>, vector<8x32xf32>,
    %318 = vector.extract_strided_slice %313 {offsets = [0, 2], sizes = [8, 32], strides = [1, 1]} : vector<8x34xf32> to vector<8x32xf32>
    %c40_404 = arith.constant 40 : index
    %c96_405 = arith.constant 96 : index
    %319 = vector.load %arg8[%c40_404, %c96_405] : memref<48x512xf32, #tpu.memory_space<vmem>>, vector<8x32xf32>
    tpu.vector_store %arg8[%c40_404, %c96_405], %318 {strides = array<i32>} : memref<48x512xf32, #tpu.memory_space<vmem>>, vector<8x32xf32>,
    %c0_406 = arith.constant 0 : index
    %c0_407 = arith.constant 0 : index
    %c5_408 = arith.constant 5 : index
    %c0_409 = arith.constant 0 : index
    %c0_410 = arith.constant 0 : index
    %320 = vector.load %arg3[%c0_406, %c0_407, %c5_408, %c0_409, %c0_410] : memref<1x1x18x8x34xf32, #tpu.memory_space<vmem>>, vector<1x1x1x8x34xf32>
    %321 = vector.shape_cast %320 : vector<1x1x1x8x34xf32> to vector<8x34xf32>
    %322 = vector.extract_strided_slice %321 {offsets = [0, 0], sizes = [8, 32], strides = [1, 1]} : vector<8x34xf32> to vector<8x32xf32>
    %c0_411 = arith.constant 0 : index
    %c128_412 = arith.constant 128 : index
    %323 = vector.load %arg8[%c0_411, %c128_412] : memref<48x512xf32, #tpu.memory_space<vmem>>, vector<8x32xf32>
    tpu.vector_store %arg8[%c0_411, %c128_412], %322 {strides = array<i32>} : memref<48x512xf32, #tpu.memory_space<vmem>>, vector<8x32xf32>,
    %324 = vector.extract_strided_slice %321 {offsets = [0, 1], sizes = [8, 32], strides = [1, 1]} : vector<8x34xf32> to vector<8x32xf32>
    %c8_413 = arith.constant 8 : index
    %c128_414 = arith.constant 128 : index
    %325 = vector.load %arg8[%c8_413, %c128_414] : memref<48x512xf32, #tpu.memory_space<vmem>>, vector<8x32xf32>
    tpu.vector_store %arg8[%c8_413, %c128_414], %324 {strides = array<i32>} : memref<48x512xf32, #tpu.memory_space<vmem>>, vector<8x32xf32>,
    %326 = vector.extract_strided_slice %321 {offsets = [0, 2], sizes = [8, 32], strides = [1, 1]} : vector<8x34xf32> to vector<8x32xf32>
    %c16_415 = arith.constant 16 : index
    %c128_416 = arith.constant 128 : index
    %327 = vector.load %arg8[%c16_415, %c128_416] : memref<48x512xf32, #tpu.memory_space<vmem>>, vector<8x32xf32>
    tpu.vector_store %arg8[%c16_415, %c128_416], %326 {strides = array<i32>} : memref<48x512xf32, #tpu.memory_space<vmem>>, vector<8x32xf32>,
    %c0_417 = arith.constant 0 : index
    %c0_418 = arith.constant 0 : index
    %c6_419 = arith.constant 6 : index
    %c0_420 = arith.constant 0 : index
    %c0_421 = arith.constant 0 : index
    %328 = vector.load %arg3[%c0_417, %c0_418, %c6_419, %c0_420, %c0_421] : memref<1x1x18x8x34xf32, #tpu.memory_space<vmem>>, vector<1x1x1x8x34xf32>
    %329 = vector.shape_cast %328 : vector<1x1x1x8x34xf32> to vector<8x34xf32>
    %330 = vector.extract_strided_slice %329 {offsets = [0, 0], sizes = [8, 32], strides = [1, 1]} : vector<8x34xf32> to vector<8x32xf32>
    %c24_422 = arith.constant 24 : index
    %c128_423 = arith.constant 128 : index
    %331 = vector.load %arg8[%c24_422, %c128_423] : memref<48x512xf32, #tpu.memory_space<vmem>>, vector<8x32xf32>
    tpu.vector_store %arg8[%c24_422, %c128_423], %330 {strides = array<i32>} : memref<48x512xf32, #tpu.memory_space<vmem>>, vector<8x32xf32>,
    %332 = vector.extract_strided_slice %329 {offsets = [0, 1], sizes = [8, 32], strides = [1, 1]} : vector<8x34xf32> to vector<8x32xf32>
    %c32_424 = arith.constant 32 : index
    %c128_425 = arith.constant 128 : index
    %333 = vector.load %arg8[%c32_424, %c128_425] : memref<48x512xf32, #tpu.memory_space<vmem>>, vector<8x32xf32>
    tpu.vector_store %arg8[%c32_424, %c128_425], %332 {strides = array<i32>} : memref<48x512xf32, #tpu.memory_space<vmem>>, vector<8x32xf32>,
    %334 = vector.extract_strided_slice %329 {offsets = [0, 2], sizes = [8, 32], strides = [1, 1]} : vector<8x34xf32> to vector<8x32xf32>
    %c40_426 = arith.constant 40 : index
    %c128_427 = arith.constant 128 : index
    %335 = vector.load %arg8[%c40_426, %c128_427] : memref<48x512xf32, #tpu.memory_space<vmem>>, vector<8x32xf32>
    tpu.vector_store %arg8[%c40_426, %c128_427], %334 {strides = array<i32>} : memref<48x512xf32, #tpu.memory_space<vmem>>, vector<8x32xf32>,
    %c0_428 = arith.constant 0 : index
    %c0_429 = arith.constant 0 : index
    %c6_430 = arith.constant 6 : index
    %c0_431 = arith.constant 0 : index
    %c0_432 = arith.constant 0 : index
    %336 = vector.load %arg3[%c0_428, %c0_429, %c6_430, %c0_431, %c0_432] : memref<1x1x18x8x34xf32, #tpu.memory_space<vmem>>, vector<1x1x1x8x34xf32>
    %337 = vector.shape_cast %336 : vector<1x1x1x8x34xf32> to vector<8x34xf32>
    %338 = vector.extract_strided_slice %337 {offsets = [0, 0], sizes = [8, 32], strides = [1, 1]} : vector<8x34xf32> to vector<8x32xf32>
    %c0_433 = arith.constant 0 : index
    %c160_434 = arith.constant 160 : index
    %339 = vector.load %arg8[%c0_433, %c160_434] : memref<48x512xf32, #tpu.memory_space<vmem>>, vector<8x32xf32>
    tpu.vector_store %arg8[%c0_433, %c160_434], %338 {strides = array<i32>} : memref<48x512xf32, #tpu.memory_space<vmem>>, vector<8x32xf32>,
    %340 = vector.extract_strided_slice %337 {offsets = [0, 1], sizes = [8, 32], strides = [1, 1]} : vector<8x34xf32> to vector<8x32xf32>
    %c8_435 = arith.constant 8 : index
    %c160_436 = arith.constant 160 : index
    %341 = vector.load %arg8[%c8_435, %c160_436] : memref<48x512xf32, #tpu.memory_space<vmem>>, vector<8x32xf32>
    tpu.vector_store %arg8[%c8_435, %c160_436], %340 {strides = array<i32>} : memref<48x512xf32, #tpu.memory_space<vmem>>, vector<8x32xf32>,
    %342 = vector.extract_strided_slice %337 {offsets = [0, 2], sizes = [8, 32], strides = [1, 1]} : vector<8x34xf32> to vector<8x32xf32>
    %c16_437 = arith.constant 16 : index
    %c160_438 = arith.constant 160 : index
    %343 = vector.load %arg8[%c16_437, %c160_438] : memref<48x512xf32, #tpu.memory_space<vmem>>, vector<8x32xf32>
    tpu.vector_store %arg8[%c16_437, %c160_438], %342 {strides = array<i32>} : memref<48x512xf32, #tpu.memory_space<vmem>>, vector<8x32xf32>,
    %c0_439 = arith.constant 0 : index
    %c0_440 = arith.constant 0 : index
    %c7_441 = arith.constant 7 : index
    %c0_442 = arith.constant 0 : index
    %c0_443 = arith.constant 0 : index
    %344 = vector.load %arg3[%c0_439, %c0_440, %c7_441, %c0_442, %c0_443] : memref<1x1x18x8x34xf32, #tpu.memory_space<vmem>>, vector<1x1x1x8x34xf32>
    %345 = vector.shape_cast %344 : vector<1x1x1x8x34xf32> to vector<8x34xf32>
    %346 = vector.extract_strided_slice %345 {offsets = [0, 0], sizes = [8, 32], strides = [1, 1]} : vector<8x34xf32> to vector<8x32xf32>
    %c24_444 = arith.constant 24 : index
    %c160_445 = arith.constant 160 : index
    %347 = vector.load %arg8[%c24_444, %c160_445] : memref<48x512xf32, #tpu.memory_space<vmem>>, vector<8x32xf32>
    tpu.vector_store %arg8[%c24_444, %c160_445], %346 {strides = array<i32>} : memref<48x512xf32, #tpu.memory_space<vmem>>, vector<8x32xf32>,
    %348 = vector.extract_strided_slice %345 {offsets = [0, 1], sizes = [8, 32], strides = [1, 1]} : vector<8x34xf32> to vector<8x32xf32>
    %c32_446 = arith.constant 32 : index
    %c160_447 = arith.constant 160 : index
    %349 = vector.load %arg8[%c32_446, %c160_447] : memref<48x512xf32, #tpu.memory_space<vmem>>, vector<8x32xf32>
    tpu.vector_store %arg8[%c32_446, %c160_447], %348 {strides = array<i32>} : memref<48x512xf32, #tpu.memory_space<vmem>>, vector<8x32xf32>,
    %350 = vector.extract_strided_slice %345 {offsets = [0, 2], sizes = [8, 32], strides = [1, 1]} : vector<8x34xf32> to vector<8x32xf32>
    %c40_448 = arith.constant 40 : index
    %c160_449 = arith.constant 160 : index
    %351 = vector.load %arg8[%c40_448, %c160_449] : memref<48x512xf32, #tpu.memory_space<vmem>>, vector<8x32xf32>
    tpu.vector_store %arg8[%c40_448, %c160_449], %350 {strides = array<i32>} : memref<48x512xf32, #tpu.memory_space<vmem>>, vector<8x32xf32>,
    %c0_450 = arith.constant 0 : index
    %c0_451 = arith.constant 0 : index
    %c7_452 = arith.constant 7 : index
    %c0_453 = arith.constant 0 : index
    %c0_454 = arith.constant 0 : index
    %352 = vector.load %arg3[%c0_450, %c0_451, %c7_452, %c0_453, %c0_454] : memref<1x1x18x8x34xf32, #tpu.memory_space<vmem>>, vector<1x1x1x8x34xf32>
    %353 = vector.shape_cast %352 : vector<1x1x1x8x34xf32> to vector<8x34xf32>
    %354 = vector.extract_strided_slice %353 {offsets = [0, 0], sizes = [8, 32], strides = [1, 1]} : vector<8x34xf32> to vector<8x32xf32>
    %c0_455 = arith.constant 0 : index
    %c192_456 = arith.constant 192 : index
    %355 = vector.load %arg8[%c0_455, %c192_456] : memref<48x512xf32, #tpu.memory_space<vmem>>, vector<8x32xf32>
    tpu.vector_store %arg8[%c0_455, %c192_456], %354 {strides = array<i32>} : memref<48x512xf32, #tpu.memory_space<vmem>>, vector<8x32xf32>,
    %356 = vector.extract_strided_slice %353 {offsets = [0, 1], sizes = [8, 32], strides = [1, 1]} : vector<8x34xf32> to vector<8x32xf32>
    %c8_457 = arith.constant 8 : index
    %c192_458 = arith.constant 192 : index
    %357 = vector.load %arg8[%c8_457, %c192_458] : memref<48x512xf32, #tpu.memory_space<vmem>>, vector<8x32xf32>
    tpu.vector_store %arg8[%c8_457, %c192_458], %356 {strides = array<i32>} : memref<48x512xf32, #tpu.memory_space<vmem>>, vector<8x32xf32>,
    %358 = vector.extract_strided_slice %353 {offsets = [0, 2], sizes = [8, 32], strides = [1, 1]} : vector<8x34xf32> to vector<8x32xf32>
    %c16_459 = arith.constant 16 : index
    %c192_460 = arith.constant 192 : index
    %359 = vector.load %arg8[%c16_459, %c192_460] : memref<48x512xf32, #tpu.memory_space<vmem>>, vector<8x32xf32>
    tpu.vector_store %arg8[%c16_459, %c192_460], %358 {strides = array<i32>} : memref<48x512xf32, #tpu.memory_space<vmem>>, vector<8x32xf32>,
    %c0_461 = arith.constant 0 : index
    %c0_462 = arith.constant 0 : index
    %c8_463 = arith.constant 8 : index
    %c0_464 = arith.constant 0 : index
    %c0_465 = arith.constant 0 : index
    %360 = vector.load %arg3[%c0_461, %c0_462, %c8_463, %c0_464, %c0_465] : memref<1x1x18x8x34xf32, #tpu.memory_space<vmem>>, vector<1x1x1x8x34xf32>
    %361 = vector.shape_cast %360 : vector<1x1x1x8x34xf32> to vector<8x34xf32>
    %362 = vector.extract_strided_slice %361 {offsets = [0, 0], sizes = [8, 32], strides = [1, 1]} : vector<8x34xf32> to vector<8x32xf32>
    %c24_466 = arith.constant 24 : index
    %c192_467 = arith.constant 192 : index
    %363 = vector.load %arg8[%c24_466, %c192_467] : memref<48x512xf32, #tpu.memory_space<vmem>>, vector<8x32xf32>
    tpu.vector_store %arg8[%c24_466, %c192_467], %362 {strides = array<i32>} : memref<48x512xf32, #tpu.memory_space<vmem>>, vector<8x32xf32>,
    %364 = vector.extract_strided_slice %361 {offsets = [0, 1], sizes = [8, 32], strides = [1, 1]} : vector<8x34xf32> to vector<8x32xf32>
    %c32_468 = arith.constant 32 : index
    %c192_469 = arith.constant 192 : index
    %365 = vector.load %arg8[%c32_468, %c192_469] : memref<48x512xf32, #tpu.memory_space<vmem>>, vector<8x32xf32>
    tpu.vector_store %arg8[%c32_468, %c192_469], %364 {strides = array<i32>} : memref<48x512xf32, #tpu.memory_space<vmem>>, vector<8x32xf32>,
    %366 = vector.extract_strided_slice %361 {offsets = [0, 2], sizes = [8, 32], strides = [1, 1]} : vector<8x34xf32> to vector<8x32xf32>
    %c40_470 = arith.constant 40 : index
    %c192_471 = arith.constant 192 : index
    %367 = vector.load %arg8[%c40_470, %c192_471] : memref<48x512xf32, #tpu.memory_space<vmem>>, vector<8x32xf32>
    tpu.vector_store %arg8[%c40_470, %c192_471], %366 {strides = array<i32>} : memref<48x512xf32, #tpu.memory_space<vmem>>, vector<8x32xf32>,
    %c0_472 = arith.constant 0 : index
    %c0_473 = arith.constant 0 : index
    %c8_474 = arith.constant 8 : index
    %c0_475 = arith.constant 0 : index
    %c0_476 = arith.constant 0 : index
    %368 = vector.load %arg3[%c0_472, %c0_473, %c8_474, %c0_475, %c0_476] : memref<1x1x18x8x34xf32, #tpu.memory_space<vmem>>, vector<1x1x1x8x34xf32>
    %369 = vector.shape_cast %368 : vector<1x1x1x8x34xf32> to vector<8x34xf32>
    %370 = vector.extract_strided_slice %369 {offsets = [0, 0], sizes = [8, 32], strides = [1, 1]} : vector<8x34xf32> to vector<8x32xf32>
    %c0_477 = arith.constant 0 : index
    %c224_478 = arith.constant 224 : index
    %371 = vector.load %arg8[%c0_477, %c224_478] : memref<48x512xf32, #tpu.memory_space<vmem>>, vector<8x32xf32>
    tpu.vector_store %arg8[%c0_477, %c224_478], %370 {strides = array<i32>} : memref<48x512xf32, #tpu.memory_space<vmem>>, vector<8x32xf32>,
    %372 = vector.extract_strided_slice %369 {offsets = [0, 1], sizes = [8, 32], strides = [1, 1]} : vector<8x34xf32> to vector<8x32xf32>
    %c8_479 = arith.constant 8 : index
    %c224_480 = arith.constant 224 : index
    %373 = vector.load %arg8[%c8_479, %c224_480] : memref<48x512xf32, #tpu.memory_space<vmem>>, vector<8x32xf32>
    tpu.vector_store %arg8[%c8_479, %c224_480], %372 {strides = array<i32>} : memref<48x512xf32, #tpu.memory_space<vmem>>, vector<8x32xf32>,
    %374 = vector.extract_strided_slice %369 {offsets = [0, 2], sizes = [8, 32], strides = [1, 1]} : vector<8x34xf32> to vector<8x32xf32>
    %c16_481 = arith.constant 16 : index
    %c224_482 = arith.constant 224 : index
    %375 = vector.load %arg8[%c16_481, %c224_482] : memref<48x512xf32, #tpu.memory_space<vmem>>, vector<8x32xf32>
    tpu.vector_store %arg8[%c16_481, %c224_482], %374 {strides = array<i32>} : memref<48x512xf32, #tpu.memory_space<vmem>>, vector<8x32xf32>,
    %c0_483 = arith.constant 0 : index
    %c0_484 = arith.constant 0 : index
    %c9_485 = arith.constant 9 : index
    %c0_486 = arith.constant 0 : index
    %c0_487 = arith.constant 0 : index
    %376 = vector.load %arg3[%c0_483, %c0_484, %c9_485, %c0_486, %c0_487] : memref<1x1x18x8x34xf32, #tpu.memory_space<vmem>>, vector<1x1x1x8x34xf32>
    %377 = vector.shape_cast %376 : vector<1x1x1x8x34xf32> to vector<8x34xf32>
    %378 = vector.extract_strided_slice %377 {offsets = [0, 0], sizes = [8, 32], strides = [1, 1]} : vector<8x34xf32> to vector<8x32xf32>
    %c24_488 = arith.constant 24 : index
    %c224_489 = arith.constant 224 : index
    %379 = vector.load %arg8[%c24_488, %c224_489] : memref<48x512xf32, #tpu.memory_space<vmem>>, vector<8x32xf32>
    tpu.vector_store %arg8[%c24_488, %c224_489], %378 {strides = array<i32>} : memref<48x512xf32, #tpu.memory_space<vmem>>, vector<8x32xf32>,
    %380 = vector.extract_strided_slice %377 {offsets = [0, 1], sizes = [8, 32], strides = [1, 1]} : vector<8x34xf32> to vector<8x32xf32>
    %c32_490 = arith.constant 32 : index
    %c224_491 = arith.constant 224 : index
    %381 = vector.load %arg8[%c32_490, %c224_491] : memref<48x512xf32, #tpu.memory_space<vmem>>, vector<8x32xf32>
    tpu.vector_store %arg8[%c32_490, %c224_491], %380 {strides = array<i32>} : memref<48x512xf32, #tpu.memory_space<vmem>>, vector<8x32xf32>,
    %382 = vector.extract_strided_slice %377 {offsets = [0, 2], sizes = [8, 32], strides = [1, 1]} : vector<8x34xf32> to vector<8x32xf32>
    %c40_492 = arith.constant 40 : index
    %c224_493 = arith.constant 224 : index
    %383 = vector.load %arg8[%c40_492, %c224_493] : memref<48x512xf32, #tpu.memory_space<vmem>>, vector<8x32xf32>
    tpu.vector_store %arg8[%c40_492, %c224_493], %382 {strides = array<i32>} : memref<48x512xf32, #tpu.memory_space<vmem>>, vector<8x32xf32>,
    %c0_494 = arith.constant 0 : index
    %c0_495 = arith.constant 0 : index
    %c9_496 = arith.constant 9 : index
    %c0_497 = arith.constant 0 : index
    %c0_498 = arith.constant 0 : index
    %384 = vector.load %arg3[%c0_494, %c0_495, %c9_496, %c0_497, %c0_498] : memref<1x1x18x8x34xf32, #tpu.memory_space<vmem>>, vector<1x1x1x8x34xf32>
    %385 = vector.shape_cast %384 : vector<1x1x1x8x34xf32> to vector<8x34xf32>
    %386 = vector.extract_strided_slice %385 {offsets = [0, 0], sizes = [8, 32], strides = [1, 1]} : vector<8x34xf32> to vector<8x32xf32>
    %c0_499 = arith.constant 0 : index
    %c256_500 = arith.constant 256 : index
    %387 = vector.load %arg8[%c0_499, %c256_500] : memref<48x512xf32, #tpu.memory_space<vmem>>, vector<8x32xf32>
    tpu.vector_store %arg8[%c0_499, %c256_500], %386 {strides = array<i32>} : memref<48x512xf32, #tpu.memory_space<vmem>>, vector<8x32xf32>,
    %388 = vector.extract_strided_slice %385 {offsets = [0, 1], sizes = [8, 32], strides = [1, 1]} : vector<8x34xf32> to vector<8x32xf32>
    %c8_501 = arith.constant 8 : index
    %c256_502 = arith.constant 256 : index
    %389 = vector.load %arg8[%c8_501, %c256_502] : memref<48x512xf32, #tpu.memory_space<vmem>>, vector<8x32xf32>
    tpu.vector_store %arg8[%c8_501, %c256_502], %388 {strides = array<i32>} : memref<48x512xf32, #tpu.memory_space<vmem>>, vector<8x32xf32>,
    %390 = vector.extract_strided_slice %385 {offsets = [0, 2], sizes = [8, 32], strides = [1, 1]} : vector<8x34xf32> to vector<8x32xf32>
    %c16_503 = arith.constant 16 : index
    %c256_504 = arith.constant 256 : index
    %391 = vector.load %arg8[%c16_503, %c256_504] : memref<48x512xf32, #tpu.memory_space<vmem>>, vector<8x32xf32>
    tpu.vector_store %arg8[%c16_503, %c256_504], %390 {strides = array<i32>} : memref<48x512xf32, #tpu.memory_space<vmem>>, vector<8x32xf32>,
    %c0_505 = arith.constant 0 : index
    %c0_506 = arith.constant 0 : index
    %c10_507 = arith.constant 10 : index
    %c0_508 = arith.constant 0 : index
    %c0_509 = arith.constant 0 : index
    %392 = vector.load %arg3[%c0_505, %c0_506, %c10_507, %c0_508, %c0_509] : memref<1x1x18x8x34xf32, #tpu.memory_space<vmem>>, vector<1x1x1x8x34xf32>
    %393 = vector.shape_cast %392 : vector<1x1x1x8x34xf32> to vector<8x34xf32>
    %394 = vector.extract_strided_slice %393 {offsets = [0, 0], sizes = [8, 32], strides = [1, 1]} : vector<8x34xf32> to vector<8x32xf32>
    %c24_510 = arith.constant 24 : index
    %c256_511 = arith.constant 256 : index
    %395 = vector.load %arg8[%c24_510, %c256_511] : memref<48x512xf32, #tpu.memory_space<vmem>>, vector<8x32xf32>
    tpu.vector_store %arg8[%c24_510, %c256_511], %394 {strides = array<i32>} : memref<48x512xf32, #tpu.memory_space<vmem>>, vector<8x32xf32>,
    %396 = vector.extract_strided_slice %393 {offsets = [0, 1], sizes = [8, 32], strides = [1, 1]} : vector<8x34xf32> to vector<8x32xf32>
    %c32_512 = arith.constant 32 : index
    %c256_513 = arith.constant 256 : index
    %397 = vector.load %arg8[%c32_512, %c256_513] : memref<48x512xf32, #tpu.memory_space<vmem>>, vector<8x32xf32>
    tpu.vector_store %arg8[%c32_512, %c256_513], %396 {strides = array<i32>} : memref<48x512xf32, #tpu.memory_space<vmem>>, vector<8x32xf32>,
    %398 = vector.extract_strided_slice %393 {offsets = [0, 2], sizes = [8, 32], strides = [1, 1]} : vector<8x34xf32> to vector<8x32xf32>
    %c40_514 = arith.constant 40 : index
    %c256_515 = arith.constant 256 : index
    %399 = vector.load %arg8[%c40_514, %c256_515] : memref<48x512xf32, #tpu.memory_space<vmem>>, vector<8x32xf32>
    tpu.vector_store %arg8[%c40_514, %c256_515], %398 {strides = array<i32>} : memref<48x512xf32, #tpu.memory_space<vmem>>, vector<8x32xf32>,
    %c0_516 = arith.constant 0 : index
    %c0_517 = arith.constant 0 : index
    %c10_518 = arith.constant 10 : index
    %c0_519 = arith.constant 0 : index
    %c0_520 = arith.constant 0 : index
    %400 = vector.load %arg3[%c0_516, %c0_517, %c10_518, %c0_519, %c0_520] : memref<1x1x18x8x34xf32, #tpu.memory_space<vmem>>, vector<1x1x1x8x34xf32>
    %401 = vector.shape_cast %400 : vector<1x1x1x8x34xf32> to vector<8x34xf32>
    %402 = vector.extract_strided_slice %401 {offsets = [0, 0], sizes = [8, 32], strides = [1, 1]} : vector<8x34xf32> to vector<8x32xf32>
    %c0_521 = arith.constant 0 : index
    %c288_522 = arith.constant 288 : index
    %403 = vector.load %arg8[%c0_521, %c288_522] : memref<48x512xf32, #tpu.memory_space<vmem>>, vector<8x32xf32>
    tpu.vector_store %arg8[%c0_521, %c288_522], %402 {strides = array<i32>} : memref<48x512xf32, #tpu.memory_space<vmem>>, vector<8x32xf32>,
    %404 = vector.extract_strided_slice %401 {offsets = [0, 1], sizes = [8, 32], strides = [1, 1]} : vector<8x34xf32> to vector<8x32xf32>
    %c8_523 = arith.constant 8 : index
    %c288_524 = arith.constant 288 : index
    %405 = vector.load %arg8[%c8_523, %c288_524] : memref<48x512xf32, #tpu.memory_space<vmem>>, vector<8x32xf32>
    tpu.vector_store %arg8[%c8_523, %c288_524], %404 {strides = array<i32>} : memref<48x512xf32, #tpu.memory_space<vmem>>, vector<8x32xf32>,
    %406 = vector.extract_strided_slice %401 {offsets = [0, 2], sizes = [8, 32], strides = [1, 1]} : vector<8x34xf32> to vector<8x32xf32>
    %c16_525 = arith.constant 16 : index
    %c288_526 = arith.constant 288 : index
    %407 = vector.load %arg8[%c16_525, %c288_526] : memref<48x512xf32, #tpu.memory_space<vmem>>, vector<8x32xf32>
    tpu.vector_store %arg8[%c16_525, %c288_526], %406 {strides = array<i32>} : memref<48x512xf32, #tpu.memory_space<vmem>>, vector<8x32xf32>,
    %c0_527 = arith.constant 0 : index
    %c0_528 = arith.constant 0 : index
    %c11_529 = arith.constant 11 : index
    %c0_530 = arith.constant 0 : index
    %c0_531 = arith.constant 0 : index
    %408 = vector.load %arg3[%c0_527, %c0_528, %c11_529, %c0_530, %c0_531] : memref<1x1x18x8x34xf32, #tpu.memory_space<vmem>>, vector<1x1x1x8x34xf32>
    %409 = vector.shape_cast %408 : vector<1x1x1x8x34xf32> to vector<8x34xf32>
    %410 = vector.extract_strided_slice %409 {offsets = [0, 0], sizes = [8, 32], strides = [1, 1]} : vector<8x34xf32> to vector<8x32xf32>
    %c24_532 = arith.constant 24 : index
    %c288_533 = arith.constant 288 : index
    %411 = vector.load %arg8[%c24_532, %c288_533] : memref<48x512xf32, #tpu.memory_space<vmem>>, vector<8x32xf32>
    tpu.vector_store %arg8[%c24_532, %c288_533], %410 {strides = array<i32>} : memref<48x512xf32, #tpu.memory_space<vmem>>, vector<8x32xf32>,
    %412 = vector.extract_strided_slice %409 {offsets = [0, 1], sizes = [8, 32], strides = [1, 1]} : vector<8x34xf32> to vector<8x32xf32>
    %c32_534 = arith.constant 32 : index
    %c288_535 = arith.constant 288 : index
    %413 = vector.load %arg8[%c32_534, %c288_535] : memref<48x512xf32, #tpu.memory_space<vmem>>, vector<8x32xf32>
    tpu.vector_store %arg8[%c32_534, %c288_535], %412 {strides = array<i32>} : memref<48x512xf32, #tpu.memory_space<vmem>>, vector<8x32xf32>,
    %414 = vector.extract_strided_slice %409 {offsets = [0, 2], sizes = [8, 32], strides = [1, 1]} : vector<8x34xf32> to vector<8x32xf32>
    %c40_536 = arith.constant 40 : index
    %c288_537 = arith.constant 288 : index
    %415 = vector.load %arg8[%c40_536, %c288_537] : memref<48x512xf32, #tpu.memory_space<vmem>>, vector<8x32xf32>
    tpu.vector_store %arg8[%c40_536, %c288_537], %414 {strides = array<i32>} : memref<48x512xf32, #tpu.memory_space<vmem>>, vector<8x32xf32>,
    %c0_538 = arith.constant 0 : index
    %c0_539 = arith.constant 0 : index
    %c11_540 = arith.constant 11 : index
    %c0_541 = arith.constant 0 : index
    %c0_542 = arith.constant 0 : index
    %416 = vector.load %arg3[%c0_538, %c0_539, %c11_540, %c0_541, %c0_542] : memref<1x1x18x8x34xf32, #tpu.memory_space<vmem>>, vector<1x1x1x8x34xf32>
    %417 = vector.shape_cast %416 : vector<1x1x1x8x34xf32> to vector<8x34xf32>
    %418 = vector.extract_strided_slice %417 {offsets = [0, 0], sizes = [8, 32], strides = [1, 1]} : vector<8x34xf32> to vector<8x32xf32>
    %c0_543 = arith.constant 0 : index
    %c320_544 = arith.constant 320 : index
    %419 = vector.load %arg8[%c0_543, %c320_544] : memref<48x512xf32, #tpu.memory_space<vmem>>, vector<8x32xf32>
    tpu.vector_store %arg8[%c0_543, %c320_544], %418 {strides = array<i32>} : memref<48x512xf32, #tpu.memory_space<vmem>>, vector<8x32xf32>,
    %420 = vector.extract_strided_slice %417 {offsets = [0, 1], sizes = [8, 32], strides = [1, 1]} : vector<8x34xf32> to vector<8x32xf32>
    %c8_545 = arith.constant 8 : index
    %c320_546 = arith.constant 320 : index
    %421 = vector.load %arg8[%c8_545, %c320_546] : memref<48x512xf32, #tpu.memory_space<vmem>>, vector<8x32xf32>
    tpu.vector_store %arg8[%c8_545, %c320_546], %420 {strides = array<i32>} : memref<48x512xf32, #tpu.memory_space<vmem>>, vector<8x32xf32>,
    %422 = vector.extract_strided_slice %417 {offsets = [0, 2], sizes = [8, 32], strides = [1, 1]} : vector<8x34xf32> to vector<8x32xf32>
    %c16_547 = arith.constant 16 : index
    %c320_548 = arith.constant 320 : index
    %423 = vector.load %arg8[%c16_547, %c320_548] : memref<48x512xf32, #tpu.memory_space<vmem>>, vector<8x32xf32>
    tpu.vector_store %arg8[%c16_547, %c320_548], %422 {strides = array<i32>} : memref<48x512xf32, #tpu.memory_space<vmem>>, vector<8x32xf32>,
    %c0_549 = arith.constant 0 : index
    %c0_550 = arith.constant 0 : index
    %c12_551 = arith.constant 12 : index
    %c0_552 = arith.constant 0 : index
    %c0_553 = arith.constant 0 : index
    %424 = vector.load %arg3[%c0_549, %c0_550, %c12_551, %c0_552, %c0_553] : memref<1x1x18x8x34xf32, #tpu.memory_space<vmem>>, vector<1x1x1x8x34xf32>
    %425 = vector.shape_cast %424 : vector<1x1x1x8x34xf32> to vector<8x34xf32>
    %426 = vector.extract_strided_slice %425 {offsets = [0, 0], sizes = [8, 32], strides = [1, 1]} : vector<8x34xf32> to vector<8x32xf32>
    %c24_554 = arith.constant 24 : index
    %c320_555 = arith.constant 320 : index
    %427 = vector.load %arg8[%c24_554, %c320_555] : memref<48x512xf32, #tpu.memory_space<vmem>>, vector<8x32xf32>
    tpu.vector_store %arg8[%c24_554, %c320_555], %426 {strides = array<i32>} : memref<48x512xf32, #tpu.memory_space<vmem>>, vector<8x32xf32>,
    %428 = vector.extract_strided_slice %425 {offsets = [0, 1], sizes = [8, 32], strides = [1, 1]} : vector<8x34xf32> to vector<8x32xf32>
    %c32_556 = arith.constant 32 : index
    %c320_557 = arith.constant 320 : index
    %429 = vector.load %arg8[%c32_556, %c320_557] : memref<48x512xf32, #tpu.memory_space<vmem>>, vector<8x32xf32>
    tpu.vector_store %arg8[%c32_556, %c320_557], %428 {strides = array<i32>} : memref<48x512xf32, #tpu.memory_space<vmem>>, vector<8x32xf32>,
    %430 = vector.extract_strided_slice %425 {offsets = [0, 2], sizes = [8, 32], strides = [1, 1]} : vector<8x34xf32> to vector<8x32xf32>
    %c40_558 = arith.constant 40 : index
    %c320_559 = arith.constant 320 : index
    %431 = vector.load %arg8[%c40_558, %c320_559] : memref<48x512xf32, #tpu.memory_space<vmem>>, vector<8x32xf32>
    tpu.vector_store %arg8[%c40_558, %c320_559], %430 {strides = array<i32>} : memref<48x512xf32, #tpu.memory_space<vmem>>, vector<8x32xf32>,
    %c0_560 = arith.constant 0 : index
    %c0_561 = arith.constant 0 : index
    %c12_562 = arith.constant 12 : index
    %c0_563 = arith.constant 0 : index
    %c0_564 = arith.constant 0 : index
    %432 = vector.load %arg3[%c0_560, %c0_561, %c12_562, %c0_563, %c0_564] : memref<1x1x18x8x34xf32, #tpu.memory_space<vmem>>, vector<1x1x1x8x34xf32>
    %433 = vector.shape_cast %432 : vector<1x1x1x8x34xf32> to vector<8x34xf32>
    %434 = vector.extract_strided_slice %433 {offsets = [0, 0], sizes = [8, 32], strides = [1, 1]} : vector<8x34xf32> to vector<8x32xf32>
    %c0_565 = arith.constant 0 : index
    %c352_566 = arith.constant 352 : index
    %435 = vector.load %arg8[%c0_565, %c352_566] : memref<48x512xf32, #tpu.memory_space<vmem>>, vector<8x32xf32>
    tpu.vector_store %arg8[%c0_565, %c352_566], %434 {strides = array<i32>} : memref<48x512xf32, #tpu.memory_space<vmem>>, vector<8x32xf32>,
    %436 = vector.extract_strided_slice %433 {offsets = [0, 1], sizes = [8, 32], strides = [1, 1]} : vector<8x34xf32> to vector<8x32xf32>
    %c8_567 = arith.constant 8 : index
    %c352_568 = arith.constant 352 : index
    %437 = vector.load %arg8[%c8_567, %c352_568] : memref<48x512xf32, #tpu.memory_space<vmem>>, vector<8x32xf32>
    tpu.vector_store %arg8[%c8_567, %c352_568], %436 {strides = array<i32>} : memref<48x512xf32, #tpu.memory_space<vmem>>, vector<8x32xf32>,
    %438 = vector.extract_strided_slice %433 {offsets = [0, 2], sizes = [8, 32], strides = [1, 1]} : vector<8x34xf32> to vector<8x32xf32>
    %c16_569 = arith.constant 16 : index
    %c352_570 = arith.constant 352 : index
    %439 = vector.load %arg8[%c16_569, %c352_570] : memref<48x512xf32, #tpu.memory_space<vmem>>, vector<8x32xf32>
    tpu.vector_store %arg8[%c16_569, %c352_570], %438 {strides = array<i32>} : memref<48x512xf32, #tpu.memory_space<vmem>>, vector<8x32xf32>,
    %c0_571 = arith.constant 0 : index
    %c0_572 = arith.constant 0 : index
    %c13_573 = arith.constant 13 : index
    %c0_574 = arith.constant 0 : index
    %c0_575 = arith.constant 0 : index
    %440 = vector.load %arg3[%c0_571, %c0_572, %c13_573, %c0_574, %c0_575] : memref<1x1x18x8x34xf32, #tpu.memory_space<vmem>>, vector<1x1x1x8x34xf32>
    %441 = vector.shape_cast %440 : vector<1x1x1x8x34xf32> to vector<8x34xf32>
    %442 = vector.extract_strided_slice %441 {offsets = [0, 0], sizes = [8, 32], strides = [1, 1]} : vector<8x34xf32> to vector<8x32xf32>
    %c24_576 = arith.constant 24 : index
    %c352_577 = arith.constant 352 : index
    %443 = vector.load %arg8[%c24_576, %c352_577] : memref<48x512xf32, #tpu.memory_space<vmem>>, vector<8x32xf32>
    tpu.vector_store %arg8[%c24_576, %c352_577], %442 {strides = array<i32>} : memref<48x512xf32, #tpu.memory_space<vmem>>, vector<8x32xf32>,
    %444 = vector.extract_strided_slice %441 {offsets = [0, 1], sizes = [8, 32], strides = [1, 1]} : vector<8x34xf32> to vector<8x32xf32>
    %c32_578 = arith.constant 32 : index
    %c352_579 = arith.constant 352 : index
    %445 = vector.load %arg8[%c32_578, %c352_579] : memref<48x512xf32, #tpu.memory_space<vmem>>, vector<8x32xf32>
    tpu.vector_store %arg8[%c32_578, %c352_579], %444 {strides = array<i32>} : memref<48x512xf32, #tpu.memory_space<vmem>>, vector<8x32xf32>,
    %446 = vector.extract_strided_slice %441 {offsets = [0, 2], sizes = [8, 32], strides = [1, 1]} : vector<8x34xf32> to vector<8x32xf32>
    %c40_580 = arith.constant 40 : index
    %c352_581 = arith.constant 352 : index
    %447 = vector.load %arg8[%c40_580, %c352_581] : memref<48x512xf32, #tpu.memory_space<vmem>>, vector<8x32xf32>
    tpu.vector_store %arg8[%c40_580, %c352_581], %446 {strides = array<i32>} : memref<48x512xf32, #tpu.memory_space<vmem>>, vector<8x32xf32>,
    %c0_582 = arith.constant 0 : index
    %c0_583 = arith.constant 0 : index
    %c13_584 = arith.constant 13 : index
    %c0_585 = arith.constant 0 : index
    %c0_586 = arith.constant 0 : index
    %448 = vector.load %arg3[%c0_582, %c0_583, %c13_584, %c0_585, %c0_586] : memref<1x1x18x8x34xf32, #tpu.memory_space<vmem>>, vector<1x1x1x8x34xf32>
    %449 = vector.shape_cast %448 : vector<1x1x1x8x34xf32> to vector<8x34xf32>
    %450 = vector.extract_strided_slice %449 {offsets = [0, 0], sizes = [8, 32], strides = [1, 1]} : vector<8x34xf32> to vector<8x32xf32>
    %c0_587 = arith.constant 0 : index
    %c384_588 = arith.constant 384 : index
    %451 = vector.load %arg8[%c0_587, %c384_588] : memref<48x512xf32, #tpu.memory_space<vmem>>, vector<8x32xf32>
    tpu.vector_store %arg8[%c0_587, %c384_588], %450 {strides = array<i32>} : memref<48x512xf32, #tpu.memory_space<vmem>>, vector<8x32xf32>,
    %452 = vector.extract_strided_slice %449 {offsets = [0, 1], sizes = [8, 32], strides = [1, 1]} : vector<8x34xf32> to vector<8x32xf32>
    %c8_589 = arith.constant 8 : index
    %c384_590 = arith.constant 384 : index
    %453 = vector.load %arg8[%c8_589, %c384_590] : memref<48x512xf32, #tpu.memory_space<vmem>>, vector<8x32xf32>
    tpu.vector_store %arg8[%c8_589, %c384_590], %452 {strides = array<i32>} : memref<48x512xf32, #tpu.memory_space<vmem>>, vector<8x32xf32>,
    %454 = vector.extract_strided_slice %449 {offsets = [0, 2], sizes = [8, 32], strides = [1, 1]} : vector<8x34xf32> to vector<8x32xf32>
    %c16_591 = arith.constant 16 : index
    %c384_592 = arith.constant 384 : index
    %455 = vector.load %arg8[%c16_591, %c384_592] : memref<48x512xf32, #tpu.memory_space<vmem>>, vector<8x32xf32>
    tpu.vector_store %arg8[%c16_591, %c384_592], %454 {strides = array<i32>} : memref<48x512xf32, #tpu.memory_space<vmem>>, vector<8x32xf32>,
    %c0_593 = arith.constant 0 : index
    %c0_594 = arith.constant 0 : index
    %c14_595 = arith.constant 14 : index
    %c0_596 = arith.constant 0 : index
    %c0_597 = arith.constant 0 : index
    %456 = vector.load %arg3[%c0_593, %c0_594, %c14_595, %c0_596, %c0_597] : memref<1x1x18x8x34xf32, #tpu.memory_space<vmem>>, vector<1x1x1x8x34xf32>
    %457 = vector.shape_cast %456 : vector<1x1x1x8x34xf32> to vector<8x34xf32>
    %458 = vector.extract_strided_slice %457 {offsets = [0, 0], sizes = [8, 32], strides = [1, 1]} : vector<8x34xf32> to vector<8x32xf32>
    %c24_598 = arith.constant 24 : index
    %c384_599 = arith.constant 384 : index
    %459 = vector.load %arg8[%c24_598, %c384_599] : memref<48x512xf32, #tpu.memory_space<vmem>>, vector<8x32xf32>
    tpu.vector_store %arg8[%c24_598, %c384_599], %458 {strides = array<i32>} : memref<48x512xf32, #tpu.memory_space<vmem>>, vector<8x32xf32>,
    %460 = vector.extract_strided_slice %457 {offsets = [0, 1], sizes = [8, 32], strides = [1, 1]} : vector<8x34xf32> to vector<8x32xf32>
    %c32_600 = arith.constant 32 : index
    %c384_601 = arith.constant 384 : index
    %461 = vector.load %arg8[%c32_600, %c384_601] : memref<48x512xf32, #tpu.memory_space<vmem>>, vector<8x32xf32>
    tpu.vector_store %arg8[%c32_600, %c384_601], %460 {strides = array<i32>} : memref<48x512xf32, #tpu.memory_space<vmem>>, vector<8x32xf32>,
    %462 = vector.extract_strided_slice %457 {offsets = [0, 2], sizes = [8, 32], strides = [1, 1]} : vector<8x34xf32> to vector<8x32xf32>
    %c40_602 = arith.constant 40 : index
    %c384_603 = arith.constant 384 : index
    %463 = vector.load %arg8[%c40_602, %c384_603] : memref<48x512xf32, #tpu.memory_space<vmem>>, vector<8x32xf32>
    tpu.vector_store %arg8[%c40_602, %c384_603], %462 {strides = array<i32>} : memref<48x512xf32, #tpu.memory_space<vmem>>, vector<8x32xf32>,
    %c0_604 = arith.constant 0 : index
    %c0_605 = arith.constant 0 : index
    %c14_606 = arith.constant 14 : index
    %c0_607 = arith.constant 0 : index
    %c0_608 = arith.constant 0 : index
    %464 = vector.load %arg3[%c0_604, %c0_605, %c14_606, %c0_607, %c0_608] : memref<1x1x18x8x34xf32, #tpu.memory_space<vmem>>, vector<1x1x1x8x34xf32>
    %465 = vector.shape_cast %464 : vector<1x1x1x8x34xf32> to vector<8x34xf32>
    %466 = vector.extract_strided_slice %465 {offsets = [0, 0], sizes = [8, 32], strides = [1, 1]} : vector<8x34xf32> to vector<8x32xf32>
    %c0_609 = arith.constant 0 : index
    %c416_610 = arith.constant 416 : index
    %467 = vector.load %arg8[%c0_609, %c416_610] : memref<48x512xf32, #tpu.memory_space<vmem>>, vector<8x32xf32>
    tpu.vector_store %arg8[%c0_609, %c416_610], %466 {strides = array<i32>} : memref<48x512xf32, #tpu.memory_space<vmem>>, vector<8x32xf32>,
    %468 = vector.extract_strided_slice %465 {offsets = [0, 1], sizes = [8, 32], strides = [1, 1]} : vector<8x34xf32> to vector<8x32xf32>
    %c8_611 = arith.constant 8 : index
    %c416_612 = arith.constant 416 : index
    %469 = vector.load %arg8[%c8_611, %c416_612] : memref<48x512xf32, #tpu.memory_space<vmem>>, vector<8x32xf32>
    tpu.vector_store %arg8[%c8_611, %c416_612], %468 {strides = array<i32>} : memref<48x512xf32, #tpu.memory_space<vmem>>, vector<8x32xf32>,
    %470 = vector.extract_strided_slice %465 {offsets = [0, 2], sizes = [8, 32], strides = [1, 1]} : vector<8x34xf32> to vector<8x32xf32>
    %c16_613 = arith.constant 16 : index
    %c416_614 = arith.constant 416 : index
    %471 = vector.load %arg8[%c16_613, %c416_614] : memref<48x512xf32, #tpu.memory_space<vmem>>, vector<8x32xf32>
    tpu.vector_store %arg8[%c16_613, %c416_614], %470 {strides = array<i32>} : memref<48x512xf32, #tpu.memory_space<vmem>>, vector<8x32xf32>,
    %c0_615 = arith.constant 0 : index
    %c0_616 = arith.constant 0 : index
    %c15_617 = arith.constant 15 : index
    %c0_618 = arith.constant 0 : index
    %c0_619 = arith.constant 0 : index
    %472 = vector.load %arg3[%c0_615, %c0_616, %c15_617, %c0_618, %c0_619] : memref<1x1x18x8x34xf32, #tpu.memory_space<vmem>>, vector<1x1x1x8x34xf32>
    %473 = vector.shape_cast %472 : vector<1x1x1x8x34xf32> to vector<8x34xf32>
    %474 = vector.extract_strided_slice %473 {offsets = [0, 0], sizes = [8, 32], strides = [1, 1]} : vector<8x34xf32> to vector<8x32xf32>
    %c24_620 = arith.constant 24 : index
    %c416_621 = arith.constant 416 : index
    %475 = vector.load %arg8[%c24_620, %c416_621] : memref<48x512xf32, #tpu.memory_space<vmem>>, vector<8x32xf32>
    tpu.vector_store %arg8[%c24_620, %c416_621], %474 {strides = array<i32>} : memref<48x512xf32, #tpu.memory_space<vmem>>, vector<8x32xf32>,
    %476 = vector.extract_strided_slice %473 {offsets = [0, 1], sizes = [8, 32], strides = [1, 1]} : vector<8x34xf32> to vector<8x32xf32>
    %c32_622 = arith.constant 32 : index
    %c416_623 = arith.constant 416 : index
    %477 = vector.load %arg8[%c32_622, %c416_623] : memref<48x512xf32, #tpu.memory_space<vmem>>, vector<8x32xf32>
    tpu.vector_store %arg8[%c32_622, %c416_623], %476 {strides = array<i32>} : memref<48x512xf32, #tpu.memory_space<vmem>>, vector<8x32xf32>,
    %478 = vector.extract_strided_slice %473 {offsets = [0, 2], sizes = [8, 32], strides = [1, 1]} : vector<8x34xf32> to vector<8x32xf32>
    %c40_624 = arith.constant 40 : index
    %c416_625 = arith.constant 416 : index
    %479 = vector.load %arg8[%c40_624, %c416_625] : memref<48x512xf32, #tpu.memory_space<vmem>>, vector<8x32xf32>
    tpu.vector_store %arg8[%c40_624, %c416_625], %478 {strides = array<i32>} : memref<48x512xf32, #tpu.memory_space<vmem>>, vector<8x32xf32>,
    %c0_626 = arith.constant 0 : index
    %c0_627 = arith.constant 0 : index
    %c15_628 = arith.constant 15 : index
    %c0_629 = arith.constant 0 : index
    %c0_630 = arith.constant 0 : index
    %480 = vector.load %arg3[%c0_626, %c0_627, %c15_628, %c0_629, %c0_630] : memref<1x1x18x8x34xf32, #tpu.memory_space<vmem>>, vector<1x1x1x8x34xf32>
    %481 = vector.shape_cast %480 : vector<1x1x1x8x34xf32> to vector<8x34xf32>
    %482 = vector.extract_strided_slice %481 {offsets = [0, 0], sizes = [8, 32], strides = [1, 1]} : vector<8x34xf32> to vector<8x32xf32>
    %c0_631 = arith.constant 0 : index
    %c448_632 = arith.constant 448 : index
    %483 = vector.load %arg8[%c0_631, %c448_632] : memref<48x512xf32, #tpu.memory_space<vmem>>, vector<8x32xf32>
    tpu.vector_store %arg8[%c0_631, %c448_632], %482 {strides = array<i32>} : memref<48x512xf32, #tpu.memory_space<vmem>>, vector<8x32xf32>,
    %484 = vector.extract_strided_slice %481 {offsets = [0, 1], sizes = [8, 32], strides = [1, 1]} : vector<8x34xf32> to vector<8x32xf32>
    %c8_633 = arith.constant 8 : index
    %c448_634 = arith.constant 448 : index
    %485 = vector.load %arg8[%c8_633, %c448_634] : memref<48x512xf32, #tpu.memory_space<vmem>>, vector<8x32xf32>
    tpu.vector_store %arg8[%c8_633, %c448_634], %484 {strides = array<i32>} : memref<48x512xf32, #tpu.memory_space<vmem>>, vector<8x32xf32>,
    %486 = vector.extract_strided_slice %481 {offsets = [0, 2], sizes = [8, 32], strides = [1, 1]} : vector<8x34xf32> to vector<8x32xf32>
    %c16_635 = arith.constant 16 : index
    %c448_636 = arith.constant 448 : index
    %487 = vector.load %arg8[%c16_635, %c448_636] : memref<48x512xf32, #tpu.memory_space<vmem>>, vector<8x32xf32>
    tpu.vector_store %arg8[%c16_635, %c448_636], %486 {strides = array<i32>} : memref<48x512xf32, #tpu.memory_space<vmem>>, vector<8x32xf32>,
    %c0_637 = arith.constant 0 : index
    %c0_638 = arith.constant 0 : index
    %c16_639 = arith.constant 16 : index
    %c0_640 = arith.constant 0 : index
    %c0_641 = arith.constant 0 : index
    %488 = vector.load %arg3[%c0_637, %c0_638, %c16_639, %c0_640, %c0_641] : memref<1x1x18x8x34xf32, #tpu.memory_space<vmem>>, vector<1x1x1x8x34xf32>
    %489 = vector.shape_cast %488 : vector<1x1x1x8x34xf32> to vector<8x34xf32>
    %490 = vector.extract_strided_slice %489 {offsets = [0, 0], sizes = [8, 32], strides = [1, 1]} : vector<8x34xf32> to vector<8x32xf32>
    %c24_642 = arith.constant 24 : index
    %c448_643 = arith.constant 448 : index
    %491 = vector.load %arg8[%c24_642, %c448_643] : memref<48x512xf32, #tpu.memory_space<vmem>>, vector<8x32xf32>
    tpu.vector_store %arg8[%c24_642, %c448_643], %490 {strides = array<i32>} : memref<48x512xf32, #tpu.memory_space<vmem>>, vector<8x32xf32>,
    %492 = vector.extract_strided_slice %489 {offsets = [0, 1], sizes = [8, 32], strides = [1, 1]} : vector<8x34xf32> to vector<8x32xf32>
    %c32_644 = arith.constant 32 : index
    %c448_645 = arith.constant 448 : index
    %493 = vector.load %arg8[%c32_644, %c448_645] : memref<48x512xf32, #tpu.memory_space<vmem>>, vector<8x32xf32>
    tpu.vector_store %arg8[%c32_644, %c448_645], %492 {strides = array<i32>} : memref<48x512xf32, #tpu.memory_space<vmem>>, vector<8x32xf32>,
    %494 = vector.extract_strided_slice %489 {offsets = [0, 2], sizes = [8, 32], strides = [1, 1]} : vector<8x34xf32> to vector<8x32xf32>
    %c40_646 = arith.constant 40 : index
    %c448_647 = arith.constant 448 : index
    %495 = vector.load %arg8[%c40_646, %c448_647] : memref<48x512xf32, #tpu.memory_space<vmem>>, vector<8x32xf32>
    tpu.vector_store %arg8[%c40_646, %c448_647], %494 {strides = array<i32>} : memref<48x512xf32, #tpu.memory_space<vmem>>, vector<8x32xf32>,
    %c0_648 = arith.constant 0 : index
    %c0_649 = arith.constant 0 : index
    %c16_650 = arith.constant 16 : index
    %c0_651 = arith.constant 0 : index
    %c0_652 = arith.constant 0 : index
    %496 = vector.load %arg3[%c0_648, %c0_649, %c16_650, %c0_651, %c0_652] : memref<1x1x18x8x34xf32, #tpu.memory_space<vmem>>, vector<1x1x1x8x34xf32>
    %497 = vector.shape_cast %496 : vector<1x1x1x8x34xf32> to vector<8x34xf32>
    %498 = vector.extract_strided_slice %497 {offsets = [0, 0], sizes = [8, 32], strides = [1, 1]} : vector<8x34xf32> to vector<8x32xf32>
    %c0_653 = arith.constant 0 : index
    %c480_654 = arith.constant 480 : index
    %499 = vector.load %arg8[%c0_653, %c480_654] : memref<48x512xf32, #tpu.memory_space<vmem>>, vector<8x32xf32>
    tpu.vector_store %arg8[%c0_653, %c480_654], %498 {strides = array<i32>} : memref<48x512xf32, #tpu.memory_space<vmem>>, vector<8x32xf32>,
    %500 = vector.extract_strided_slice %497 {offsets = [0, 1], sizes = [8, 32], strides = [1, 1]} : vector<8x34xf32> to vector<8x32xf32>
    %c8_655 = arith.constant 8 : index
    %c480_656 = arith.constant 480 : index
    %501 = vector.load %arg8[%c8_655, %c480_656] : memref<48x512xf32, #tpu.memory_space<vmem>>, vector<8x32xf32>
    tpu.vector_store %arg8[%c8_655, %c480_656], %500 {strides = array<i32>} : memref<48x512xf32, #tpu.memory_space<vmem>>, vector<8x32xf32>,
    %502 = vector.extract_strided_slice %497 {offsets = [0, 2], sizes = [8, 32], strides = [1, 1]} : vector<8x34xf32> to vector<8x32xf32>
    %c16_657 = arith.constant 16 : index
    %c480_658 = arith.constant 480 : index
    %503 = vector.load %arg8[%c16_657, %c480_658] : memref<48x512xf32, #tpu.memory_space<vmem>>, vector<8x32xf32>
    tpu.vector_store %arg8[%c16_657, %c480_658], %502 {strides = array<i32>} : memref<48x512xf32, #tpu.memory_space<vmem>>, vector<8x32xf32>,
    %c0_659 = arith.constant 0 : index
    %c0_660 = arith.constant 0 : index
    %c17 = arith.constant 17 : index
    %c0_661 = arith.constant 0 : index
    %c0_662 = arith.constant 0 : index
    %504 = vector.load %arg3[%c0_659, %c0_660, %c17, %c0_661, %c0_662] : memref<1x1x18x8x34xf32, #tpu.memory_space<vmem>>, vector<1x1x1x8x34xf32>
    %505 = vector.shape_cast %504 : vector<1x1x1x8x34xf32> to vector<8x34xf32>
    %506 = vector.extract_strided_slice %505 {offsets = [0, 0], sizes = [8, 32], strides = [1, 1]} : vector<8x34xf32> to vector<8x32xf32>
    %c24_663 = arith.constant 24 : index
    %c480_664 = arith.constant 480 : index
    %507 = vector.load %arg8[%c24_663, %c480_664] : memref<48x512xf32, #tpu.memory_space<vmem>>, vector<8x32xf32>
    tpu.vector_store %arg8[%c24_663, %c480_664], %506 {strides = array<i32>} : memref<48x512xf32, #tpu.memory_space<vmem>>, vector<8x32xf32>,
    %508 = vector.extract_strided_slice %505 {offsets = [0, 1], sizes = [8, 32], strides = [1, 1]} : vector<8x34xf32> to vector<8x32xf32>
    %c32_665 = arith.constant 32 : index
    %c480_666 = arith.constant 480 : index
    %509 = vector.load %arg8[%c32_665, %c480_666] : memref<48x512xf32, #tpu.memory_space<vmem>>, vector<8x32xf32>
    tpu.vector_store %arg8[%c32_665, %c480_666], %508 {strides = array<i32>} : memref<48x512xf32, #tpu.memory_space<vmem>>, vector<8x32xf32>,
    %510 = vector.extract_strided_slice %505 {offsets = [0, 2], sizes = [8, 32], strides = [1, 1]} : vector<8x34xf32> to vector<8x32xf32>
    %c40_667 = arith.constant 40 : index
    %c480_668 = arith.constant 480 : index
    %511 = vector.load %arg8[%c40_667, %c480_668] : memref<48x512xf32, #tpu.memory_space<vmem>>, vector<8x32xf32>
    tpu.vector_store %arg8[%c40_667, %c480_668], %510 {strides = array<i32>} : memref<48x512xf32, #tpu.memory_space<vmem>>, vector<8x32xf32>,
    %c0_669 = arith.constant 0 : index
    %c0_670 = arith.constant 0 : index
    %512 = vector.load %arg5[%c0_669, %c0_670] : memref<8x1xf32, #tpu.memory_space<vmem>>, vector<8x1xf32>
    %c0_671 = arith.constant 0 : index
    %c0_672 = arith.constant 0 : index
    %c0_673 = arith.constant 0 : index
    %513 = vector.load %arg4[%c0_671, %c0_672, %c0_673] : memref<2x8x48xf32, #tpu.memory_space<vmem>>, vector<1x8x48xf32>
    %514 = vector.shape_cast %513 : vector<1x8x48xf32> to vector<8x48xf32>
    %c0_674 = arith.constant 0 : index
    %c0_675 = arith.constant 0 : index
    %515 = vector.load %arg7[%c0_674, %c0_675] : memref<48x512xf32, #tpu.memory_space<vmem>>, vector<48x512xf32>
    %cst = arith.constant dense<0.000000e+00> : vector<8x512xf32>
    %516 = tpu.matmul %514, %515, %cst {dimension_numbers = #tpu.dot_dimension_numbers<[1], [0], [0], [1], [0, 0, 1, 1], [], []>} : vector<8x48xf32>, vector<48x512xf32>, vector<8x512xf32> -> vector<8x512xf32>
    %517 = vector.broadcast %512 : vector<8x1xf32> to vector<8x512xf32>
    %518 = arith.addf %516, %517 : vector<8x512xf32>
    %519 = vector.extract_strided_slice %518 {offsets = [0, 0], sizes = [8, 32], strides = [1, 1]} : vector<8x512xf32> to vector<8x32xf32>
    %c0_676 = arith.constant 0 : index
    %c0_677 = arith.constant 0 : index
    %c0_678 = arith.constant 0 : index
    %520 = vector.load %arg6[%c0_676, %c0_677, %c0_678] : memref<1x8x1024xf32, #tpu.memory_space<vmem>>, vector<1x8x32xf32>
    %521 = vector.shape_cast %520 : vector<1x8x32xf32> to vector<8x32xf32>
    %522 = vector.shape_cast %519 : vector<8x32xf32> to vector<1x8x32xf32>
    tpu.vector_store %arg6[%c0_676, %c0_677, %c0_678], %522 {strides = array<i32>} : memref<1x8x1024xf32, #tpu.memory_space<vmem>>, vector<1x8x32xf32>,
    %523 = vector.extract_strided_slice %518 {offsets = [0, 32], sizes = [8, 32], strides = [1, 1]} : vector<8x512xf32> to vector<8x32xf32>
    %c0_679 = arith.constant 0 : index
    %c0_680 = arith.constant 0 : index
    %c64_681 = arith.constant 64 : index
    %524 = vector.load %arg6[%c0_679, %c0_680, %c64_681] : memref<1x8x1024xf32, #tpu.memory_space<vmem>>, vector<1x8x32xf32>
    %525 = vector.shape_cast %524 : vector<1x8x32xf32> to vector<8x32xf32>
    %526 = vector.shape_cast %523 : vector<8x32xf32> to vector<1x8x32xf32>
    tpu.vector_store %arg6[%c0_679, %c0_680, %c64_681], %526 {strides = array<i32>} : memref<1x8x1024xf32, #tpu.memory_space<vmem>>, vector<1x8x32xf32>,
    %527 = vector.extract_strided_slice %518 {offsets = [0, 64], sizes = [8, 32], strides = [1, 1]} : vector<8x512xf32> to vector<8x32xf32>
    %c0_682 = arith.constant 0 : index
    %c0_683 = arith.constant 0 : index
    %c128_684 = arith.constant 128 : index
    %528 = vector.load %arg6[%c0_682, %c0_683, %c128_684] : memref<1x8x1024xf32, #tpu.memory_space<vmem>>, vector<1x8x32xf32>
    %529 = vector.shape_cast %528 : vector<1x8x32xf32> to vector<8x32xf32>
    %530 = vector.shape_cast %527 : vector<8x32xf32> to vector<1x8x32xf32>
    tpu.vector_store %arg6[%c0_682, %c0_683, %c128_684], %530 {strides = array<i32>} : memref<1x8x1024xf32, #tpu.memory_space<vmem>>, vector<1x8x32xf32>,
    %531 = vector.extract_strided_slice %518 {offsets = [0, 96], sizes = [8, 32], strides = [1, 1]} : vector<8x512xf32> to vector<8x32xf32>
    %c0_685 = arith.constant 0 : index
    %c0_686 = arith.constant 0 : index
    %c192_687 = arith.constant 192 : index
    %532 = vector.load %arg6[%c0_685, %c0_686, %c192_687] : memref<1x8x1024xf32, #tpu.memory_space<vmem>>, vector<1x8x32xf32>
    %533 = vector.shape_cast %532 : vector<1x8x32xf32> to vector<8x32xf32>
    %534 = vector.shape_cast %531 : vector<8x32xf32> to vector<1x8x32xf32>
    tpu.vector_store %arg6[%c0_685, %c0_686, %c192_687], %534 {strides = array<i32>} : memref<1x8x1024xf32, #tpu.memory_space<vmem>>, vector<1x8x32xf32>,
    %535 = vector.extract_strided_slice %518 {offsets = [0, 128], sizes = [8, 32], strides = [1, 1]} : vector<8x512xf32> to vector<8x32xf32>
    %c0_688 = arith.constant 0 : index
    %c0_689 = arith.constant 0 : index
    %c256_690 = arith.constant 256 : index
    %536 = vector.load %arg6[%c0_688, %c0_689, %c256_690] : memref<1x8x1024xf32, #tpu.memory_space<vmem>>, vector<1x8x32xf32>
    %537 = vector.shape_cast %536 : vector<1x8x32xf32> to vector<8x32xf32>
    %538 = vector.shape_cast %535 : vector<8x32xf32> to vector<1x8x32xf32>
    tpu.vector_store %arg6[%c0_688, %c0_689, %c256_690], %538 {strides = array<i32>} : memref<1x8x1024xf32, #tpu.memory_space<vmem>>, vector<1x8x32xf32>,
    %539 = vector.extract_strided_slice %518 {offsets = [0, 160], sizes = [8, 32], strides = [1, 1]} : vector<8x512xf32> to vector<8x32xf32>
    %c0_691 = arith.constant 0 : index
    %c0_692 = arith.constant 0 : index
    %c320_693 = arith.constant 320 : index
    %540 = vector.load %arg6[%c0_691, %c0_692, %c320_693] : memref<1x8x1024xf32, #tpu.memory_space<vmem>>, vector<1x8x32xf32>
    %541 = vector.shape_cast %540 : vector<1x8x32xf32> to vector<8x32xf32>
    %542 = vector.shape_cast %539 : vector<8x32xf32> to vector<1x8x32xf32>
    tpu.vector_store %arg6[%c0_691, %c0_692, %c320_693], %542 {strides = array<i32>} : memref<1x8x1024xf32, #tpu.memory_space<vmem>>, vector<1x8x32xf32>,
    %543 = vector.extract_strided_slice %518 {offsets = [0, 192], sizes = [8, 32], strides = [1, 1]} : vector<8x512xf32> to vector<8x32xf32>
    %c0_694 = arith.constant 0 : index
    %c0_695 = arith.constant 0 : index
    %c384_696 = arith.constant 384 : index
    %544 = vector.load %arg6[%c0_694, %c0_695, %c384_696] : memref<1x8x1024xf32, #tpu.memory_space<vmem>>, vector<1x8x32xf32>
    %545 = vector.shape_cast %544 : vector<1x8x32xf32> to vector<8x32xf32>
    %546 = vector.shape_cast %543 : vector<8x32xf32> to vector<1x8x32xf32>
    tpu.vector_store %arg6[%c0_694, %c0_695, %c384_696], %546 {strides = array<i32>} : memref<1x8x1024xf32, #tpu.memory_space<vmem>>, vector<1x8x32xf32>,
    %547 = vector.extract_strided_slice %518 {offsets = [0, 224], sizes = [8, 32], strides = [1, 1]} : vector<8x512xf32> to vector<8x32xf32>
    %c0_697 = arith.constant 0 : index
    %c0_698 = arith.constant 0 : index
    %c448_699 = arith.constant 448 : index
    %548 = vector.load %arg6[%c0_697, %c0_698, %c448_699] : memref<1x8x1024xf32, #tpu.memory_space<vmem>>, vector<1x8x32xf32>
    %549 = vector.shape_cast %548 : vector<1x8x32xf32> to vector<8x32xf32>
    %550 = vector.shape_cast %547 : vector<8x32xf32> to vector<1x8x32xf32>
    tpu.vector_store %arg6[%c0_697, %c0_698, %c448_699], %550 {strides = array<i32>} : memref<1x8x1024xf32, #tpu.memory_space<vmem>>, vector<1x8x32xf32>,
    %551 = vector.extract_strided_slice %518 {offsets = [0, 256], sizes = [8, 32], strides = [1, 1]} : vector<8x512xf32> to vector<8x32xf32>
    %c0_700 = arith.constant 0 : index
    %c0_701 = arith.constant 0 : index
    %c512 = arith.constant 512 : index
    %552 = vector.load %arg6[%c0_700, %c0_701, %c512] : memref<1x8x1024xf32, #tpu.memory_space<vmem>>, vector<1x8x32xf32>
    %553 = vector.shape_cast %552 : vector<1x8x32xf32> to vector<8x32xf32>
    %554 = vector.shape_cast %551 : vector<8x32xf32> to vector<1x8x32xf32>
    tpu.vector_store %arg6[%c0_700, %c0_701, %c512], %554 {strides = array<i32>} : memref<1x8x1024xf32, #tpu.memory_space<vmem>>, vector<1x8x32xf32>,
    %555 = vector.extract_strided_slice %518 {offsets = [0, 288], sizes = [8, 32], strides = [1, 1]} : vector<8x512xf32> to vector<8x32xf32>
    %c0_702 = arith.constant 0 : index
    %c0_703 = arith.constant 0 : index
    %c576 = arith.constant 576 : index
    %556 = vector.load %arg6[%c0_702, %c0_703, %c576] : memref<1x8x1024xf32, #tpu.memory_space<vmem>>, vector<1x8x32xf32>
    %557 = vector.shape_cast %556 : vector<1x8x32xf32> to vector<8x32xf32>
    %558 = vector.shape_cast %555 : vector<8x32xf32> to vector<1x8x32xf32>
    tpu.vector_store %arg6[%c0_702, %c0_703, %c576], %558 {strides = array<i32>} : memref<1x8x1024xf32, #tpu.memory_space<vmem>>, vector<1x8x32xf32>,
    %559 = vector.extract_strided_slice %518 {offsets = [0, 320], sizes = [8, 32], strides = [1, 1]} : vector<8x512xf32> to vector<8x32xf32>
    %c0_704 = arith.constant 0 : index
    %c0_705 = arith.constant 0 : index
    %c640 = arith.constant 640 : index
    %560 = vector.load %arg6[%c0_704, %c0_705, %c640] : memref<1x8x1024xf32, #tpu.memory_space<vmem>>, vector<1x8x32xf32>
    %561 = vector.shape_cast %560 : vector<1x8x32xf32> to vector<8x32xf32>
    %562 = vector.shape_cast %559 : vector<8x32xf32> to vector<1x8x32xf32>
    tpu.vector_store %arg6[%c0_704, %c0_705, %c640], %562 {strides = array<i32>} : memref<1x8x1024xf32, #tpu.memory_space<vmem>>, vector<1x8x32xf32>,
    %563 = vector.extract_strided_slice %518 {offsets = [0, 352], sizes = [8, 32], strides = [1, 1]} : vector<8x512xf32> to vector<8x32xf32>
    %c0_706 = arith.constant 0 : index
    %c0_707 = arith.constant 0 : index
    %c704 = arith.constant 704 : index
    %564 = vector.load %arg6[%c0_706, %c0_707, %c704] : memref<1x8x1024xf32, #tpu.memory_space<vmem>>, vector<1x8x32xf32>
    %565 = vector.shape_cast %564 : vector<1x8x32xf32> to vector<8x32xf32>
    %566 = vector.shape_cast %563 : vector<8x32xf32> to vector<1x8x32xf32>
    tpu.vector_store %arg6[%c0_706, %c0_707, %c704], %566 {strides = array<i32>} : memref<1x8x1024xf32, #tpu.memory_space<vmem>>, vector<1x8x32xf32>,
    %567 = vector.extract_strided_slice %518 {offsets = [0, 384], sizes = [8, 32], strides = [1, 1]} : vector<8x512xf32> to vector<8x32xf32>
    %c0_708 = arith.constant 0 : index
    %c0_709 = arith.constant 0 : index
    %c768 = arith.constant 768 : index
    %568 = vector.load %arg6[%c0_708, %c0_709, %c768] : memref<1x8x1024xf32, #tpu.memory_space<vmem>>, vector<1x8x32xf32>
    %569 = vector.shape_cast %568 : vector<1x8x32xf32> to vector<8x32xf32>
    %570 = vector.shape_cast %567 : vector<8x32xf32> to vector<1x8x32xf32>
    tpu.vector_store %arg6[%c0_708, %c0_709, %c768], %570 {strides = array<i32>} : memref<1x8x1024xf32, #tpu.memory_space<vmem>>, vector<1x8x32xf32>,
    %571 = vector.extract_strided_slice %518 {offsets = [0, 416], sizes = [8, 32], strides = [1, 1]} : vector<8x512xf32> to vector<8x32xf32>
    %c0_710 = arith.constant 0 : index
    %c0_711 = arith.constant 0 : index
    %c832 = arith.constant 832 : index
    %572 = vector.load %arg6[%c0_710, %c0_711, %c832] : memref<1x8x1024xf32, #tpu.memory_space<vmem>>, vector<1x8x32xf32>
    %573 = vector.shape_cast %572 : vector<1x8x32xf32> to vector<8x32xf32>
    %574 = vector.shape_cast %571 : vector<8x32xf32> to vector<1x8x32xf32>
    tpu.vector_store %arg6[%c0_710, %c0_711, %c832], %574 {strides = array<i32>} : memref<1x8x1024xf32, #tpu.memory_space<vmem>>, vector<1x8x32xf32>,
    %575 = vector.extract_strided_slice %518 {offsets = [0, 448], sizes = [8, 32], strides = [1, 1]} : vector<8x512xf32> to vector<8x32xf32>
    %c0_712 = arith.constant 0 : index
    %c0_713 = arith.constant 0 : index
    %c896 = arith.constant 896 : index
    %576 = vector.load %arg6[%c0_712, %c0_713, %c896] : memref<1x8x1024xf32, #tpu.memory_space<vmem>>, vector<1x8x32xf32>
    %577 = vector.shape_cast %576 : vector<1x8x32xf32> to vector<8x32xf32>
    %578 = vector.shape_cast %575 : vector<8x32xf32> to vector<1x8x32xf32>
    tpu.vector_store %arg6[%c0_712, %c0_713, %c896], %578 {strides = array<i32>} : memref<1x8x1024xf32, #tpu.memory_space<vmem>>, vector<1x8x32xf32>,
    %579 = vector.extract_strided_slice %518 {offsets = [0, 480], sizes = [8, 32], strides = [1, 1]} : vector<8x512xf32> to vector<8x32xf32>
    %c0_714 = arith.constant 0 : index
    %c0_715 = arith.constant 0 : index
    %c960 = arith.constant 960 : index
    %580 = vector.load %arg6[%c0_714, %c0_715, %c960] : memref<1x8x1024xf32, #tpu.memory_space<vmem>>, vector<1x8x32xf32>
    %581 = vector.shape_cast %580 : vector<1x8x32xf32> to vector<8x32xf32>
    %582 = vector.shape_cast %579 : vector<8x32xf32> to vector<1x8x32xf32>
    tpu.vector_store %arg6[%c0_714, %c0_715, %c960], %582 {strides = array<i32>} : memref<1x8x1024xf32, #tpu.memory_space<vmem>>, vector<1x8x32xf32>,
    %c1_716 = arith.constant 1 : index
    %c0_717 = arith.constant 0 : index
    %c0_718 = arith.constant 0 : index
    %583 = vector.load %arg4[%c1_716, %c0_717, %c0_718] : memref<2x8x48xf32, #tpu.memory_space<vmem>>, vector<1x8x48xf32>
    %584 = vector.shape_cast %583 : vector<1x8x48xf32> to vector<8x48xf32>
    %c0_719 = arith.constant 0 : index
    %c0_720 = arith.constant 0 : index
    %585 = vector.load %arg8[%c0_719, %c0_720] : memref<48x512xf32, #tpu.memory_space<vmem>>, vector<48x512xf32>
    %cst_721 = arith.constant dense<0.000000e+00> : vector<8x512xf32>
    %586 = tpu.matmul %584, %585, %cst_721 {dimension_numbers = #tpu.dot_dimension_numbers<[1], [0], [0], [1], [0, 0, 1, 1], [], []>} : vector<8x48xf32>, vector<48x512xf32>, vector<8x512xf32> -> vector<8x512xf32>
    %587 = vector.broadcast %512 : vector<8x1xf32> to vector<8x512xf32>
    %588 = arith.addf %586, %587 : vector<8x512xf32>
    %589 = vector.extract_strided_slice %588 {offsets = [0, 0], sizes = [8, 32], strides = [1, 1]} : vector<8x512xf32> to vector<8x32xf32>
    %c0_722 = arith.constant 0 : index
    %c0_723 = arith.constant 0 : index
    %c32_724 = arith.constant 32 : index
    %590 = vector.load %arg6[%c0_722, %c0_723, %c32_724] : memref<1x8x1024xf32, #tpu.memory_space<vmem>>, vector<1x8x32xf32>
    %591 = vector.shape_cast %590 : vector<1x8x32xf32> to vector<8x32xf32>
    %592 = vector.shape_cast %589 : vector<8x32xf32> to vector<1x8x32xf32>
    tpu.vector_store %arg6[%c0_722, %c0_723, %c32_724], %592 {strides = array<i32>} : memref<1x8x1024xf32, #tpu.memory_space<vmem>>, vector<1x8x32xf32>,
    %593 = vector.extract_strided_slice %588 {offsets = [0, 32], sizes = [8, 32], strides = [1, 1]} : vector<8x512xf32> to vector<8x32xf32>
    %c0_725 = arith.constant 0 : index
    %c0_726 = arith.constant 0 : index
    %c96_727 = arith.constant 96 : index
    %594 = vector.load %arg6[%c0_725, %c0_726, %c96_727] : memref<1x8x1024xf32, #tpu.memory_space<vmem>>, vector<1x8x32xf32>
    %595 = vector.shape_cast %594 : vector<1x8x32xf32> to vector<8x32xf32>
    %596 = vector.shape_cast %593 : vector<8x32xf32> to vector<1x8x32xf32>
    tpu.vector_store %arg6[%c0_725, %c0_726, %c96_727], %596 {strides = array<i32>} : memref<1x8x1024xf32, #tpu.memory_space<vmem>>, vector<1x8x32xf32>,
    %597 = vector.extract_strided_slice %588 {offsets = [0, 64], sizes = [8, 32], strides = [1, 1]} : vector<8x512xf32> to vector<8x32xf32>
    %c0_728 = arith.constant 0 : index
    %c0_729 = arith.constant 0 : index
    %c160_730 = arith.constant 160 : index
    %598 = vector.load %arg6[%c0_728, %c0_729, %c160_730] : memref<1x8x1024xf32, #tpu.memory_space<vmem>>, vector<1x8x32xf32>
    %599 = vector.shape_cast %598 : vector<1x8x32xf32> to vector<8x32xf32>
    %600 = vector.shape_cast %597 : vector<8x32xf32> to vector<1x8x32xf32>
    tpu.vector_store %arg6[%c0_728, %c0_729, %c160_730], %600 {strides = array<i32>} : memref<1x8x1024xf32, #tpu.memory_space<vmem>>, vector<1x8x32xf32>,
    %601 = vector.extract_strided_slice %588 {offsets = [0, 96], sizes = [8, 32], strides = [1, 1]} : vector<8x512xf32> to vector<8x32xf32>
    %c0_731 = arith.constant 0 : index
    %c0_732 = arith.constant 0 : index
    %c224_733 = arith.constant 224 : index
    %602 = vector.load %arg6[%c0_731, %c0_732, %c224_733] : memref<1x8x1024xf32, #tpu.memory_space<vmem>>, vector<1x8x32xf32>
    %603 = vector.shape_cast %602 : vector<1x8x32xf32> to vector<8x32xf32>
    %604 = vector.shape_cast %601 : vector<8x32xf32> to vector<1x8x32xf32>
    tpu.vector_store %arg6[%c0_731, %c0_732, %c224_733], %604 {strides = array<i32>} : memref<1x8x1024xf32, #tpu.memory_space<vmem>>, vector<1x8x32xf32>,
    %605 = vector.extract_strided_slice %588 {offsets = [0, 128], sizes = [8, 32], strides = [1, 1]} : vector<8x512xf32> to vector<8x32xf32>
    %c0_734 = arith.constant 0 : index
    %c0_735 = arith.constant 0 : index
    %c288_736 = arith.constant 288 : index
    %606 = vector.load %arg6[%c0_734, %c0_735, %c288_736] : memref<1x8x1024xf32, #tpu.memory_space<vmem>>, vector<1x8x32xf32>
    %607 = vector.shape_cast %606 : vector<1x8x32xf32> to vector<8x32xf32>
    %608 = vector.shape_cast %605 : vector<8x32xf32> to vector<1x8x32xf32>
    tpu.vector_store %arg6[%c0_734, %c0_735, %c288_736], %608 {strides = array<i32>} : memref<1x8x1024xf32, #tpu.memory_space<vmem>>, vector<1x8x32xf32>,
    %609 = vector.extract_strided_slice %588 {offsets = [0, 160], sizes = [8, 32], strides = [1, 1]} : vector<8x512xf32> to vector<8x32xf32>
    %c0_737 = arith.constant 0 : index
    %c0_738 = arith.constant 0 : index
    %c352_739 = arith.constant 352 : index
    %610 = vector.load %arg6[%c0_737, %c0_738, %c352_739] : memref<1x8x1024xf32, #tpu.memory_space<vmem>>, vector<1x8x32xf32>
    %611 = vector.shape_cast %610 : vector<1x8x32xf32> to vector<8x32xf32>
    %612 = vector.shape_cast %609 : vector<8x32xf32> to vector<1x8x32xf32>
    tpu.vector_store %arg6[%c0_737, %c0_738, %c352_739], %612 {strides = array<i32>} : memref<1x8x1024xf32, #tpu.memory_space<vmem>>, vector<1x8x32xf32>,
    %613 = vector.extract_strided_slice %588 {offsets = [0, 192], sizes = [8, 32], strides = [1, 1]} : vector<8x512xf32> to vector<8x32xf32>
    %c0_740 = arith.constant 0 : index
    %c0_741 = arith.constant 0 : index
    %c416_742 = arith.constant 416 : index
    %614 = vector.load %arg6[%c0_740, %c0_741, %c416_742] : memref<1x8x1024xf32, #tpu.memory_space<vmem>>, vector<1x8x32xf32>
    %615 = vector.shape_cast %614 : vector<1x8x32xf32> to vector<8x32xf32>
    %616 = vector.shape_cast %613 : vector<8x32xf32> to vector<1x8x32xf32>
    tpu.vector_store %arg6[%c0_740, %c0_741, %c416_742], %616 {strides = array<i32>} : memref<1x8x1024xf32, #tpu.memory_space<vmem>>, vector<1x8x32xf32>,
    %617 = vector.extract_strided_slice %588 {offsets = [0, 224], sizes = [8, 32], strides = [1, 1]} : vector<8x512xf32> to vector<8x32xf32>
    %c0_743 = arith.constant 0 : index
    %c0_744 = arith.constant 0 : index
    %c480_745 = arith.constant 480 : index
    %618 = vector.load %arg6[%c0_743, %c0_744, %c480_745] : memref<1x8x1024xf32, #tpu.memory_space<vmem>>, vector<1x8x32xf32>
    %619 = vector.shape_cast %618 : vector<1x8x32xf32> to vector<8x32xf32>
    %620 = vector.shape_cast %617 : vector<8x32xf32> to vector<1x8x32xf32>
    tpu.vector_store %arg6[%c0_743, %c0_744, %c480_745], %620 {strides = array<i32>} : memref<1x8x1024xf32, #tpu.memory_space<vmem>>, vector<1x8x32xf32>,
    %621 = vector.extract_strided_slice %588 {offsets = [0, 256], sizes = [8, 32], strides = [1, 1]} : vector<8x512xf32> to vector<8x32xf32>
    %c0_746 = arith.constant 0 : index
    %c0_747 = arith.constant 0 : index
    %c544 = arith.constant 544 : index
    %622 = vector.load %arg6[%c0_746, %c0_747, %c544] : memref<1x8x1024xf32, #tpu.memory_space<vmem>>, vector<1x8x32xf32>
    %623 = vector.shape_cast %622 : vector<1x8x32xf32> to vector<8x32xf32>
    %624 = vector.shape_cast %621 : vector<8x32xf32> to vector<1x8x32xf32>
    tpu.vector_store %arg6[%c0_746, %c0_747, %c544], %624 {strides = array<i32>} : memref<1x8x1024xf32, #tpu.memory_space<vmem>>, vector<1x8x32xf32>,
    %625 = vector.extract_strided_slice %588 {offsets = [0, 288], sizes = [8, 32], strides = [1, 1]} : vector<8x512xf32> to vector<8x32xf32>
    %c0_748 = arith.constant 0 : index
    %c0_749 = arith.constant 0 : index
    %c608 = arith.constant 608 : index
    %626 = vector.load %arg6[%c0_748, %c0_749, %c608] : memref<1x8x1024xf32, #tpu.memory_space<vmem>>, vector<1x8x32xf32>
    %627 = vector.shape_cast %626 : vector<1x8x32xf32> to vector<8x32xf32>
    %628 = vector.shape_cast %625 : vector<8x32xf32> to vector<1x8x32xf32>
    tpu.vector_store %arg6[%c0_748, %c0_749, %c608], %628 {strides = array<i32>} : memref<1x8x1024xf32, #tpu.memory_space<vmem>>, vector<1x8x32xf32>,
    %629 = vector.extract_strided_slice %588 {offsets = [0, 320], sizes = [8, 32], strides = [1, 1]} : vector<8x512xf32> to vector<8x32xf32>
    %c0_750 = arith.constant 0 : index
    %c0_751 = arith.constant 0 : index
    %c672 = arith.constant 672 : index
    %630 = vector.load %arg6[%c0_750, %c0_751, %c672] : memref<1x8x1024xf32, #tpu.memory_space<vmem>>, vector<1x8x32xf32>
    %631 = vector.shape_cast %630 : vector<1x8x32xf32> to vector<8x32xf32>
    %632 = vector.shape_cast %629 : vector<8x32xf32> to vector<1x8x32xf32>
    tpu.vector_store %arg6[%c0_750, %c0_751, %c672], %632 {strides = array<i32>} : memref<1x8x1024xf32, #tpu.memory_space<vmem>>, vector<1x8x32xf32>,
    %633 = vector.extract_strided_slice %588 {offsets = [0, 352], sizes = [8, 32], strides = [1, 1]} : vector<8x512xf32> to vector<8x32xf32>
    %c0_752 = arith.constant 0 : index
    %c0_753 = arith.constant 0 : index
    %c736 = arith.constant 736 : index
    %634 = vector.load %arg6[%c0_752, %c0_753, %c736] : memref<1x8x1024xf32, #tpu.memory_space<vmem>>, vector<1x8x32xf32>
    %635 = vector.shape_cast %634 : vector<1x8x32xf32> to vector<8x32xf32>
    %636 = vector.shape_cast %633 : vector<8x32xf32> to vector<1x8x32xf32>
    tpu.vector_store %arg6[%c0_752, %c0_753, %c736], %636 {strides = array<i32>} : memref<1x8x1024xf32, #tpu.memory_space<vmem>>, vector<1x8x32xf32>,
    %637 = vector.extract_strided_slice %588 {offsets = [0, 384], sizes = [8, 32], strides = [1, 1]} : vector<8x512xf32> to vector<8x32xf32>
    %c0_754 = arith.constant 0 : index
    %c0_755 = arith.constant 0 : index
    %c800 = arith.constant 800 : index
    %638 = vector.load %arg6[%c0_754, %c0_755, %c800] : memref<1x8x1024xf32, #tpu.memory_space<vmem>>, vector<1x8x32xf32>
    %639 = vector.shape_cast %638 : vector<1x8x32xf32> to vector<8x32xf32>
    %640 = vector.shape_cast %637 : vector<8x32xf32> to vector<1x8x32xf32>
    tpu.vector_store %arg6[%c0_754, %c0_755, %c800], %640 {strides = array<i32>} : memref<1x8x1024xf32, #tpu.memory_space<vmem>>, vector<1x8x32xf32>,
    %641 = vector.extract_strided_slice %588 {offsets = [0, 416], sizes = [8, 32], strides = [1, 1]} : vector<8x512xf32> to vector<8x32xf32>
    %c0_756 = arith.constant 0 : index
    %c0_757 = arith.constant 0 : index
    %c864 = arith.constant 864 : index
    %642 = vector.load %arg6[%c0_756, %c0_757, %c864] : memref<1x8x1024xf32, #tpu.memory_space<vmem>>, vector<1x8x32xf32>
    %643 = vector.shape_cast %642 : vector<1x8x32xf32> to vector<8x32xf32>
    %644 = vector.shape_cast %641 : vector<8x32xf32> to vector<1x8x32xf32>
    tpu.vector_store %arg6[%c0_756, %c0_757, %c864], %644 {strides = array<i32>} : memref<1x8x1024xf32, #tpu.memory_space<vmem>>, vector<1x8x32xf32>,
    %645 = vector.extract_strided_slice %588 {offsets = [0, 448], sizes = [8, 32], strides = [1, 1]} : vector<8x512xf32> to vector<8x32xf32>
    %c0_758 = arith.constant 0 : index
    %c0_759 = arith.constant 0 : index
    %c928 = arith.constant 928 : index
    %646 = vector.load %arg6[%c0_758, %c0_759, %c928] : memref<1x8x1024xf32, #tpu.memory_space<vmem>>, vector<1x8x32xf32>
    %647 = vector.shape_cast %646 : vector<1x8x32xf32> to vector<8x32xf32>
    %648 = vector.shape_cast %645 : vector<8x32xf32> to vector<1x8x32xf32>
    tpu.vector_store %arg6[%c0_758, %c0_759, %c928], %648 {strides = array<i32>} : memref<1x8x1024xf32, #tpu.memory_space<vmem>>, vector<1x8x32xf32>,
    %649 = vector.extract_strided_slice %588 {offsets = [0, 480], sizes = [8, 32], strides = [1, 1]} : vector<8x512xf32> to vector<8x32xf32>
    %c0_760 = arith.constant 0 : index
    %c0_761 = arith.constant 0 : index
    %c992 = arith.constant 992 : index
    %650 = vector.load %arg6[%c0_760, %c0_761, %c992] : memref<1x8x1024xf32, #tpu.memory_space<vmem>>, vector<1x8x32xf32>
    %651 = vector.shape_cast %650 : vector<1x8x32xf32> to vector<8x32xf32>
    %652 = vector.shape_cast %649 : vector<8x32xf32> to vector<1x8x32xf32>
    tpu.vector_store %arg6[%c0_760, %c0_761, %c992], %652 {strides = array<i32>} : memref<1x8x1024xf32, #tpu.memory_space<vmem>>, vector<1x8x32xf32>,
    return
  }
  func.func @transform_0(%arg0: i32, %arg1: i32, %arg2: i32) -> (i32, i32, i32, i32, i32) {
    %c0_i32 = arith.constant 0 : i32
    %c0_i32_0 = arith.constant 0 : i32
    %c0_i32_1 = arith.constant 0 : i32
    %c0_i32_2 = arith.constant 0 : i32
    return %arg0, %arg2, %c0_i32, %c0_i32_0, %c0_i32_1 : i32, i32, i32, i32, i32
  }
  func.func @transform_1(%arg0: i32, %arg1: i32, %arg2: i32) -> (i32, i32, i32) {
    %c0_i32 = arith.constant 0 : i32
    %c0_i32_0 = arith.constant 0 : i32
    %c0_i32_1 = arith.constant 0 : i32
    return %c0_i32, %arg1, %c0_i32_0 : i32, i32, i32
  }
  func.func @transform_2(%arg0: i32, %arg1: i32, %arg2: i32) -> (i32, i32) {
    %c0_i32 = arith.constant 0 : i32
    %c0_i32_0 = arith.constant 0 : i32
    return %arg1, %c0_i32 : i32, i32
  }
  func.func @transform_3(%arg0: i32, %arg1: i32, %arg2: i32) -> (i32, i32, i32) {
    %c0_i32 = arith.constant 0 : i32
    return %arg0, %arg1, %arg2 : i32, i32, i32
  }
}

</mosaic_0001>

<llo_original>
// kernel: tpu_custom_call.1
$region0: #{tpu_custom_call.1}
  #allocation0 [shape = 'u32[]', space=smem, size = 0x4, offset = 0x4, fixed_abs, tag = 'smem constant byte address 0x4 - core index']
  #allocation1 [shape = 'u32[144,128]{1,0:T(1,128)}', space=vmem, size = 0x12000, scoped, tag = 'internal scratch']
  #allocation2 [shape = 'f32[48,512]{1,0:T(8,128)}', space=vmem, size = 0x18000, scoped, tag = 'scratch operand']
  #allocation3 [shape = 'f32[48,512]{1,0:T(8,128)}', space=vmem, size = 0x18000, scoped, tag = 'scratch operand']
  %s0 = inlined_call_operand.hbm [shape: f32[2,1,18,8,34], index: 0, kind: input, shape index: {}]
  %s1 = inlined_call_operand.hbm [shape: f32[2,8,48], index: 1, kind: input, shape index: {}]
  %s2 = inlined_call_operand.vmem [shape: f32[8,1], index: 2, kind: input, shape index: {}]
  %s3 = inlined_call_operand.hbm [shape: f32[2,8,1024], index: 3, kind: output, shape index: {}]
  %s4 = sld [smem:[#allocation0]]
  $region53: #{tpu_custom_call.1} parent=0
    _
  %s6 = ssub.s32 1, %s4
  %s7 = scalar_select 0, %s6, %s4
  $region1: #{tpu_custom_call.1} parent=0
    #allocation4 [shape = 'u8[147456]{0}', space=vmem, size = 0x24000, scoped, tag = 'input window, operand 0']
    #allocation5 [shape = 's32[2]{0}', space=sflag, size = 0x8, scoped, tag = 'scoped memory for tpu_custom_call.1']
    #allocation6 [shape = 's32[2]{0}', space=sflag, size = 0x8, scoped, tag = 'scoped memory for tpu_custom_call.1']
    #allocation7 [shape = 'u8[8192]{0}', space=vmem, size = 0x2000, scoped, tag = 'input window, operand 1, single buffered']
    #allocation8 [shape = 's32[1]{0}', space=sflag, size = 0x4, scoped, tag = 'scoped memory for tpu_custom_call.1']
    #allocation9 [shape = 'u8[65536]{0}', space=vmem, size = 0x10000, scoped, tag = 'output window, operand 0']
    %8 = vsyncpa [#allocation5], 0
    %s9 = scalar_lea.sflag [#allocation5], 1
    %10 = vsyncpa %s9, 0
    %11 = vsyncpa [#allocation8], 0
    %12 = vsyncpa [#allocation6], 0
    %s13 = scalar_lea.sflag [#allocation6], 1
    %14 = vsyncpa %s13, 0
    loop: start=0, step=1, limit=4
    $region2: #{tpu_custom_call.1} parent=1 // loop_pre_header
      _
    $region3: #{tpu_custom_call.1} parent=1 // loop_header
      %s16 = sphi 0, %s20
      %p17 = scmp.ge.s32.totalorder %s16, 4
      %s23 = sphi 0, %s42
      %s24 = sphi 0, %s38
      %s25 = sphi 0, %s34
      %s26 = sphi 0, %s23
      %s27 = sphi 0, %s24
      %s28 = sphi 0, %s25
      %s29 = sphi 0, %s26
      %s30 = sphi 0, %s27
      %s31 = sphi 0, %s28
      %s47 = sphi 0, %s49
      %s50 = sphi 0, %s47
      %s51 = sphi 0, %s50
      %s67 = sphi 0, %s51
      %s73 = sphi 0, %s75
      %s76 = sphi 0, %s73
      %s77 = sphi 0, %s76
      %s93 = sphi 0, %s77
      %s99 = sphi 0, %s101
      %s102 = sphi 0, %s99
      %s103 = sphi 0, %s102
      %s119 = sphi 0, %s103
      %s129 = sphi 0, %s131
      %s132 = sphi 0, %s129
      %s133 = sphi 0, %s132
      %s149 = sphi 0, %s133
    $region4: #{tpu_custom_call.1} parent=1 // loop_header_branch
      %19 = sbr.rel (%p17) target = $region8
    $region5: #{tpu_custom_call.1} parent=1 // loop_body
      %s21 = ssub.s32 %s16, 1
      %s22 = ssub.s32 %s16, 2
      %s32 = sadd.s32 1, %s25
      %p33 = scmp.ge.s32.totalorder %s32, 1
      %s34 = scalar_select %p33, 0, %s32
      %s35 = sadd.s32 1, %s24
      %s36 = scalar_select %p33, %s35, %s24
      %p37 = scmp.ge.s32.totalorder %s36, 1
      %s38 = scalar_select %p37, 0, %s36
      %s39 = sadd.s32 1, %s23
      %s40 = scalar_select %p37, %s39, %s23
      %p41 = scmp.ge.s32.totalorder %s40, 2
      %s42 = scalar_select %p41, 0, %s40
      %s43 = ssub.s32 %s23, %s42
      %s44 = ssub.s32 %s25, %s34
      %s45 = sor.u32 %s43, %s44
      %p46 = scmp.eq.s32.totalorder %s45, 0
      %s48 = sadd.s32 %s47, 1
      %s49 = scalar_select %p46, %s47, %s48
      %p52 = pneg %p46
      %p53 = scmp.eq.s32.totalorder %s16, 1
      %p54 = por %p52, %p53
      %p55 = scmp.ne.s32.totalorder %s47, %s50
      %p56 = scmp.eq.s32.totalorder %s16, 0
      %p57 = por %p55, %p56
      %p58 = scmp.ne.s32.totalorder %s47, %s50
      %p59 = scmp.eq.s32.totalorder %s21, 1
      %p60 = por %p58, %p59
      %p61 = scmp.ne.s32.totalorder %s50, %s51
      %p62 = scmp.eq.s32.totalorder %s21, 0
      %p63 = por %p61, %p62
      %p64 = scmp.ne.s32.totalorder %s50, %s51
      %p65 = scmp.eq.s32.totalorder %s22, 1
      %p66 = por %p64, %p65
      %p68 = scmp.ne.s32.totalorder %s51, %s67
      %p69 = scmp.eq.s32.totalorder %s22, 0
      %p70 = por %p68, %p69
      %s71 = ssub.s32 %s24, %s38
      %p72 = scmp.eq.s32.totalorder %s71, 0
      %s74 = sadd.s32 %s73, 1
      %s75 = scalar_select %p72, %s73, %s74
      %p78 = pneg %p72
      %p79 = scmp.eq.s32.totalorder %s16, 1
      %p80 = por %p78, %p79
      %p81 = scmp.ne.s32.totalorder %s73, %s76
      %p82 = scmp.eq.s32.totalorder %s16, 0
      %p83 = por %p81, %p82
      %p84 = scmp.ne.s32.totalorder %s73, %s76
      %p85 = scmp.eq.s32.totalorder %s21, 1
      %p86 = por %p84, %p85
      %p87 = scmp.ne.s32.totalorder %s76, %s77
      %p88 = scmp.eq.s32.totalorder %s21, 0
      %p89 = por %p87, %p88
      %p90 = scmp.ne.s32.totalorder %s76, %s77
      %p91 = scmp.eq.s32.totalorder %s22, 1
      %p92 = por %p90, %p91
      %p94 = scmp.ne.s32.totalorder %s77, %s93
      %p95 = scmp.eq.s32.totalorder %s22, 0
      %p96 = por %p94, %p95
      %s97 = ssub.s32 %s24, %s38
      %p98 = scmp.eq.s32.totalorder %s97, 0
      %s100 = sadd.s32 %s99, 1
      %s101 = scalar_select %p98, %s99, %s100
      %p104 = pneg %p98
      %p105 = scmp.eq.s32.totalorder %s16, 1
      %p106 = por %p104, %p105
      %p107 = scmp.ne.s32.totalorder %s99, %s102
      %p108 = scmp.eq.s32.totalorder %s16, 0
      %p109 = por %p107, %p108
      %p110 = scmp.ne.s32.totalorder %s99, %s102
      %p111 = scmp.eq.s32.totalorder %s21, 1
      %p112 = por %p110, %p111
      %p113 = scmp.ne.s32.totalorder %s102, %s103
      %p114 = scmp.eq.s32.totalorder %s21, 0
      %p115 = por %p113, %p114
      %p116 = scmp.ne.s32.totalorder %s102, %s103
      %p117 = scmp.eq.s32.totalorder %s22, 1
      %p118 = por %p116, %p117
      %p120 = scmp.ne.s32.totalorder %s103, %s119
      %p121 = scmp.eq.s32.totalorder %s22, 0
      %p122 = por %p120, %p121
      %s123 = ssub.s32 %s23, %s42
      %s124 = ssub.s32 %s24, %s38
      %s125 = sor.u32 %s123, %s124
      %s126 = ssub.s32 %s25, %s34
      %s127 = sor.u32 %s125, %s126
      %p128 = scmp.eq.s32.totalorder %s127, 0
      %s130 = sadd.s32 %s129, 1
      %s131 = scalar_select %p128, %s129, %s130
      %p134 = pneg %p128
      %p135 = scmp.eq.s32.totalorder %s16, 1
      %p136 = por %p134, %p135
      %p137 = scmp.ne.s32.totalorder %s129, %s132
      %p138 = scmp.eq.s32.totalorder %s16, 0
      %p139 = por %p137, %p138
      %p140 = scmp.ne.s32.totalorder %s129, %s132
      %p141 = scmp.eq.s32.totalorder %s21, 1
      %p142 = por %p140, %p141
      %p143 = scmp.ne.s32.totalorder %s132, %s133
      %p144 = scmp.eq.s32.totalorder %s21, 0
      %p145 = por %p143, %p144
      %p146 = scmp.ne.s32.totalorder %s132, %s133
      %p147 = scmp.eq.s32.totalorder %s22, 1
      %p148 = por %p146, %p147
      %p150 = scmp.ne.s32.totalorder %s133, %s149
      %p151 = scmp.eq.s32.totalorder %s22, 0
      %p152 = por %p150, %p151
      %p153 = scmp.le.s32.totalorder 1, %s16
      %p154 = scmp.lt.s32.totalorder %s16, 3
      %p155 = pnand %p153, %p154
      %p156 = pneg %p155
      // Predicated region
      $region9: #{tpu_custom_call.1} parent=5 // pred_check
        _
      $region10: #{tpu_custom_call.1} parent=5 // pred_check_branch
        %158 = sbr.rel (%p155) target = $region12
      $region11: #{tpu_custom_call.1} parent=5 // pred_region
        %s159 = ssub.s32 %s16, 1
        // Predicated region
        $region13: #{tpu_custom_call.1} parent=11 // pred_check
          %p160 = pneg %p89
        $region14: #{tpu_custom_call.1} parent=11 // pred_check_branch
          %162 = sbr.rel (%p160) target = $region16
        $region15: #{tpu_custom_call.1} parent=11 // pred_region
          %s164 = ssub.s32 256, 256
          %165 = vsyncadd [#allocation8], %s164
          %s166 = smul.addr %s27, 128
          %s167 = scalar_lea.hbm %s1, %s166
          %s168 = sshll.u32 [#allocation7], 4
          %s169 = int_to_ptr.vmem [resolvable:$true] %s168
          %174 = dma.hbm_to_vmem [thread:$0]  %s167, 256, %s169, [#allocation8], 128, 128, 8
        $region16: #{tpu_custom_call.1} parent=11 // pred_fallthru
          _
        // Predicated region
        $region17: #{tpu_custom_call.1} parent=11 // pred_check
          %p175 = pneg %p115
        $region18: #{tpu_custom_call.1} parent=11 // pred_check_branch
          %177 = sbr.rel (%p175) target = $region20
        $region19: #{tpu_custom_call.1} parent=11 // pred_region
          %p178 = scmp.lt.s32.totalorder %s27, 0
          %s179 = scalar_select %p178, %s27, 0
          %s180 = smul.addr %s179, 8
          %s181 = scalar_lea.vmem %s2, %s180
        $region20: #{tpu_custom_call.1} parent=11 // pred_fallthru
          _
      $region12: #{tpu_custom_call.1} parent=5 // pred_fallthru
        _
      %p182 = scmp.lt.s32.totalorder %s16, 2
      // Predicated region
      $region21: #{tpu_custom_call.1} parent=5 // pred_check
        %p183 = pneg %p182
      $region22: #{tpu_custom_call.1} parent=5 // pred_check_branch
        %185 = sbr.rel (%p183) target = $region24
      $region23: #{tpu_custom_call.1} parent=5 // pred_region
        // Predicated region
        $region25: #{tpu_custom_call.1} parent=23 // pred_check
          %p186 = pneg %p57
        $region26: #{tpu_custom_call.1} parent=23 // pred_check_branch
          %188 = sbr.rel (%p186) target = $region28
        $region27: #{tpu_custom_call.1} parent=23 // pred_region
          %s189 = sand.u32 %s47, 1
          %s190 = scalar_lea.sflag [#allocation5], %s189
          %s191 = sand.u32 %s47, 1
          %s192 = smul.addr %s191, 144
          %s193 = scalar_lea.vmem [#allocation4], %s192
          %s195 = ssub.s32 2304, 2304
          %196 = vsyncadd %s190, %s195
          %s197 = smul.addr %s25, 18
          %s198 = smul.addr %s23, 18
          %s199 = sadd.s32 %s197, %s198
          %s200 = smul.addr %s199, 128
          %s201 = scalar_lea.hbm %s0, %s200
          %s202 = sshll.u32 %s193, 4
          %s203 = int_to_ptr.vmem [resolvable:$true] %s202
          %208 = dma.hbm_to_vmem [thread:$0]  %s201, 2304, %s203, %s190, 128, 128, 8
        $region28: #{tpu_custom_call.1} parent=23 // pred_fallthru
          _
      $region24: #{tpu_custom_call.1} parent=5 // pred_fallthru
        _
      %p209 = scmp.le.s32.totalorder 1, %s16
      %p210 = scmp.lt.s32.totalorder %s16, 3
      %p211 = pnand %p209, %p210
      %p212 = pneg %p211
      // Predicated region
      $region29: #{tpu_custom_call.1} parent=5 // pred_check
        _
      $region30: #{tpu_custom_call.1} parent=5 // pred_check_branch
        %214 = sbr.rel (%p211) target = $region32
      $region31: #{tpu_custom_call.1} parent=5 // pred_region
        %s215 = ssub.s32 %s16, 1
        %s216 = sand.u32 %s50, 1
        %s217 = scalar_lea.sflag [#allocation5], %s216
        %s218 = sand.u32 %s50, 1
        %s219 = smul.addr %s218, 144
        %s220 = scalar_lea.vmem [#allocation4], %s219
        // Predicated region
        $region33: #{tpu_custom_call.1} parent=31 // pred_check
          %p221 = pneg %p63
        $region34: #{tpu_custom_call.1} parent=31 // pred_check_branch
          %223 = sbr.rel (%p221) target = $region36
        $region35: #{tpu_custom_call.1} parent=31 // pred_region
          %224 = dma.done %s217, 2304
        $region36: #{tpu_custom_call.1} parent=31 // pred_fallthru
          _
        // Predicated region
        $region37: #{tpu_custom_call.1} parent=31 // pred_check
          %p225 = pneg %p89
        $region38: #{tpu_custom_call.1} parent=31 // pred_check_branch
          %227 = sbr.rel (%p225) target = $region40
        $region39: #{tpu_custom_call.1} parent=31 // pred_region
          %228 = dma.done [#allocation8], 256
        $region40: #{tpu_custom_call.1} parent=31 // pred_fallthru
          _
        %s229 = sand.u32 %s50, 1
        %s230 = scalar_lea.sflag [#allocation5], %s229
        %s231 = sand.u32 %s50, 1
        %s232 = smul.addr %s231, 144
        %s233 = scalar_lea.vmem [#allocation4], %s232
        %p234 = pneg %p63
        %p235 = pneg %p60
        %p236 = pneg %p89
        %p237 = pneg %p86
        %p238 = scmp.lt.s32.totalorder %s27, 0
        %s239 = scalar_select %p238, %s27, 0
        %s240 = smul.addr %s239, 8
        %s241 = scalar_lea.vmem %s2, %s240
        %p242 = pneg %p115
        %p243 = pneg %p112
        %p244 = pneg %p145
        %p245 = pneg %p142
        %s246 = sand.u32 %s132, 1
        %s247 = scalar_lea.sflag [#allocation6], %s246
        %s248 = sand.u32 %s132, 1
        %s249 = smul.addr %s248, 64
        %s250 = scalar_lea.vmem [#allocation9], %s249
        %p251 = scmp.lt.s32.totalorder %s27, 0
        %s252 = scalar_select %p251, %s27, 0
        %s253 = smul.addr %s252, 8
        %s254 = scalar_lea.vmem %s2, %s253
        %s255 = smul.u32 8, %s28
        %v256 = vld [vmem:[%s220] sm:$0xff]
        %vm257 = vcmask 261120
        %258 = vst.msk [vmem:[#allocation2] sm:$0xff] %vm257, %v256
        %260 = vrot.lane.b32.xlu0 %v256, 127
        %v261 = vpop.permute.xlu0 %260
        %263 = vst.msk [vmem:[#allocation2 + $0x20] sm:$0xff] %vm257, %v261
        %264 = vrot.lane.b32.xlu0 %v256, 126
        %v265 = vpop.permute.xlu0 %264
        %267 = vst.msk [vmem:[#allocation2 + $0x40] sm:$0xff] %vm257, %v265
        %s268 = scalar_lea.vmem %s220, 8 [#allocation4]
        %v269 = vld [vmem:[%s268] sm:$0xff]
        %270 = vst.msk [vmem:[#allocation2 + $0x60] sm:$0xff] %vm257, %v269
        %272 = vrot.lane.b32.xlu0 %v269, 127
        %v273 = vpop.permute.xlu0 %272
        %275 = vst.msk [vmem:[#allocation2 + $0x80] sm:$0xff] %vm257, %v273
        %276 = vrot.lane.b32.xlu0 %v269, 126
        %v277 = vpop.permute.xlu0 %276
        %279 = vst.msk [vmem:[#allocation2 + $0xa0] sm:$0xff] %vm257, %v277
        %v280 = vld [vmem:[%s268] sm:$0xff]
        %282 = vrot.lane.b32.xlu0 %v280, 32
        %v283 = vpop.permute.xlu0 %282
        %vm285 = vcmask 523520
        %286 = vst.msk [vmem:[#allocation2] sm:$0xff] %vm285, %v283
        %287 = vrot.lane.b32.xlu0 %v280, 31
        %v288 = vpop.permute.xlu0 %287
        %290 = vst.msk [vmem:[#allocation2 + $0x20] sm:$0xff] %vm285, %v288
        %291 = vrot.lane.b32.xlu0 %v280, 30
        %v292 = vpop.permute.xlu0 %291
        %294 = vst.msk [vmem:[#allocation2 + $0x40] sm:$0xff] %vm285, %v292
        %s295 = scalar_lea.vmem %s220, 16 [#allocation4]
        %v296 = vld [vmem:[%s295] sm:$0xff]
        %298 = vrot.lane.b32.xlu0 %v296, 32
        %v299 = vpop.permute.xlu0 %298
        %301 = vst.msk [vmem:[#allocation2 + $0x60] sm:$0xff] %vm285, %v299
        %302 = vrot.lane.b32.xlu0 %v296, 31
        %v303 = vpop.permute.xlu0 %302
        %305 = vst.msk [vmem:[#allocation2 + $0x80] sm:$0xff] %vm285, %v303
        %306 = vrot.lane.b32.xlu0 %v296, 30
        %v307 = vpop.permute.xlu0 %306
        %309 = vst.msk [vmem:[#allocation2 + $0xa0] sm:$0xff] %vm285, %v307
        %v310 = vld [vmem:[%s295] sm:$0xff]
        %312 = vrot.lane.b32.xlu0 %v310, 64
        %v313 = vpop.permute.xlu0 %312
        %vm315 = vcmask 785920
        %316 = vst.msk [vmem:[#allocation2] sm:$0xff] %vm315, %v313
        %317 = vrot.lane.b32.xlu0 %v310, 63
        %v318 = vpop.permute.xlu0 %317
        %320 = vst.msk [vmem:[#allocation2 + $0x20] sm:$0xff] %vm315, %v318
        %321 = vrot.lane.b32.xlu0 %v310, 62
        %v322 = vpop.permute.xlu0 %321
        %324 = vst.msk [vmem:[#allocation2 + $0x40] sm:$0xff] %vm315, %v322
        %s325 = scalar_lea.vmem %s220, 24 [#allocation4]
        %v326 = vld [vmem:[%s325] sm:$0xff]
        %328 = vrot.lane.b32.xlu0 %v326, 64
        %v329 = vpop.permute.xlu0 %328
        %331 = vst.msk [vmem:[#allocation2 + $0x60] sm:$0xff] %vm315, %v329
        %332 = vrot.lane.b32.xlu0 %v326, 63
        %v333 = vpop.permute.xlu0 %332
        %335 = vst.msk [vmem:[#allocation2 + $0x80] sm:$0xff] %vm315, %v333
        %336 = vrot.lane.b32.xlu0 %v326, 62
        %v337 = vpop.permute.xlu0 %336
        %339 = vst.msk [vmem:[#allocation2 + $0xa0] sm:$0xff] %vm315, %v337
        %v340 = vld [vmem:[%s325] sm:$0xff]
        %342 = vrot.lane.b32.xlu0 %v340, 96
        %v343 = vpop.permute.xlu0 %342
        %vm345 = vcmask 1048320
        %346 = vst.msk [vmem:[#allocation2] sm:$0xff] %vm345, %v343
        %347 = vrot.lane.b32.xlu0 %v340, 95
        %v348 = vpop.permute.xlu0 %347
        %350 = vst.msk [vmem:[#allocation2 + $0x20] sm:$0xff] %vm345, %v348
        %351 = vrot.lane.b32.xlu0 %v340, 94
        %v352 = vpop.permute.xlu0 %351
        %354 = vst.msk [vmem:[#allocation2 + $0x40] sm:$0xff] %vm345, %v352
        %s355 = scalar_lea.vmem %s220, 32 [#allocation4]
        %v356 = vld [vmem:[%s355] sm:$0xff]
        %358 = vrot.lane.b32.xlu0 %v356, 96
        %v359 = vpop.permute.xlu0 %358
        %361 = vst.msk [vmem:[#allocation2 + $0x60] sm:$0xff] %vm345, %v359
        %362 = vrot.lane.b32.xlu0 %v356, 95
        %v363 = vpop.permute.xlu0 %362
        %365 = vst.msk [vmem:[#allocation2 + $0x80] sm:$0xff] %vm345, %v363
        %366 = vrot.lane.b32.xlu0 %v356, 94
        %v367 = vpop.permute.xlu0 %366
        %369 = vst.msk [vmem:[#allocation2 + $0xa0] sm:$0xff] %vm345, %v367
        %v370 = vld [vmem:[%s355] sm:$0xff]
        %371 = vst.msk [vmem:[#allocation2 + $0x8] sm:$0xff] %vm257, %v370
        %373 = vrot.lane.b32.xlu0 %v370, 127
        %v374 = vpop.permute.xlu0 %373
        %376 = vst.msk [vmem:[#allocation2 + $0x28] sm:$0xff] %vm257, %v374
        %377 = vrot.lane.b32.xlu0 %v370, 126
        %v378 = vpop.permute.xlu0 %377
        %380 = vst.msk [vmem:[#allocation2 + $0x48] sm:$0xff] %vm257, %v378
        %s381 = scalar_lea.vmem %s220, 40 [#allocation4]
        %v382 = vld [vmem:[%s381] sm:$0xff]
        %383 = vst.msk [vmem:[#allocation2 + $0x68] sm:$0xff] %vm257, %v382
        %385 = vrot.lane.b32.xlu0 %v382, 127
        %v386 = vpop.permute.xlu0 %385
        %388 = vst.msk [vmem:[#allocation2 + $0x88] sm:$0xff] %vm257, %v386
        %389 = vrot.lane.b32.xlu0 %v382, 126
        %v390 = vpop.permute.xlu0 %389
        %392 = vst.msk [vmem:[#allocation2 + $0xa8] sm:$0xff] %vm257, %v390
        %v393 = vld [vmem:[%s381] sm:$0xff]
        %395 = vrot.lane.b32.xlu0 %v393, 32
        %v396 = vpop.permute.xlu0 %395
        %398 = vst.msk [vmem:[#allocation2 + $0x8] sm:$0xff] %vm285, %v396
        %399 = vrot.lane.b32.xlu0 %v393, 31
        %v400 = vpop.permute.xlu0 %399
        %402 = vst.msk [vmem:[#allocation2 + $0x28] sm:$0xff] %vm285, %v400
        %403 = vrot.lane.b32.xlu0 %v393, 30
        %v404 = vpop.permute.xlu0 %403
        %406 = vst.msk [vmem:[#allocation2 + $0x48] sm:$0xff] %vm285, %v404
        %s407 = scalar_lea.vmem %s220, 48 [#allocation4]
        %v408 = vld [vmem:[%s407] sm:$0xff]
        %410 = vrot.lane.b32.xlu0 %v408, 32
        %v411 = vpop.permute.xlu0 %410
        %413 = vst.msk [vmem:[#allocation2 + $0x68] sm:$0xff] %vm285, %v411
        %414 = vrot.lane.b32.xlu0 %v408, 31
        %v415 = vpop.permute.xlu0 %414
        %417 = vst.msk [vmem:[#allocation2 + $0x88] sm:$0xff] %vm285, %v415
        %418 = vrot.lane.b32.xlu0 %v408, 30
        %v419 = vpop.permute.xlu0 %418
        %421 = vst.msk [vmem:[#allocation2 + $0xa8] sm:$0xff] %vm285, %v419
        %v422 = vld [vmem:[%s407] sm:$0xff]
        %424 = vrot.lane.b32.xlu0 %v422, 64
        %v425 = vpop.permute.xlu0 %424
        %427 = vst.msk [vmem:[#allocation2 + $0x8] sm:$0xff] %vm315, %v425
        %428 = vrot.lane.b32.xlu0 %v422, 63
        %v429 = vpop.permute.xlu0 %428
        %431 = vst.msk [vmem:[#allocation2 + $0x28] sm:$0xff] %vm315, %v429
        %432 = vrot.lane.b32.xlu0 %v422, 62
        %v433 = vpop.permute.xlu0 %432
        %435 = vst.msk [vmem:[#allocation2 + $0x48] sm:$0xff] %vm315, %v433
        %s436 = scalar_lea.vmem %s220, 56 [#allocation4]
        %v437 = vld [vmem:[%s436] sm:$0xff]
        %439 = vrot.lane.b32.xlu0 %v437, 64
        %v440 = vpop.permute.xlu0 %439
        %442 = vst.msk [vmem:[#allocation2 + $0x68] sm:$0xff] %vm315, %v440
        %443 = vrot.lane.b32.xlu0 %v437, 63
        %v444 = vpop.permute.xlu0 %443
        %446 = vst.msk [vmem:[#allocation2 + $0x88] sm:$0xff] %vm315, %v444
        %447 = vrot.lane.b32.xlu0 %v437, 62
        %v448 = vpop.permute.xlu0 %447
        %450 = vst.msk [vmem:[#allocation2 + $0xa8] sm:$0xff] %vm315, %v448
        %v451 = vld [vmem:[%s436] sm:$0xff]
        %453 = vrot.lane.b32.xlu0 %v451, 96
        %v454 = vpop.permute.xlu0 %453
        %456 = vst.msk [vmem:[#allocation2 + $0x8] sm:$0xff] %vm345, %v454
        %457 = vrot.lane.b32.xlu0 %v451, 95
        %v458 = vpop.permute.xlu0 %457
        %460 = vst.msk [vmem:[#allocation2 + $0x28] sm:$0xff] %vm345, %v458
        %461 = vrot.lane.b32.xlu0 %v451, 94
        %v462 = vpop.permute.xlu0 %461
        %464 = vst.msk [vmem:[#allocation2 + $0x48] sm:$0xff] %vm345, %v462
        %s465 = scalar_lea.vmem %s220, 64 [#allocation4]
        %v466 = vld [vmem:[%s465] sm:$0xff]
        %468 = vrot.lane.b32.xlu0 %v466, 96
        %v469 = vpop.permute.xlu0 %468
        %471 = vst.msk [vmem:[#allocation2 + $0x68] sm:$0xff] %vm345, %v469
        %472 = vrot.lane.b32.xlu0 %v466, 95
        %v473 = vpop.permute.xlu0 %472
        %475 = vst.msk [vmem:[#allocation2 + $0x88] sm:$0xff] %vm345, %v473
        %476 = vrot.lane.b32.xlu0 %v466, 94
        %v477 = vpop.permute.xlu0 %476
        %479 = vst.msk [vmem:[#allocation2 + $0xa8] sm:$0xff] %vm345, %v477
        %v480 = vld [vmem:[%s465] sm:$0xff]
        %481 = vst.msk [vmem:[#allocation2 + $0x10] sm:$0xff] %vm257, %v480
        %483 = vrot.lane.b32.xlu0 %v480, 127
        %v484 = vpop.permute.xlu0 %483
        %486 = vst.msk [vmem:[#allocation2 + $0x30] sm:$0xff] %vm257, %v484
        %487 = vrot.lane.b32.xlu0 %v480, 126
        %v488 = vpop.permute.xlu0 %487
        %490 = vst.msk [vmem:[#allocation2 + $0x50] sm:$0xff] %vm257, %v488
        %s491 = scalar_lea.vmem %s220, 72 [#allocation4]
        %v492 = vld [vmem:[%s491] sm:$0xff]
        %493 = vst.msk [vmem:[#allocation2 + $0x70] sm:$0xff] %vm257, %v492
        %495 = vrot.lane.b32.xlu0 %v492, 127
        %v496 = vpop.permute.xlu0 %495
        %498 = vst.msk [vmem:[#allocation2 + $0x90] sm:$0xff] %vm257, %v496
        %499 = vrot.lane.b32.xlu0 %v492, 126
        %v500 = vpop.permute.xlu0 %499
        %502 = vst.msk [vmem:[#allocation2 + $0xb0] sm:$0xff] %vm257, %v500
        %v503 = vld [vmem:[%s491] sm:$0xff]
        %505 = vrot.lane.b32.xlu0 %v503, 32
        %v506 = vpop.permute.xlu0 %505
        %508 = vst.msk [vmem:[#allocation2 + $0x10] sm:$0xff] %vm285, %v506
        %509 = vrot.lane.b32.xlu0 %v503, 31
        %v510 = vpop.permute.xlu0 %509
        %512 = vst.msk [vmem:[#allocation2 + $0x30] sm:$0xff] %vm285, %v510
        %513 = vrot.lane.b32.xlu0 %v503, 30
        %v514 = vpop.permute.xlu0 %513
        %516 = vst.msk [vmem:[#allocation2 + $0x50] sm:$0xff] %vm285, %v514
        %s517 = scalar_lea.vmem %s220, 80 [#allocation4]
        %v518 = vld [vmem:[%s517] sm:$0xff]
        %520 = vrot.lane.b32.xlu0 %v518, 32
        %v521 = vpop.permute.xlu0 %520
        %523 = vst.msk [vmem:[#allocation2 + $0x70] sm:$0xff] %vm285, %v521
        %524 = vrot.lane.b32.xlu0 %v518, 31
        %v525 = vpop.permute.xlu0 %524
        %527 = vst.msk [vmem:[#allocation2 + $0x90] sm:$0xff] %vm285, %v525
        %528 = vrot.lane.b32.xlu0 %v518, 30
        %v529 = vpop.permute.xlu0 %528
        %531 = vst.msk [vmem:[#allocation2 + $0xb0] sm:$0xff] %vm285, %v529
        %v532 = vld [vmem:[%s517] sm:$0xff]
        %534 = vrot.lane.b32.xlu0 %v532, 64
        %v535 = vpop.permute.xlu0 %534
        %537 = vst.msk [vmem:[#allocation2 + $0x10] sm:$0xff] %vm315, %v535
        %538 = vrot.lane.b32.xlu0 %v532, 63
        %v539 = vpop.permute.xlu0 %538
        %541 = vst.msk [vmem:[#allocation2 + $0x30] sm:$0xff] %vm315, %v539
        %542 = vrot.lane.b32.xlu0 %v532, 62
        %v543 = vpop.permute.xlu0 %542
        %545 = vst.msk [vmem:[#allocation2 + $0x50] sm:$0xff] %vm315, %v543
        %s546 = scalar_lea.vmem %s220, 88 [#allocation4]
        %v547 = vld [vmem:[%s546] sm:$0xff]
        %549 = vrot.lane.b32.xlu0 %v547, 64
        %v550 = vpop.permute.xlu0 %549
        %552 = vst.msk [vmem:[#allocation2 + $0x70] sm:$0xff] %vm315, %v550
        %553 = vrot.lane.b32.xlu0 %v547, 63
        %v554 = vpop.permute.xlu0 %553
        %556 = vst.msk [vmem:[#allocation2 + $0x90] sm:$0xff] %vm315, %v554
        %557 = vrot.lane.b32.xlu0 %v547, 62
        %v558 = vpop.permute.xlu0 %557
        %560 = vst.msk [vmem:[#allocation2 + $0xb0] sm:$0xff] %vm315, %v558
        %v561 = vld [vmem:[%s546] sm:$0xff]
        %563 = vrot.lane.b32.xlu0 %v561, 96
        %v564 = vpop.permute.xlu0 %563
        %566 = vst.msk [vmem:[#allocation2 + $0x10] sm:$0xff] %vm345, %v564
        %567 = vrot.lane.b32.xlu0 %v561, 95
        %v568 = vpop.permute.xlu0 %567
        %570 = vst.msk [vmem:[#allocation2 + $0x30] sm:$0xff] %vm345, %v568
        %571 = vrot.lane.b32.xlu0 %v561, 94
        %v572 = vpop.permute.xlu0 %571
        %574 = vst.msk [vmem:[#allocation2 + $0x50] sm:$0xff] %vm345, %v572
        %s575 = scalar_lea.vmem %s220, 96 [#allocation4]
        %v576 = vld [vmem:[%s575] sm:$0xff]
        %578 = vrot.lane.b32.xlu0 %v576, 96
        %v579 = vpop.permute.xlu0 %578
        %581 = vst.msk [vmem:[#allocation2 + $0x70] sm:$0xff] %vm345, %v579
        %582 = vrot.lane.b32.xlu0 %v576, 95
        %v583 = vpop.permute.xlu0 %582
        %585 = vst.msk [vmem:[#allocation2 + $0x90] sm:$0xff] %vm345, %v583
        %586 = vrot.lane.b32.xlu0 %v576, 94
        %v587 = vpop.permute.xlu0 %586
        %589 = vst.msk [vmem:[#allocation2 + $0xb0] sm:$0xff] %vm345, %v587
        %v590 = vld [vmem:[%s575] sm:$0xff]
        %591 = vst.msk [vmem:[#allocation2 + $0x18] sm:$0xff] %vm257, %v590
        %593 = vrot.lane.b32.xlu0 %v590, 127
        %v594 = vpop.permute.xlu0 %593
        %596 = vst.msk [vmem:[#allocation2 + $0x38] sm:$0xff] %vm257, %v594
        %597 = vrot.lane.b32.xlu0 %v590, 126
        %v598 = vpop.permute.xlu0 %597
        %600 = vst.msk [vmem:[#allocation2 + $0x58] sm:$0xff] %vm257, %v598
        %s601 = scalar_lea.vmem %s220, 104 [#allocation4]
        %v602 = vld [vmem:[%s601] sm:$0xff]
        %603 = vst.msk [vmem:[#allocation2 + $0x78] sm:$0xff] %vm257, %v602
        %605 = vrot.lane.b32.xlu0 %v602, 127
        %v606 = vpop.permute.xlu0 %605
        %608 = vst.msk [vmem:[#allocation2 + $0x98] sm:$0xff] %vm257, %v606
        %609 = vrot.lane.b32.xlu0 %v602, 126
        %v610 = vpop.permute.xlu0 %609
        %612 = vst.msk [vmem:[#allocation2 + $0xb8] sm:$0xff] %vm257, %v610
        %v613 = vld [vmem:[%s601] sm:$0xff]
        %615 = vrot.lane.b32.xlu0 %v613, 32
        %v616 = vpop.permute.xlu0 %615
        %618 = vst.msk [vmem:[#allocation2 + $0x18] sm:$0xff] %vm285, %v616
        %619 = vrot.lane.b32.xlu0 %v613, 31
        %v620 = vpop.permute.xlu0 %619
        %622 = vst.msk [vmem:[#allocation2 + $0x38] sm:$0xff] %vm285, %v620
        %623 = vrot.lane.b32.xlu0 %v613, 30
        %v624 = vpop.permute.xlu0 %623
        %626 = vst.msk [vmem:[#allocation2 + $0x58] sm:$0xff] %vm285, %v624
        %s627 = scalar_lea.vmem %s220, 112 [#allocation4]
        %v628 = vld [vmem:[%s627] sm:$0xff]
        %630 = vrot.lane.b32.xlu0 %v628, 32
        %v631 = vpop.permute.xlu0 %630
        %633 = vst.msk [vmem:[#allocation2 + $0x78] sm:$0xff] %vm285, %v631
        %634 = vrot.lane.b32.xlu0 %v628, 31
        %v635 = vpop.permute.xlu0 %634
        %637 = vst.msk [vmem:[#allocation2 + $0x98] sm:$0xff] %vm285, %v635
        %638 = vrot.lane.b32.xlu0 %v628, 30
        %v639 = vpop.permute.xlu0 %638
        %641 = vst.msk [vmem:[#allocation2 + $0xb8] sm:$0xff] %vm285, %v639
        %v642 = vld [vmem:[%s627] sm:$0xff]
        %644 = vrot.lane.b32.xlu0 %v642, 64
        %v645 = vpop.permute.xlu0 %644
        %647 = vst.msk [vmem:[#allocation2 + $0x18] sm:$0xff] %vm315, %v645
        %648 = vrot.lane.b32.xlu0 %v642, 63
        %v649 = vpop.permute.xlu0 %648
        %651 = vst.msk [vmem:[#allocation2 + $0x38] sm:$0xff] %vm315, %v649
        %652 = vrot.lane.b32.xlu0 %v642, 62
        %v653 = vpop.permute.xlu0 %652
        %655 = vst.msk [vmem:[#allocation2 + $0x58] sm:$0xff] %vm315, %v653
        %s656 = scalar_lea.vmem %s220, 120 [#allocation4]
        %v657 = vld [vmem:[%s656] sm:$0xff]
        %659 = vrot.lane.b32.xlu0 %v657, 64
        %v660 = vpop.permute.xlu0 %659
        %662 = vst.msk [vmem:[#allocation2 + $0x78] sm:$0xff] %vm315, %v660
        %663 = vrot.lane.b32.xlu0 %v657, 63
        %v664 = vpop.permute.xlu0 %663
        %666 = vst.msk [vmem:[#allocation2 + $0x98] sm:$0xff] %vm315, %v664
        %667 = vrot.lane.b32.xlu0 %v657, 62
        %v668 = vpop.permute.xlu0 %667
        %670 = vst.msk [vmem:[#allocation2 + $0xb8] sm:$0xff] %vm315, %v668
        %v671 = vld [vmem:[%s656] sm:$0xff]
        %673 = vrot.lane.b32.xlu0 %v671, 96
        %v674 = vpop.permute.xlu0 %673
        %676 = vst.msk [vmem:[#allocation2 + $0x18] sm:$0xff] %vm345, %v674
        %677 = vrot.lane.b32.xlu0 %v671, 95
        %v678 = vpop.permute.xlu0 %677
        %680 = vst.msk [vmem:[#allocation2 + $0x38] sm:$0xff] %vm345, %v678
        %681 = vrot.lane.b32.xlu0 %v671, 94
        %v682 = vpop.permute.xlu0 %681
        %684 = vst.msk [vmem:[#allocation2 + $0x58] sm:$0xff] %vm345, %v682
        %s685 = scalar_lea.vmem %s220, 128 [#allocation4]
        %v686 = vld [vmem:[%s685] sm:$0xff]
        %688 = vrot.lane.b32.xlu0 %v686, 96
        %v689 = vpop.permute.xlu0 %688
        %691 = vst.msk [vmem:[#allocation2 + $0x78] sm:$0xff] %vm345, %v689
        %692 = vrot.lane.b32.xlu0 %v686, 95
        %v693 = vpop.permute.xlu0 %692
        %695 = vst.msk [vmem:[#allocation2 + $0x98] sm:$0xff] %vm345, %v693
        %696 = vrot.lane.b32.xlu0 %v686, 94
        %v697 = vpop.permute.xlu0 %696
        %699 = vst.msk [vmem:[#allocation2 + $0xb8] sm:$0xff] %vm345, %v697
        %v700 = vld [vmem:[%s268] sm:$0xff]
        %701 = vst.msk [vmem:[#allocation3] sm:$0xff] %vm257, %v700
        %703 = vrot.lane.b32.xlu0 %v700, 127
        %v704 = vpop.permute.xlu0 %703
        %706 = vst.msk [vmem:[#allocation3 + $0x20] sm:$0xff] %vm257, %v704
        %707 = vrot.lane.b32.xlu0 %v700, 126
        %v708 = vpop.permute.xlu0 %707
        %710 = vst.msk [vmem:[#allocation3 + $0x40] sm:$0xff] %vm257, %v708
        %v711 = vld [vmem:[%s295] sm:$0xff]
        %712 = vst.msk [vmem:[#allocation3 + $0x60] sm:$0xff] %vm257, %v711
        %714 = vrot.lane.b32.xlu0 %v711, 127
        %v715 = vpop.permute.xlu0 %714
        %717 = vst.msk [vmem:[#allocation3 + $0x80] sm:$0xff] %vm257, %v715
        %718 = vrot.lane.b32.xlu0 %v711, 126
        %v719 = vpop.permute.xlu0 %718
        %721 = vst.msk [vmem:[#allocation3 + $0xa0] sm:$0xff] %vm257, %v719
        %v722 = vld [vmem:[%s295] sm:$0xff]
        %724 = vrot.lane.b32.xlu0 %v722, 32
        %v725 = vpop.permute.xlu0 %724
        %727 = vst.msk [vmem:[#allocation3] sm:$0xff] %vm285, %v725
        %728 = vrot.lane.b32.xlu0 %v722, 31
        %v729 = vpop.permute.xlu0 %728
        %731 = vst.msk [vmem:[#allocation3 + $0x20] sm:$0xff] %vm285, %v729
        %732 = vrot.lane.b32.xlu0 %v722, 30
        %v733 = vpop.permute.xlu0 %732
        %735 = vst.msk [vmem:[#allocation3 + $0x40] sm:$0xff] %vm285, %v733
        %v736 = vld [vmem:[%s325] sm:$0xff]
        %738 = vrot.lane.b32.xlu0 %v736, 32
        %v739 = vpop.permute.xlu0 %738
        %741 = vst.msk [vmem:[#allocation3 + $0x60] sm:$0xff] %vm285, %v739
        %742 = vrot.lane.b32.xlu0 %v736, 31
        %v743 = vpop.permute.xlu0 %742
        %745 = vst.msk [vmem:[#allocation3 + $0x80] sm:$0xff] %vm285, %v743
        %746 = vrot.lane.b32.xlu0 %v736, 30
        %v747 = vpop.permute.xlu0 %746
        %749 = vst.msk [vmem:[#allocation3 + $0xa0] sm:$0xff] %vm285, %v747
        %v750 = vld [vmem:[%s325] sm:$0xff]
        %752 = vrot.lane.b32.xlu0 %v750, 64
        %v753 = vpop.permute.xlu0 %752
        %755 = vst.msk [vmem:[#allocation3] sm:$0xff] %vm315, %v753
        %756 = vrot.lane.b32.xlu0 %v750, 63
        %v757 = vpop.permute.xlu0 %756
        %759 = vst.msk [vmem:[#allocation3 + $0x20] sm:$0xff] %vm315, %v757
        %760 = vrot.lane.b32.xlu0 %v750, 62
        %v761 = vpop.permute.xlu0 %760
        %763 = vst.msk [vmem:[#allocation3 + $0x40] sm:$0xff] %vm315, %v761
        %v764 = vld [vmem:[%s355] sm:$0xff]
        %766 = vrot.lane.b32.xlu0 %v764, 64
        %v767 = vpop.permute.xlu0 %766
        %769 = vst.msk [vmem:[#allocation3 + $0x60] sm:$0xff] %vm315, %v767
        %770 = vrot.lane.b32.xlu0 %v764, 63
        %v771 = vpop.permute.xlu0 %770
        %773 = vst.msk [vmem:[#allocation3 + $0x80] sm:$0xff] %vm315, %v771
        %774 = vrot.lane.b32.xlu0 %v764, 62
        %v775 = vpop.permute.xlu0 %774
        %777 = vst.msk [vmem:[#allocation3 + $0xa0] sm:$0xff] %vm315, %v775
        %v778 = vld [vmem:[%s355] sm:$0xff]
        %780 = vrot.lane.b32.xlu0 %v778, 96
        %v781 = vpop.permute.xlu0 %780
        %783 = vst.msk [vmem:[#allocation3] sm:$0xff] %vm345, %v781
        %784 = vrot.lane.b32.xlu0 %v778, 95
        %v785 = vpop.permute.xlu0 %784
        %787 = vst.msk [vmem:[#allocation3 + $0x20] sm:$0xff] %vm345, %v785
        %788 = vrot.lane.b32.xlu0 %v778, 94
        %v789 = vpop.permute.xlu0 %788
        %791 = vst.msk [vmem:[#allocation3 + $0x40] sm:$0xff] %vm345, %v789
        %v792 = vld [vmem:[%s381] sm:$0xff]
        %794 = vrot.lane.b32.xlu0 %v792, 96
        %v795 = vpop.permute.xlu0 %794
        %797 = vst.msk [vmem:[#allocation3 + $0x60] sm:$0xff] %vm345, %v795
        %798 = vrot.lane.b32.xlu0 %v792, 95
        %v799 = vpop.permute.xlu0 %798
        %801 = vst.msk [vmem:[#allocation3 + $0x80] sm:$0xff] %vm345, %v799
        %802 = vrot.lane.b32.xlu0 %v792, 94
        %v803 = vpop.permute.xlu0 %802
        %805 = vst.msk [vmem:[#allocation3 + $0xa0] sm:$0xff] %vm345, %v803
        %v806 = vld [vmem:[%s381] sm:$0xff]
        %807 = vst.msk [vmem:[#allocation3 + $0x8] sm:$0xff] %vm257, %v806
        %809 = vrot.lane.b32.xlu0 %v806, 127
        %v810 = vpop.permute.xlu0 %809
        %812 = vst.msk [vmem:[#allocation3 + $0x28] sm:$0xff] %vm257, %v810
        %813 = vrot.lane.b32.xlu0 %v806, 126
        %v814 = vpop.permute.xlu0 %813
        %816 = vst.msk [vmem:[#allocation3 + $0x48] sm:$0xff] %vm257, %v814
        %v817 = vld [vmem:[%s407] sm:$0xff]
        %818 = vst.msk [vmem:[#allocation3 + $0x68] sm:$0xff] %vm257, %v817
        %820 = vrot.lane.b32.xlu0 %v817, 127
        %v821 = vpop.permute.xlu0 %820
        %823 = vst.msk [vmem:[#allocation3 + $0x88] sm:$0xff] %vm257, %v821
        %824 = vrot.lane.b32.xlu0 %v817, 126
        %v825 = vpop.permute.xlu0 %824
        %827 = vst.msk [vmem:[#allocation3 + $0xa8] sm:$0xff] %vm257, %v825
        %v828 = vld [vmem:[%s407] sm:$0xff]
        %830 = vrot.lane.b32.xlu0 %v828, 32
        %v831 = vpop.permute.xlu0 %830
        %833 = vst.msk [vmem:[#allocation3 + $0x8] sm:$0xff] %vm285, %v831
        %834 = vrot.lane.b32.xlu0 %v828, 31
        %v835 = vpop.permute.xlu0 %834
        %837 = vst.msk [vmem:[#allocation3 + $0x28] sm:$0xff] %vm285, %v835
        %838 = vrot.lane.b32.xlu0 %v828, 30
        %v839 = vpop.permute.xlu0 %838
        %841 = vst.msk [vmem:[#allocation3 + $0x48] sm:$0xff] %vm285, %v839
        %v842 = vld [vmem:[%s436] sm:$0xff]
        %844 = vrot.lane.b32.xlu0 %v842, 32
        %v845 = vpop.permute.xlu0 %844
        %847 = vst.msk [vmem:[#allocation3 + $0x68] sm:$0xff] %vm285, %v845
        %848 = vrot.lane.b32.xlu0 %v842, 31
        %v849 = vpop.permute.xlu0 %848
        %851 = vst.msk [vmem:[#allocation3 + $0x88] sm:$0xff] %vm285, %v849
        %852 = vrot.lane.b32.xlu0 %v842, 30
        %v853 = vpop.permute.xlu0 %852
        %855 = vst.msk [vmem:[#allocation3 + $0xa8] sm:$0xff] %vm285, %v853
        %v856 = vld [vmem:[%s436] sm:$0xff]
        %858 = vrot.lane.b32.xlu0 %v856, 64
        %v859 = vpop.permute.xlu0 %858
        %861 = vst.msk [vmem:[#allocation3 + $0x8] sm:$0xff] %vm315, %v859
        %862 = vrot.lane.b32.xlu0 %v856, 63
        %v863 = vpop.permute.xlu0 %862
        %865 = vst.msk [vmem:[#allocation3 + $0x28] sm:$0xff] %vm315, %v863
        %866 = vrot.lane.b32.xlu0 %v856, 62
        %v867 = vpop.permute.xlu0 %866
        %869 = vst.msk [vmem:[#allocation3 + $0x48] sm:$0xff] %vm315, %v867
        %v870 = vld [vmem:[%s465] sm:$0xff]
        %872 = vrot.lane.b32.xlu0 %v870, 64
        %v873 = vpop.permute.xlu0 %872
        %875 = vst.msk [vmem:[#allocation3 + $0x68] sm:$0xff] %vm315, %v873
        %876 = vrot.lane.b32.xlu0 %v870, 63
        %v877 = vpop.permute.xlu0 %876
        %879 = vst.msk [vmem:[#allocation3 + $0x88] sm:$0xff] %vm315, %v877
        %880 = vrot.lane.b32.xlu0 %v870, 62
        %v881 = vpop.permute.xlu0 %880
        %883 = vst.msk [vmem:[#allocation3 + $0xa8] sm:$0xff] %vm315, %v881
        %v884 = vld [vmem:[%s465] sm:$0xff]
        %886 = vrot.lane.b32.xlu0 %v884, 96
        %v887 = vpop.permute.xlu0 %886
        %889 = vst.msk [vmem:[#allocation3 + $0x8] sm:$0xff] %vm345, %v887
        %890 = vrot.lane.b32.xlu0 %v884, 95
        %v891 = vpop.permute.xlu0 %890
        %893 = vst.msk [vmem:[#allocation3 + $0x28] sm:$0xff] %vm345, %v891
        %894 = vrot.lane.b32.xlu0 %v884, 94
        %v895 = vpop.permute.xlu0 %894
        %897 = vst.msk [vmem:[#allocation3 + $0x48] sm:$0xff] %vm345, %v895
        %v898 = vld [vmem:[%s491] sm:$0xff]
        %900 = vrot.lane.b32.xlu0 %v898, 96
        %v901 = vpop.permute.xlu0 %900
        %903 = vst.msk [vmem:[#allocation3 + $0x68] sm:$0xff] %vm345, %v901
        %904 = vrot.lane.b32.xlu0 %v898, 95
        %v905 = vpop.permute.xlu0 %904
        %907 = vst.msk [vmem:[#allocation3 + $0x88] sm:$0xff] %vm345, %v905
        %908 = vrot.lane.b32.xlu0 %v898, 94
        %v909 = vpop.permute.xlu0 %908
        %911 = vst.msk [vmem:[#allocation3 + $0xa8] sm:$0xff] %vm345, %v909
        %v912 = vld [vmem:[%s491] sm:$0xff]
        %913 = vst.msk [vmem:[#allocation3 + $0x10] sm:$0xff] %vm257, %v912
        %915 = vrot.lane.b32.xlu0 %v912, 127
        %v916 = vpop.permute.xlu0 %915
        %918 = vst.msk [vmem:[#allocation3 + $0x30] sm:$0xff] %vm257, %v916
        %919 = vrot.lane.b32.xlu0 %v912, 126
        %v920 = vpop.permute.xlu0 %919
        %922 = vst.msk [vmem:[#allocation3 + $0x50] sm:$0xff] %vm257, %v920
        %v923 = vld [vmem:[%s517] sm:$0xff]
        %924 = vst.msk [vmem:[#allocation3 + $0x70] sm:$0xff] %vm257, %v923
        %926 = vrot.lane.b32.xlu0 %v923, 127
        %v927 = vpop.permute.xlu0 %926
        %929 = vst.msk [vmem:[#allocation3 + $0x90] sm:$0xff] %vm257, %v927
        %930 = vrot.lane.b32.xlu0 %v923, 126
        %v931 = vpop.permute.xlu0 %930
        %933 = vst.msk [vmem:[#allocation3 + $0xb0] sm:$0xff] %vm257, %v931
        %v934 = vld [vmem:[%s517] sm:$0xff]
        %936 = vrot.lane.b32.xlu0 %v934, 32
        %v937 = vpop.permute.xlu0 %936
        %939 = vst.msk [vmem:[#allocation3 + $0x10] sm:$0xff] %vm285, %v937
        %940 = vrot.lane.b32.xlu0 %v934, 31
        %v941 = vpop.permute.xlu0 %940
        %943 = vst.msk [vmem:[#allocation3 + $0x30] sm:$0xff] %vm285, %v941
        %944 = vrot.lane.b32.xlu0 %v934, 30
        %v945 = vpop.permute.xlu0 %944
        %947 = vst.msk [vmem:[#allocation3 + $0x50] sm:$0xff] %vm285, %v945
        %v948 = vld [vmem:[%s546] sm:$0xff]
        %950 = vrot.lane.b32.xlu0 %v948, 32
        %v951 = vpop.permute.xlu0 %950
        %953 = vst.msk [vmem:[#allocation3 + $0x70] sm:$0xff] %vm285, %v951
        %954 = vrot.lane.b32.xlu0 %v948, 31
        %v955 = vpop.permute.xlu0 %954
        %957 = vst.msk [vmem:[#allocation3 + $0x90] sm:$0xff] %vm285, %v955
        %958 = vrot.lane.b32.xlu0 %v948, 30
        %v959 = vpop.permute.xlu0 %958
        %961 = vst.msk [vmem:[#allocation3 + $0xb0] sm:$0xff] %vm285, %v959
        %v962 = vld [vmem:[%s546] sm:$0xff]
        %964 = vrot.lane.b32.xlu0 %v962, 64
        %v965 = vpop.permute.xlu0 %964
        %967 = vst.msk [vmem:[#allocation3 + $0x10] sm:$0xff] %vm315, %v965
        %968 = vrot.lane.b32.xlu0 %v962, 63
        %v969 = vpop.permute.xlu0 %968
        %971 = vst.msk [vmem:[#allocation3 + $0x30] sm:$0xff] %vm315, %v969
        %972 = vrot.lane.b32.xlu0 %v962, 62
        %v973 = vpop.permute.xlu0 %972
        %975 = vst.msk [vmem:[#allocation3 + $0x50] sm:$0xff] %vm315, %v973
        %v976 = vld [vmem:[%s575] sm:$0xff]
        %978 = vrot.lane.b32.xlu0 %v976, 64
        %v979 = vpop.permute.xlu0 %978
        %981 = vst.msk [vmem:[#allocation3 + $0x70] sm:$0xff] %vm315, %v979
        %982 = vrot.lane.b32.xlu0 %v976, 63
        %v983 = vpop.permute.xlu0 %982
        %985 = vst.msk [vmem:[#allocation3 + $0x90] sm:$0xff] %vm315, %v983
        %986 = vrot.lane.b32.xlu0 %v976, 62
        %v987 = vpop.permute.xlu0 %986
        %989 = vst.msk [vmem:[#allocation3 + $0xb0] sm:$0xff] %vm315, %v987
        %v990 = vld [vmem:[%s575] sm:$0xff]
        %992 = vrot.lane.b32.xlu0 %v990, 96
        %v993 = vpop.permute.xlu0 %992
        %995 = vst.msk [vmem:[#allocation3 + $0x10] sm:$0xff] %vm345, %v993
        %996 = vrot.lane.b32.xlu0 %v990, 95
        %v997 = vpop.permute.xlu0 %996
        %999 = vst.msk [vmem:[#allocation3 + $0x30] sm:$0xff] %vm345, %v997
        %1000 = vrot.lane.b32.xlu0 %v990, 94
        %v1001 = vpop.permute.xlu0 %1000
        %1003 = vst.msk [vmem:[#allocation3 + $0x50] sm:$0xff] %vm345, %v1001
        %v1004 = vld [vmem:[%s601] sm:$0xff]
        %1006 = vrot.lane.b32.xlu0 %v1004, 96
        %v1007 = vpop.permute.xlu0 %1006
        %1009 = vst.msk [vmem:[#allocation3 + $0x70] sm:$0xff] %vm345, %v1007
        %1010 = vrot.lane.b32.xlu0 %v1004, 95
        %v1011 = vpop.permute.xlu0 %1010
        %1013 = vst.msk [vmem:[#allocation3 + $0x90] sm:$0xff] %vm345, %v1011
        %1014 = vrot.lane.b32.xlu0 %v1004, 94
        %v1015 = vpop.permute.xlu0 %1014
        %1017 = vst.msk [vmem:[#allocation3 + $0xb0] sm:$0xff] %vm345, %v1015
        %v1018 = vld [vmem:[%s601] sm:$0xff]
        %1019 = vst.msk [vmem:[#allocation3 + $0x18] sm:$0xff] %vm257, %v1018
        %1021 = vrot.lane.b32.xlu0 %v1018, 127
        %v1022 = vpop.permute.xlu0 %1021
        %1024 = vst.msk [vmem:[#allocation3 + $0x38] sm:$0xff] %vm257, %v1022
        %1025 = vrot.lane.b32.xlu0 %v1018, 126
        %v1026 = vpop.permute.xlu0 %1025
        %1028 = vst.msk [vmem:[#allocation3 + $0x58] sm:$0xff] %vm257, %v1026
        %v1029 = vld [vmem:[%s627] sm:$0xff]
        %1030 = vst.msk [vmem:[#allocation3 + $0x78] sm:$0xff] %vm257, %v1029
        %1032 = vrot.lane.b32.xlu0 %v1029, 127
        %v1033 = vpop.permute.xlu0 %1032
        %1035 = vst.msk [vmem:[#allocation3 + $0x98] sm:$0xff] %vm257, %v1033
        %1036 = vrot.lane.b32.xlu0 %v1029, 126
        %v1037 = vpop.permute.xlu0 %1036
        %1039 = vst.msk [vmem:[#allocation3 + $0xb8] sm:$0xff] %vm257, %v1037
        %v1040 = vld [vmem:[%s627] sm:$0xff]
        %1042 = vrot.lane.b32.xlu0 %v1040, 32
        %v1043 = vpop.permute.xlu0 %1042
        %1045 = vst.msk [vmem:[#allocation3 + $0x18] sm:$0xff] %vm285, %v1043
        %1046 = vrot.lane.b32.xlu0 %v1040, 31
        %v1047 = vpop.permute.xlu0 %1046
        %1049 = vst.msk [vmem:[#allocation3 + $0x38] sm:$0xff] %vm285, %v1047
        %1050 = vrot.lane.b32.xlu0 %v1040, 30
        %v1051 = vpop.permute.xlu0 %1050
        %1053 = vst.msk [vmem:[#allocation3 + $0x58] sm:$0xff] %vm285, %v1051
        %v1054 = vld [vmem:[%s656] sm:$0xff]
        %1056 = vrot.lane.b32.xlu0 %v1054, 32
        %v1057 = vpop.permute.xlu0 %1056
        %1059 = vst.msk [vmem:[#allocation3 + $0x78] sm:$0xff] %vm285, %v1057
        %1060 = vrot.lane.b32.xlu0 %v1054, 31
        %v1061 = vpop.permute.xlu0 %1060
        %1063 = vst.msk [vmem:[#allocation3 + $0x98] sm:$0xff] %vm285, %v1061
        %1064 = vrot.lane.b32.xlu0 %v1054, 30
        %v1065 = vpop.permute.xlu0 %1064
        %1067 = vst.msk [vmem:[#allocation3 + $0xb8] sm:$0xff] %vm285, %v1065
        %v1068 = vld [vmem:[%s656] sm:$0xff]
        %1070 = vrot.lane.b32.xlu0 %v1068, 64
        %v1071 = vpop.permute.xlu0 %1070
        %1073 = vst.msk [vmem:[#allocation3 + $0x18] sm:$0xff] %vm315, %v1071
        %1074 = vrot.lane.b32.xlu0 %v1068, 63
        %v1075 = vpop.permute.xlu0 %1074
        %1077 = vst.msk [vmem:[#allocation3 + $0x38] sm:$0xff] %vm315, %v1075
        %1078 = vrot.lane.b32.xlu0 %v1068, 62
        %v1079 = vpop.permute.xlu0 %1078
        %1081 = vst.msk [vmem:[#allocation3 + $0x58] sm:$0xff] %vm315, %v1079
        %v1082 = vld [vmem:[%s685] sm:$0xff]
        %1084 = vrot.lane.b32.xlu0 %v1082, 64
        %v1085 = vpop.permute.xlu0 %1084
        %1087 = vst.msk [vmem:[#allocation3 + $0x78] sm:$0xff] %vm315, %v1085
        %1088 = vrot.lane.b32.xlu0 %v1082, 63
        %v1089 = vpop.permute.xlu0 %1088
        %1091 = vst.msk [vmem:[#allocation3 + $0x98] sm:$0xff] %vm315, %v1089
        %1092 = vrot.lane.b32.xlu0 %v1082, 62
        %v1093 = vpop.permute.xlu0 %1092
        %1095 = vst.msk [vmem:[#allocation3 + $0xb8] sm:$0xff] %vm315, %v1093
        %v1096 = vld [vmem:[%s685] sm:$0xff]
        %1098 = vrot.lane.b32.xlu0 %v1096, 96
        %v1099 = vpop.permute.xlu0 %1098
        %1101 = vst.msk [vmem:[#allocation3 + $0x18] sm:$0xff] %vm345, %v1099
        %1102 = vrot.lane.b32.xlu0 %v1096, 95
        %v1103 = vpop.permute.xlu0 %1102
        %1105 = vst.msk [vmem:[#allocation3 + $0x38] sm:$0xff] %vm345, %v1103
        %1106 = vrot.lane.b32.xlu0 %v1096, 94
        %v1107 = vpop.permute.xlu0 %1106
        %1109 = vst.msk [vmem:[#allocation3 + $0x58] sm:$0xff] %vm345, %v1107
        %s1110 = scalar_lea.vmem %s220, 136 [#allocation4]
        %v1111 = vld [vmem:[%s1110] sm:$0xff]
        %1113 = vrot.lane.b32.xlu0 %v1111, 96
        %v1114 = vpop.permute.xlu0 %1113
        %1116 = vst.msk [vmem:[#allocation3 + $0x78] sm:$0xff] %vm345, %v1114
        %1117 = vrot.lane.b32.xlu0 %v1111, 95
        %v1118 = vpop.permute.xlu0 %1117
        %1120 = vst.msk [vmem:[#allocation3 + $0x98] sm:$0xff] %vm345, %v1118
        %1121 = vrot.lane.b32.xlu0 %v1111, 94
        %v1122 = vpop.permute.xlu0 %1121
        %1124 = vst.msk [vmem:[#allocation3 + $0xb8] sm:$0xff] %vm345, %v1122
        %v1125 = vld [vmem:[%s254] sm:$0xff]
        %v1126 = vld [vmem:[#allocation7] sm:$0xff]
        %v1127 = vld [vmem:[#allocation2] sm:$0xff]
        %v1128 = vld [vmem:[#allocation2 + $0x8] sm:$0xff]
        %v1129 = vld [vmem:[#allocation2 + $0x10] sm:$0xff]
        %v1130 = vld [vmem:[#allocation2 + $0x18] sm:$0xff]
        %v1131 = vld [vmem:[#allocation2 + $0x20] sm:$0xff]
        %v1132 = vld [vmem:[#allocation2 + $0x28] sm:$0xff]
        %v1133 = vld [vmem:[#allocation2 + $0x30] sm:$0xff]
        %v1134 = vld [vmem:[#allocation2 + $0x38] sm:$0xff]
        %v1135 = vld [vmem:[#allocation2 + $0x40] sm:$0xff]
        %v1136 = vld [vmem:[#allocation2 + $0x48] sm:$0xff]
        %v1137 = vld [vmem:[#allocation2 + $0x50] sm:$0xff]
        %v1138 = vld [vmem:[#allocation2 + $0x58] sm:$0xff]
        %v1139 = vld [vmem:[#allocation2 + $0x60] sm:$0xff]
        %v1140 = vld [vmem:[#allocation2 + $0x68] sm:$0xff]
        %v1141 = vld [vmem:[#allocation2 + $0x70] sm:$0xff]
        %v1142 = vld [vmem:[#allocation2 + $0x78] sm:$0xff]
        %v1143 = vld [vmem:[#allocation2 + $0x80] sm:$0xff]
        %v1144 = vld [vmem:[#allocation2 + $0x88] sm:$0xff]
        %v1145 = vld [vmem:[#allocation2 + $0x90] sm:$0xff]
        %v1146 = vld [vmem:[#allocation2 + $0x98] sm:$0xff]
        %v1147 = vld [vmem:[#allocation2 + $0xa0] sm:$0xff]
        %v1148 = vld [vmem:[#allocation2 + $0xa8] sm:$0xff]
        %v1149 = vld [vmem:[#allocation2 + $0xb0] sm:$0xff]
        %v1150 = vld [vmem:[#allocation2 + $0xb8] sm:$0xff]
        %1152 = vset.pattern.permute.xlu0 0
        %1153 = vperm.xlu0 %1152, %v1125
        %v1154 = vpop.permute.xlu0 %1153
        %vm1156 = vcmask 392192
        %v1158 = vsel %vm1156, %v1126, 0
        %1160 = vmatprep.subr.mxu0 0.0
        %1161 = vmatpush1.msra.mxu0 0.0
        %1162 = vmatprep.subr.mxu0 0.0
        %1163 = vmatpush1.msra.mxu0 0.0
        %1164 = vmatprep.subr.mxu0 0.0
        %1165 = vmatpush1.msra.mxu0 0.0
        %1166 = vmatprep.subr.mxu0 0.0
        %1167 = vmatpush1.msra.mxu0 0.0
        %1168 = vmatprep.subr.mxu0 0.0
        %1169 = vmatpush1.msra.mxu0 0.0
        %1170 = vmatprep.subr.mxu0 0.0
        %1171 = vmatpush1.msra.mxu0 0.0
        %1172 = vmatprep.subr.mxu0 0.0
        %1173 = vmatpush1.msra.mxu0 0.0
        %1174 = vmatprep.subr.mxu0 0.0
        %1175 = vmatpush1.msra.mxu0 0.0
        %1176 = vmatprep.subr.mxu0 0.0
        %1177 = vmatpush1.msra.mxu0 0.0
        %1178 = vmatprep.subr.mxu0 0.0
        %1179 = vmatpush1.msra.mxu0 0.0
        %1180 = vmatprep.subr.mxu0 %v1148
        %1181 = vmatpush1.msra.mxu0 %v1147
        %1182 = vmatprep.subr.mxu0 %v1144
        %1183 = vmatpush1.msra.mxu0 %v1143
        %1184 = vmatprep.subr.mxu0 %v1140
        %1185 = vmatpush1.msra.mxu0 %v1139
        %1186 = vmatprep.subr.mxu0 %v1136
        %1187 = vmatpush1.msra.mxu0 %v1135
        %1188 = vmatprep.subr.mxu0 %v1132
        %1189 = vmatpush1.msra.mxu0 %v1131
        %1190 = vmatprep.subr.mxu0 %v1128
        %1191 = vmatpush1.msra.mxu0 %v1127
        %1192 = vmatprep.subr.mxu0 0.0
        %1193 = vmatpush2.msra.mxu0 0.0
        %1194 = vmatprep.subr.mxu0 0.0
        %1195 = vmatpush2.msra.mxu0 0.0
        %1196 = vmatprep.subr.mxu0 0.0
        %1197 = vmatpush2.msra.mxu0 0.0
        %1198 = vmatprep.subr.mxu0 0.0
        %1199 = vmatpush2.msra.mxu0 0.0
        %1200 = vmatprep.subr.mxu0 0.0
        %1201 = vmatpush2.msra.mxu0 0.0
        %1202 = vmatprep.subr.mxu0 0.0
        %1203 = vmatpush2.msra.mxu0 0.0
        %1204 = vmatprep.subr.mxu0 0.0
        %1205 = vmatpush2.msra.mxu0 0.0
        %1206 = vmatprep.subr.mxu0 0.0
        %1207 = vmatpush2.msra.mxu0 0.0
        %1208 = vmatprep.subr.mxu0 0.0
        %1209 = vmatpush2.msra.mxu0 0.0
        %1210 = vmatprep.subr.mxu0 0.0
        %1211 = vmatpush2.msra.mxu0 0.0
        %1212 = vmatprep.subr.mxu0 0.0
        %1213 = vmatpush2.msra.mxu0 0.0
        %1214 = vmatprep.subr.mxu0 0.0
        %1215 = vmatpush2.msra.mxu0 0.0
        %1216 = vmatprep.subr.mxu0 0.0
        %1217 = vmatpush2.msra.mxu0 0.0
        %1218 = vmatprep.subr.mxu0 0.0
        %1219 = vmatpush2.msra.mxu0 0.0
        %1220 = vmatprep.subr.mxu0 0.0
        %1221 = vmatpush2.msra.mxu0 0.0
        %1222 = vmatprep.subr.mxu0 0.0
        %1223 = vmatpush2.msra.mxu0 0.0
        %1224 = vmatprep.mubr.f32.mxu0 0.0
        %1225 = vmatmul.mubr.f32.gmra.mxu0 %v1158
        %v1226 = vpop.f32.mrf.mxu0
        %v1227 = vadd.f32 %v1154, %v1226
        %v1228 = vpop.f32.mrf.mxu0
        %v1229 = vadd.f32 %v1154, %v1228
        %1230 = vdwg.mxu0
        %1231 = vmatprep.subr.mxu0 0.0
        %1232 = vmatpush1.msra.mxu0 0.0
        %1233 = vmatprep.subr.mxu0 0.0
        %1234 = vmatpush1.msra.mxu0 0.0
        %1235 = vmatprep.subr.mxu0 0.0
        %1236 = vmatpush1.msra.mxu0 0.0
        %1237 = vmatprep.subr.mxu0 0.0
        %1238 = vmatpush1.msra.mxu0 0.0
        %1239 = vmatprep.subr.mxu0 0.0
        %1240 = vmatpush1.msra.mxu0 0.0
        %1241 = vmatprep.subr.mxu0 0.0
        %1242 = vmatpush1.msra.mxu0 0.0
        %1243 = vmatprep.subr.mxu0 0.0
        %1244 = vmatpush1.msra.mxu0 0.0
        %1245 = vmatprep.subr.mxu0 0.0
        %1246 = vmatpush1.msra.mxu0 0.0
        %1247 = vmatprep.subr.mxu0 0.0
        %1248 = vmatpush1.msra.mxu0 0.0
        %1249 = vmatprep.subr.mxu0 0.0
        %1250 = vmatpush1.msra.mxu0 0.0
        %1251 = vmatprep.subr.mxu0 %v1150
        %1252 = vmatpush1.msra.mxu0 %v1149
        %1253 = vmatprep.subr.mxu0 %v1146
        %1254 = vmatpush1.msra.mxu0 %v1145
        %1255 = vmatprep.subr.mxu0 %v1142
        %1256 = vmatpush1.msra.mxu0 %v1141
        %1257 = vmatprep.subr.mxu0 %v1138
        %1258 = vmatpush1.msra.mxu0 %v1137
        %1259 = vmatprep.subr.mxu0 %v1134
        %1260 = vmatpush1.msra.mxu0 %v1133
        %1261 = vmatprep.subr.mxu0 %v1130
        %1262 = vmatpush1.msra.mxu0 %v1129
        %1263 = vmatprep.subr.mxu0 0.0
        %1264 = vmatpush2.msra.mxu0 0.0
        %1265 = vmatprep.subr.mxu0 0.0
        %1266 = vmatpush2.msra.mxu0 0.0
        %1267 = vmatprep.subr.mxu0 0.0
        %1268 = vmatpush2.msra.mxu0 0.0
        %1269 = vmatprep.subr.mxu0 0.0
        %1270 = vmatpush2.msra.mxu0 0.0
        %1271 = vmatprep.subr.mxu0 0.0
        %1272 = vmatpush2.msra.mxu0 0.0
        %1273 = vmatprep.subr.mxu0 0.0
        %1274 = vmatpush2.msra.mxu0 0.0
        %1275 = vmatprep.subr.mxu0 0.0
        %1276 = vmatpush2.msra.mxu0 0.0
        %1277 = vmatprep.subr.mxu0 0.0
        %1278 = vmatpush2.msra.mxu0 0.0
        %1279 = vmatprep.subr.mxu0 0.0
        %1280 = vmatpush2.msra.mxu0 0.0
        %1281 = vmatprep.subr.mxu0 0.0
        %1282 = vmatpush2.msra.mxu0 0.0
        %1283 = vmatprep.subr.mxu0 0.0
        %1284 = vmatpush2.msra.mxu0 0.0
        %1285 = vmatprep.subr.mxu0 0.0
        %1286 = vmatpush2.msra.mxu0 0.0
        %1287 = vmatprep.subr.mxu0 0.0
        %1288 = vmatpush2.msra.mxu0 0.0
        %1289 = vmatprep.subr.mxu0 0.0
        %1290 = vmatpush2.msra.mxu0 0.0
        %1291 = vmatprep.subr.mxu0 0.0
        %1292 = vmatpush2.msra.mxu0 0.0
        %1293 = vmatprep.subr.mxu0 0.0
        %1294 = vmatpush2.msra.mxu0 0.0
        %1295 = vmatprep.mubr.f32.mxu0 0.0
        %1296 = vmatmul.mubr.f32.gmra.mxu0 %v1158
        %v1297 = vpop.f32.mrf.mxu0
        %v1298 = vadd.f32 %v1154, %v1297
        %v1299 = vpop.f32.mrf.mxu0
        %v1300 = vadd.f32 %v1154, %v1299
        %1301 = vdwg.mxu0
        %1302 = vst.msk [vmem:[%s250] sm:$0xff] %vm257, %v1227
        %1304 = vrot.lane.b32.xlu0 %v1227, 32
        %v1305 = vpop.permute.xlu0 %1304
        %1307 = vst.msk [vmem:[%s250] sm:$0xff] %vm315, %v1305
        %1308 = vrot.lane.b32.xlu0 %v1227, 64
        %v1309 = vpop.permute.xlu0 %1308
        %1311 = vst.msk [vmem:[%s250 + $0x8] sm:$0xff] %vm257, %v1309
        %1312 = vrot.lane.b32.xlu0 %v1227, 96
        %v1313 = vpop.permute.xlu0 %1312
        %1315 = vst.msk [vmem:[%s250 + $0x8] sm:$0xff] %vm315, %v1313
        %1316 = vst.msk [vmem:[%s250 + $0x10] sm:$0xff] %vm257, %v1229
        %1318 = vrot.lane.b32.xlu0 %v1229, 32
        %v1319 = vpop.permute.xlu0 %1318
        %1321 = vst.msk [vmem:[%s250 + $0x10] sm:$0xff] %vm315, %v1319
        %1322 = vrot.lane.b32.xlu0 %v1229, 64
        %v1323 = vpop.permute.xlu0 %1322
        %1325 = vst.msk [vmem:[%s250 + $0x18] sm:$0xff] %vm257, %v1323
        %1326 = vrot.lane.b32.xlu0 %v1229, 96
        %v1327 = vpop.permute.xlu0 %1326
        %1329 = vst.msk [vmem:[%s250 + $0x18] sm:$0xff] %vm315, %v1327
        %1330 = vst.msk [vmem:[%s250 + $0x20] sm:$0xff] %vm257, %v1298
        %1332 = vrot.lane.b32.xlu0 %v1298, 32
        %v1333 = vpop.permute.xlu0 %1332
        %1335 = vst.msk [vmem:[%s250 + $0x20] sm:$0xff] %vm315, %v1333
        %1336 = vrot.lane.b32.xlu0 %v1298, 64
        %v1337 = vpop.permute.xlu0 %1336
        %1339 = vst.msk [vmem:[%s250 + $0x28] sm:$0xff] %vm257, %v1337
        %1340 = vrot.lane.b32.xlu0 %v1298, 96
        %v1341 = vpop.permute.xlu0 %1340
        %1343 = vst.msk [vmem:[%s250 + $0x28] sm:$0xff] %vm315, %v1341
        %1344 = vst.msk [vmem:[%s250 + $0x30] sm:$0xff] %vm257, %v1300
        %1346 = vrot.lane.b32.xlu0 %v1300, 32
        %v1347 = vpop.permute.xlu0 %1346
        %1349 = vst.msk [vmem:[%s250 + $0x30] sm:$0xff] %vm315, %v1347
        %1350 = vrot.lane.b32.xlu0 %v1300, 64
        %v1351 = vpop.permute.xlu0 %1350
        %1353 = vst.msk [vmem:[%s250 + $0x38] sm:$0xff] %vm257, %v1351
        %1354 = vrot.lane.b32.xlu0 %v1300, 96
        %v1355 = vpop.permute.xlu0 %1354
        %1357 = vst.msk [vmem:[%s250 + $0x38] sm:$0xff] %vm315, %v1355
        %s1358 = scalar_lea.vmem [#allocation7], 8
        %v1359 = vld [vmem:[%s1358] sm:$0xff]
        %v1360 = vld [vmem:[#allocation3] sm:$0xff]
        %v1361 = vld [vmem:[#allocation3 + $0x8] sm:$0xff]
        %v1362 = vld [vmem:[#allocation3 + $0x10] sm:$0xff]
        %v1363 = vld [vmem:[#allocation3 + $0x18] sm:$0xff]
        %v1364 = vld [vmem:[#allocation3 + $0x20] sm:$0xff]
        %v1365 = vld [vmem:[#allocation3 + $0x28] sm:$0xff]
        %v1366 = vld [vmem:[#allocation3 + $0x30] sm:$0xff]
        %v1367 = vld [vmem:[#allocation3 + $0x38] sm:$0xff]
        %v1368 = vld [vmem:[#allocation3 + $0x40] sm:$0xff]
        %v1369 = vld [vmem:[#allocation3 + $0x48] sm:$0xff]
        %v1370 = vld [vmem:[#allocation3 + $0x50] sm:$0xff]
        %v1371 = vld [vmem:[#allocation3 + $0x58] sm:$0xff]
        %v1372 = vld [vmem:[#allocation3 + $0x60] sm:$0xff]
        %v1373 = vld [vmem:[#allocation3 + $0x68] sm:$0xff]
        %v1374 = vld [vmem:[#allocation3 + $0x70] sm:$0xff]
        %v1375 = vld [vmem:[#allocation3 + $0x78] sm:$0xff]
        %v1376 = vld [vmem:[#allocation3 + $0x80] sm:$0xff]
        %v1377 = vld [vmem:[#allocation3 + $0x88] sm:$0xff]
        %v1378 = vld [vmem:[#allocation3 + $0x90] sm:$0xff]
        %v1379 = vld [vmem:[#allocation3 + $0x98] sm:$0xff]
        %v1380 = vld [vmem:[#allocation3 + $0xa0] sm:$0xff]
        %v1381 = vld [vmem:[#allocation3 + $0xa8] sm:$0xff]
        %v1382 = vld [vmem:[#allocation3 + $0xb0] sm:$0xff]
        %v1383 = vld [vmem:[#allocation3 + $0xb8] sm:$0xff]
        %v1385 = vsel %vm1156, %v1359, 0
        %1387 = vmatprep.subr.mxu0 0.0
        %1388 = vmatpush1.msra.mxu0 0.0
        %1389 = vmatprep.subr.mxu0 0.0
        %1390 = vmatpush1.msra.mxu0 0.0
        %1391 = vmatprep.subr.mxu0 0.0
        %1392 = vmatpush1.msra.mxu0 0.0
        %1393 = vmatprep.subr.mxu0 0.0
        %1394 = vmatpush1.msra.mxu0 0.0
        %1395 = vmatprep.subr.mxu0 0.0
        %1396 = vmatpush1.msra.mxu0 0.0
        %1397 = vmatprep.subr.mxu0 0.0
        %1398 = vmatpush1.msra.mxu0 0.0
        %1399 = vmatprep.subr.mxu0 0.0
        %1400 = vmatpush1.msra.mxu0 0.0
        %1401 = vmatprep.subr.mxu0 0.0
        %1402 = vmatpush1.msra.mxu0 0.0
        %1403 = vmatprep.subr.mxu0 0.0
        %1404 = vmatpush1.msra.mxu0 0.0
        %1405 = vmatprep.subr.mxu0 0.0
        %1406 = vmatpush1.msra.mxu0 0.0
        %1407 = vmatprep.subr.mxu0 %v1381
        %1408 = vmatpush1.msra.mxu0 %v1380
        %1409 = vmatprep.subr.mxu0 %v1377
        %1410 = vmatpush1.msra.mxu0 %v1376
        %1411 = vmatprep.subr.mxu0 %v1373
        %1412 = vmatpush1.msra.mxu0 %v1372
        %1413 = vmatprep.subr.mxu0 %v1369
        %1414 = vmatpush1.msra.mxu0 %v1368
        %1415 = vmatprep.subr.mxu0 %v1365
        %1416 = vmatpush1.msra.mxu0 %v1364
        %1417 = vmatprep.subr.mxu0 %v1361
        %1418 = vmatpush1.msra.mxu0 %v1360
        %1419 = vmatprep.subr.mxu0 0.0
        %1420 = vmatpush2.msra.mxu0 0.0
        %1421 = vmatprep.subr.mxu0 0.0
        %1422 = vmatpush2.msra.mxu0 0.0
        %1423 = vmatprep.subr.mxu0 0.0
        %1424 = vmatpush2.msra.mxu0 0.0
        %1425 = vmatprep.subr.mxu0 0.0
        %1426 = vmatpush2.msra.mxu0 0.0
        %1427 = vmatprep.subr.mxu0 0.0
        %1428 = vmatpush2.msra.mxu0 0.0
        %1429 = vmatprep.subr.mxu0 0.0
        %1430 = vmatpush2.msra.mxu0 0.0
        %1431 = vmatprep.subr.mxu0 0.0
        %1432 = vmatpush2.msra.mxu0 0.0
        %1433 = vmatprep.subr.mxu0 0.0
        %1434 = vmatpush2.msra.mxu0 0.0
        %1435 = vmatprep.subr.mxu0 0.0
        %1436 = vmatpush2.msra.mxu0 0.0
        %1437 = vmatprep.subr.mxu0 0.0
        %1438 = vmatpush2.msra.mxu0 0.0
        %1439 = vmatprep.subr.mxu0 0.0
        %1440 = vmatpush2.msra.mxu0 0.0
        %1441 = vmatprep.subr.mxu0 0.0
        %1442 = vmatpush2.msra.mxu0 0.0
        %1443 = vmatprep.subr.mxu0 0.0
        %1444 = vmatpush2.msra.mxu0 0.0
        %1445 = vmatprep.subr.mxu0 0.0
        %1446 = vmatpush2.msra.mxu0 0.0
        %1447 = vmatprep.subr.mxu0 0.0
        %1448 = vmatpush2.msra.mxu0 0.0
        %1449 = vmatprep.subr.mxu0 0.0
        %1450 = vmatpush2.msra.mxu0 0.0
        %1451 = vmatprep.mubr.f32.mxu0 0.0
        %1452 = vmatmul.mubr.f32.gmra.mxu0 %v1385
        %v1453 = vpop.f32.mrf.mxu0
        %v1454 = vadd.f32 %v1154, %v1453
        %v1455 = vpop.f32.mrf.mxu0
        %v1456 = vadd.f32 %v1154, %v1455
        %1457 = vdwg.mxu0
        %1458 = vmatprep.subr.mxu0 0.0
        %1459 = vmatpush1.msra.mxu0 0.0
        %1460 = vmatprep.subr.mxu0 0.0
        %1461 = vmatpush1.msra.mxu0 0.0
        %1462 = vmatprep.subr.mxu0 0.0
        %1463 = vmatpush1.msra.mxu0 0.0
        %1464 = vmatprep.subr.mxu0 0.0
        %1465 = vmatpush1.msra.mxu0 0.0
        %1466 = vmatprep.subr.mxu0 0.0
        %1467 = vmatpush1.msra.mxu0 0.0
        %1468 = vmatprep.subr.mxu0 0.0
        %1469 = vmatpush1.msra.mxu0 0.0
        %1470 = vmatprep.subr.mxu0 0.0
        %1471 = vmatpush1.msra.mxu0 0.0
        %1472 = vmatprep.subr.mxu0 0.0
        %1473 = vmatpush1.msra.mxu0 0.0
        %1474 = vmatprep.subr.mxu0 0.0
        %1475 = vmatpush1.msra.mxu0 0.0
        %1476 = vmatprep.subr.mxu0 0.0
        %1477 = vmatpush1.msra.mxu0 0.0
        %1478 = vmatprep.subr.mxu0 %v1383
        %1479 = vmatpush1.msra.mxu0 %v1382
        %1480 = vmatprep.subr.mxu0 %v1379
        %1481 = vmatpush1.msra.mxu0 %v1378
        %1482 = vmatprep.subr.mxu0 %v1375
        %1483 = vmatpush1.msra.mxu0 %v1374
        %1484 = vmatprep.subr.mxu0 %v1371
        %1485 = vmatpush1.msra.mxu0 %v1370
        %1486 = vmatprep.subr.mxu0 %v1367
        %1487 = vmatpush1.msra.mxu0 %v1366
        %1488 = vmatprep.subr.mxu0 %v1363
        %1489 = vmatpush1.msra.mxu0 %v1362
        %1490 = vmatprep.subr.mxu0 0.0
        %1491 = vmatpush2.msra.mxu0 0.0
        %1492 = vmatprep.subr.mxu0 0.0
        %1493 = vmatpush2.msra.mxu0 0.0
        %1494 = vmatprep.subr.mxu0 0.0
        %1495 = vmatpush2.msra.mxu0 0.0
        %1496 = vmatprep.subr.mxu0 0.0
        %1497 = vmatpush2.msra.mxu0 0.0
        %1498 = vmatprep.subr.mxu0 0.0
        %1499 = vmatpush2.msra.mxu0 0.0
        %1500 = vmatprep.subr.mxu0 0.0
        %1501 = vmatpush2.msra.mxu0 0.0
        %1502 = vmatprep.subr.mxu0 0.0
        %1503 = vmatpush2.msra.mxu0 0.0
        %1504 = vmatprep.subr.mxu0 0.0
        %1505 = vmatpush2.msra.mxu0 0.0
        %1506 = vmatprep.subr.mxu0 0.0
        %1507 = vmatpush2.msra.mxu0 0.0
        %1508 = vmatprep.subr.mxu0 0.0
        %1509 = vmatpush2.msra.mxu0 0.0
        %1510 = vmatprep.subr.mxu0 0.0
        %1511 = vmatpush2.msra.mxu0 0.0
        %1512 = vmatprep.subr.mxu0 0.0
        %1513 = vmatpush2.msra.mxu0 0.0
        %1514 = vmatprep.subr.mxu0 0.0
        %1515 = vmatpush2.msra.mxu0 0.0
        %1516 = vmatprep.subr.mxu0 0.0
        %1517 = vmatpush2.msra.mxu0 0.0
        %1518 = vmatprep.subr.mxu0 0.0
        %1519 = vmatpush2.msra.mxu0 0.0
        %1520 = vmatprep.subr.mxu0 0.0
        %1521 = vmatpush2.msra.mxu0 0.0
        %1522 = vmatprep.mubr.f32.mxu0 0.0
        %1523 = vmatmul.mubr.f32.gmra.mxu0 %v1385
        %v1524 = vpop.f32.mrf.mxu0
        %v1525 = vadd.f32 %v1154, %v1524
        %v1526 = vpop.f32.mrf.mxu0
        %v1527 = vadd.f32 %v1154, %v1526
        %1528 = vdwg.mxu0
        %1530 = vrot.lane.b32.xlu0 %v1454, 32
        %v1531 = vpop.permute.xlu0 %1530
        %1533 = vst.msk [vmem:[%s250] sm:$0xff] %vm285, %v1531
        %1534 = vrot.lane.b32.xlu0 %v1454, 64
        %v1535 = vpop.permute.xlu0 %1534
        %1537 = vst.msk [vmem:[%s250] sm:$0xff] %vm345, %v1535
        %1538 = vrot.lane.b32.xlu0 %v1454, 96
        %v1539 = vpop.permute.xlu0 %1538
        %1541 = vst.msk [vmem:[%s250 + $0x8] sm:$0xff] %vm285, %v1539
        %1542 = vst.msk [vmem:[%s250 + $0x8] sm:$0xff] %vm345, %v1454
        %1544 = vrot.lane.b32.xlu0 %v1456, 32
        %v1545 = vpop.permute.xlu0 %1544
        %1547 = vst.msk [vmem:[%s250 + $0x10] sm:$0xff] %vm285, %v1545
        %1548 = vrot.lane.b32.xlu0 %v1456, 64
        %v1549 = vpop.permute.xlu0 %1548
        %1551 = vst.msk [vmem:[%s250 + $0x10] sm:$0xff] %vm345, %v1549
        %1552 = vrot.lane.b32.xlu0 %v1456, 96
        %v1553 = vpop.permute.xlu0 %1552
        %1555 = vst.msk [vmem:[%s250 + $0x18] sm:$0xff] %vm285, %v1553
        %1556 = vst.msk [vmem:[%s250 + $0x18] sm:$0xff] %vm345, %v1456
        %1558 = vrot.lane.b32.xlu0 %v1525, 32
        %v1559 = vpop.permute.xlu0 %1558
        %1561 = vst.msk [vmem:[%s250 + $0x20] sm:$0xff] %vm285, %v1559
        %1562 = vrot.lane.b32.xlu0 %v1525, 64
        %v1563 = vpop.permute.xlu0 %1562
        %1565 = vst.msk [vmem:[%s250 + $0x20] sm:$0xff] %vm345, %v1563
        %1566 = vrot.lane.b32.xlu0 %v1525, 96
        %v1567 = vpop.permute.xlu0 %1566
        %1569 = vst.msk [vmem:[%s250 + $0x28] sm:$0xff] %vm285, %v1567
        %1570 = vst.msk [vmem:[%s250 + $0x28] sm:$0xff] %vm345, %v1525
        %1572 = vrot.lane.b32.xlu0 %v1527, 32
        %v1573 = vpop.permute.xlu0 %1572
        %1575 = vst.msk [vmem:[%s250 + $0x30] sm:$0xff] %vm285, %v1573
        %1576 = vrot.lane.b32.xlu0 %v1527, 64
        %v1577 = vpop.permute.xlu0 %1576
        %1579 = vst.msk [vmem:[%s250 + $0x30] sm:$0xff] %vm345, %v1577
        %1580 = vrot.lane.b32.xlu0 %v1527, 96
        %v1581 = vpop.permute.xlu0 %1580
        %1583 = vst.msk [vmem:[%s250 + $0x38] sm:$0xff] %vm285, %v1581
        %1584 = vst.msk [vmem:[%s250 + $0x38] sm:$0xff] %vm345, %v1527
        %s1585 = sand.u32 %s132, 1
        %s1586 = scalar_lea.sflag [#allocation6], %s1585
        %s1587 = sand.u32 %s132, 1
        %s1588 = smul.addr %s1587, 64
        %s1589 = scalar_lea.vmem [#allocation9], %s1588
        // Predicated region
        $region41: #{tpu_custom_call.1} parent=31 // pred_check
          %p1590 = pneg %p142
        $region42: #{tpu_custom_call.1} parent=31 // pred_check_branch
          %1592 = sbr.rel (%p1590) target = $region44
        $region43: #{tpu_custom_call.1} parent=31 // pred_region
          %s1593 = smul.u32 8, %s28
          %s1595 = ssub.s32 1024, 1024
          %1596 = vsyncadd %s1586, %s1595
          %s1597 = smul.addr %s27, 8
          %s1598 = sadd.s32 %s1593, %s1597
          %s1599 = smul.addr %s26, 8
          %s1600 = sadd.s32 %s1598, %s1599
          %s1601 = smul.addr %s1600, 128
          %s1602 = scalar_lea.hbm %s3, %s1601
          %s1604 = sshll.u32 %s1589, 4
          %s1605 = int_to_ptr.vmem [resolvable:$true] %s1604
          %1607 = dma.vmem_to_hbm [thread:$0]  %s1605, 1024, %s1602, %s1586
        $region44: #{tpu_custom_call.1} parent=31 // pred_fallthru
          _
      $region32: #{tpu_custom_call.1} parent=5 // pred_fallthru
        _
      %p1608 = scmp.le.s32.totalorder 2, %s16
      // Predicated region
      $region45: #{tpu_custom_call.1} parent=5 // pred_check
        %p1609 = pneg %p1608
      $region46: #{tpu_custom_call.1} parent=5 // pred_check_branch
        %1611 = sbr.rel (%p1609) target = $region48
      $region47: #{tpu_custom_call.1} parent=5 // pred_region
        %s1612 = ssub.s32 %s16, 2
        // Predicated region
        $region49: #{tpu_custom_call.1} parent=47 // pred_check
          %p1613 = pneg %p148
        $region50: #{tpu_custom_call.1} parent=47 // pred_check_branch
          %1615 = sbr.rel (%p1613) target = $region52
        $region51: #{tpu_custom_call.1} parent=47 // pred_region
          %s1616 = sand.u32 %s133, 1
          %s1617 = scalar_lea.sflag [#allocation6], %s1616
          %s1618 = sand.u32 %s133, 1
          %s1619 = smul.addr %s1618, 64
          %s1620 = scalar_lea.vmem [#allocation9], %s1619
          %1621 = dma.done %s1617, 1024
        $region52: #{tpu_custom_call.1} parent=47 // pred_fallthru
          _
      $region48: #{tpu_custom_call.1} parent=5 // pred_fallthru
        _
    $region6: #{tpu_custom_call.1} parent=1 // loop_footer
      %s20 = sadd.s32 1, %s16
    $region7: #{tpu_custom_call.1} parent=1 // loop_footer_branch
      %15 = sbr.rel target = $region3
    $region8: #{tpu_custom_call.1} parent=1 // loop_exit
      _
    %1622 = vsyncpa [#allocation5], 1
    %s1623 = scalar_lea.sflag [#allocation5], 1
    %1624 = vsyncpa %s1623, 1
    %1625 = vsyncpa [#allocation8], 1
    %1626 = vsyncpa [#allocation6], 1
    %s1627 = scalar_lea.sflag [#allocation6], 1
    %1628 = vsyncpa %s1627, 1

</llo_original>
